<compile_context>
chip_gen: v6e
topology: v6e:2x2x1
jax: 0.10.0
libtpu: 0.0.40
codegen_flags: <defaults>
</compile_context>

<pallas_src>
import functools

import jax
import jax.numpy as jnp
import numpy as np
from jax.experimental import pallas as pl
from jax.experimental.pallas import tpu as pltpu


# ----------------------------- Pallas kernel -------------------------------

def _fused_siamese_kernel(pq_ref, pt_ref, wc_ref, bc_ref, wfc_ref, bfc_ref,
                          embq_ref, embt_ref, dist_ref):
    """One grid step processes one batch element end-to-end.

    pq_ref : (1, KK, NQ, S) VMEM  im2col patches of the query view(s), S=OH*OW
    pt_ref : (1, KK, NT, S) VMEM  im2col patches of the test views
    wc_ref : (KK, C1)       SMEM  conv weights (read as scalars -> VPU FMAs)
    bc_ref : (C1,)          SMEM  conv bias
    wfc_ref: (C1, S, D)     VMEM  FC weight, channel-major flatten
    bfc_ref: (1, D)         VMEM  FC bias
    embq_ref: (1, NQ, D), embt_ref: (1, NT, D), dist_ref: (1, NT, 1)
    """
    kk, c1 = wc_ref.shape

    def encode(patches):                           # (KK, NIMG, S) -> (NIMG, D)
        emb = None
        for c in range(c1):
            # Conv tap accumulation on the VPU: scalar weight (SMEM) broadcast
            # against a lane-dense (NIMG, S) tile; KK=9 never hits the MXU.
            acc = patches[0] * wc_ref[0, c]
            for t in range(1, kk):
                acc = acc + patches[t] * wc_ref[t, c]
            acc = jnp.maximum(acc + bc_ref[c], 0.0)
            # Per-channel slice of the FC on the MXU: (NIMG, S) @ (S, D).
            part = jnp.dot(acc, wfc_ref[c], preferred_element_type=jnp.float32)
            emb = part if emb is None else emb + part
        return emb + bfc_ref[...]

    emb_q = encode(pq_ref[...][0])                 # (NQ, D), VMEM-resident
    emb_t = encode(pt_ref[...][0])                 # (NT, D), VMEM-resident

    embq_ref[0] = emb_q
    embt_ref[0] = emb_t

    # Squared-distance epilogue fused on the resident embeddings
    # ((NQ, D) broadcasts against (NT, D), NQ == 1 as in the module docstring).
    diff = emb_q - emb_t
    dist_ref[0] = jnp.sum(diff * diff, axis=-1, keepdims=True)


# ------------------------------- JAX glue ----------------------------------

def _im2col_lane_dense(imgs_flat, h, w, kh, kw):
    """(V, B, H*W) -> (B, KK, V, OH*OW); tap index = ky*kw + kx."""
    v, b, _ = imgs_flat.shape
    x = imgs_flat.reshape(v, b, h, w)
    oh, ow = h - kh + 1, w - kw + 1
    taps = [x[:, :, ky:ky + oh, kx:kx + ow].reshape(v, b, oh * ow)
            for ky in range(kh) for kx in range(kw)]
    p = jnp.stack(taps, axis=0)                    # (KK, V, B, S)
    return jnp.transpose(p, (2, 0, 1, 3))          # (B, KK, V, S)


@functools.partial(jax.jit, static_argnames=("h", "w", "kh", "kw"))
def siamese_forward(batch_img_query, batch_img_test,
                    w_conv, b_conv, w_fc, b_fc, *, h, w, kh, kw):
    """
    batch_img_query: (num_query = 1      , size_batch, H*W)
    batch_img_test : (num_test_per_query , size_batch, H*W)
    Returns (batch_emb_query, batch_emb_test, batch_dist_squared).
    """
    nq, bsz, _ = batch_img_query.shape
    nt = batch_img_test.shape[0]
    c1 = w_conv.shape[0]
    kk = kh * kw
    oh, ow = h - kh + 1, w - kw + 1
    s = oh * ow
    dim_emb = w_fc.shape[1]

    pq = _im2col_lane_dense(batch_img_query, h, w, kh, kw)   # (B, KK, NQ, S)
    pt = _im2col_lane_dense(batch_img_test, h, w, kh, kw)    # (B, KK, NT, S)

    wc = jnp.transpose(w_conv.reshape(c1, kk))               # (KK, C1) for SMEM
    wfc = w_fc.reshape(c1, s, dim_emb)                       # channel-major flatten
    bfc = b_fc.reshape(1, dim_emb)

    embq_b, embt_b, dist_b = pl.pallas_call(
        _fused_siamese_kernel,
        grid=(bsz,),
        in_specs=[
            pl.BlockSpec((1, kk, nq, s), lambda b: (b, 0, 0, 0)),
            pl.BlockSpec((1, kk, nt, s), lambda b: (b, 0, 0, 0)),
            pl.BlockSpec(memory_space=pltpu.MemorySpace.SMEM),   # conv weight
            pl.BlockSpec(memory_space=pltpu.MemorySpace.SMEM),   # conv bias
            pl.BlockSpec((c1, s, dim_emb), lambda b: (0, 0, 0)),
            pl.BlockSpec((1, dim_emb), lambda b: (0, 0)),
        ],
        out_specs=[
            pl.BlockSpec((1, nq, dim_emb), lambda b: (b, 0, 0)),
            pl.BlockSpec((1, nt, dim_emb), lambda b: (b, 0, 0)),
            pl.BlockSpec((1, nt, 1), lambda b: (b, 0, 0)),
        ],
        out_shape=(
            jax.ShapeDtypeStruct((bsz, nq, dim_emb), jnp.float32),
            jax.ShapeDtypeStruct((bsz, nt, dim_emb), jnp.float32),
            jax.ShapeDtypeStruct((bsz, nt, 1), jnp.float32),
        ),
        compiler_params=pltpu.CompilerParams(
            dimension_semantics=("parallel",)),
    )(pq, pt, wc, b_conv, wfc, bfc)

    batch_emb_query = jnp.transpose(embq_b, (1, 0, 2))           # (NQ, B, D)
    batch_emb_test = jnp.transpose(embt_b, (1, 0, 2))            # (NT, B, D)
    batch_dist_squared = jnp.transpose(dist_b[..., 0], (1, 0))   # (NT, B)
    return batch_emb_query, batch_emb_test, batch_dist_squared


# ------------------------- pure-JAX reference ------------------------------

def reference_forward(batch_img_query, batch_img_test,
                      w_conv, b_conv, w_fc, b_fc, *, h, w, kh, kw):
    c1 = w_conv.shape[0]
    oh, ow = h - kh + 1, w - kw + 1

    def encode(imgs_flat):                         # (B, H*W) -> (B, D)
        x = imgs_flat.reshape(-1, h, w)
        conv = jnp.zeros((x.shape[0], c1, oh, ow), jnp.float32)
        for ky in range(kh):
            for kx in range(kw):
                conv = conv + (x[:, None, ky:ky + oh, kx:kx + ow]
                               * w_conv[:, ky, kx][None, :, None, None])
        conv = jnp.maximum(conv + b_conv[None, :, None, None], 0.0)
        feat = conv.reshape(x.shape[0], -1)        # channel-major (NCHW) flatten
        return jnp.dot(feat, w_fc, precision=jax.lax.Precision.HIGHEST) + b_fc

    emb_q = jnp.stack([encode(each) for each in batch_img_query])
    emb_t = jnp.stack([encode(each) for each in batch_img_test])
    diff = emb_q - emb_t
    return emb_q, emb_t, jnp.sum(diff * diff, axis=-1)


# --------------------------------- main -------------------------------------

if __name__ == "__main__":
    NUM_QUERY, NUM_TEST, BATCH = 1, 4, 2
    H = W = 16
    KH = KW = 3
    C1 = 8
    OH, OW = H - KH + 1, W - KW + 1
    FEAT = C1 * OH * OW
    DIM_EMB = 32

    key = jax.random.PRNGKey(0)
    k_q, k_t, k_wc, k_wf, k_bf = jax.random.split(key, 5)

    batch_img_query = jax.random.normal(k_q, (NUM_QUERY, BATCH, H * W), jnp.float32)
    batch_img_test = jax.random.normal(k_t, (NUM_TEST, BATCH, H * W), jnp.float32)

    # Deterministic parameter init (mirrors init_params: kaiming-normal conv
    # weight, zero conv bias; PyTorch-default uniform for the Linear layer).
    fan_in_conv = KH * KW  # single input channel
    w_conv = jax.random.normal(k_wc, (C1, KH, KW), jnp.float32) * np.sqrt(2.0 / fan_in_conv)
    b_conv = jnp.zeros((C1,), jnp.float32)
    bound = 1.0 / np.sqrt(FEAT)
    w_fc = jax.random.uniform(k_wf, (FEAT, DIM_EMB), jnp.float32, -bound, bound)
    b_fc = jax.random.uniform(k_bf, (DIM_EMB,), jnp.float32, -bound, bound)

    emb_q, emb_t, dist2 = siamese_forward(
        batch_img_query, batch_img_test, w_conv, b_conv, w_fc, b_fc,
        h=H, w=W, kh=KH, kw=KW,
    )
    jax.block_until_ready((emb_q, emb_t, dist2))

    ref_q, ref_t, ref_d = reference_forward(
        batch_img_query, batch_img_test, w_conv, b_conv, w_fc, b_fc,
        h=H, w=W, kh=KH, kw=KW,
    )

    assert emb_q.shape == (NUM_QUERY, BATCH, DIM_EMB)
    assert emb_t.shape == (NUM_TEST, BATCH, DIM_EMB)
    assert dist2.shape == (NUM_TEST, BATCH)

    ok = (
        np.allclose(np.asarray(emb_q), np.asarray(ref_q), rtol=1e-2, atol=1e-2)
        and np.allclose(np.asarray(emb_t), np.asarray(ref_t), rtol=1e-2, atol=1e-2)
        and np.allclose(np.asarray(dist2), np.asarray(ref_d), rtol=1e-2, atol=1e-2)
    )
    if not ok:
        raise RuntimeError("Pallas output does not match JAX reference")

    print("KERNEL_OK")
</pallas_src>

<mosaic_0001>
module attributes {stable_mosaic.version = 11 : i64} {
  func.func @_fused_siamese_kernel(%arg0: i32, %arg1: memref<1x9x1x196xf32, #tpu.memory_space<vmem>>, %arg2: memref<1x9x4x196xf32, #tpu.memory_space<vmem>>, %arg3: memref<9x8xf32, #tpu.memory_space<smem>>, %arg4: memref<8xf32, #tpu.memory_space<smem>>, %arg5: memref<8x196x32xf32, #tpu.memory_space<vmem>>, %arg6: memref<1x32xf32, #tpu.memory_space<vmem>>, %arg7: memref<1x1x32xf32, #tpu.memory_space<vmem>>, %arg8: memref<1x4x32xf32, #tpu.memory_space<vmem>>, %arg9: memref<1x4x1xf32, #tpu.memory_space<vmem>>) attributes {dimension_semantics = [#tpu.dimension_semantics<parallel>], iteration_bounds = array<i64: 2>, scalar_prefetch = 0 : i64, scratch_operands = 0 : i64, tpu.core_type = #tpu.core_type<tc>, window_params = [{transform_indices = @transform_0, window_bounds = array<i64: 1, 9, 1, 196>}, {transform_indices = @transform_1, window_bounds = array<i64: 1, 9, 4, 196>}, {transform_indices = @transform_2, window_bounds = array<i64: 9, 8>}, {transform_indices = @transform_3, window_bounds = array<i64: 8>}, {pipeline_mode = #tpu.pipeline_mode<synchronous>, transform_indices = @transform_4, window_bounds = array<i64: 8, 196, 32>}, {pipeline_mode = #tpu.pipeline_mode<synchronous>, transform_indices = @transform_5, window_bounds = array<i64: 1, 32>}, {transform_indices = @transform_6, window_bounds = array<i64: 1, 1, 32>}, {transform_indices = @transform_7, window_bounds = array<i64: 1, 4, 32>}, {transform_indices = @transform_8, window_bounds = array<i64: 1, 4, 1>}]} {
    %c0 = arith.constant 0 : index
    %c0_0 = arith.constant 0 : index
    %c0_1 = arith.constant 0 : index
    %c0_2 = arith.constant 0 : index
    %0 = vector.load %arg1[%c0, %c0_0, %c0_1, %c0_2] : memref<1x9x1x196xf32, #tpu.memory_space<vmem>>, vector<1x9x1x196xf32>
    %1 = vector.shape_cast %0 : vector<1x9x1x196xf32> to vector<9x1x196xf32>
    %2 = vector.extract_strided_slice %1 {offsets = [0, 0, 0], sizes = [1, 1, 196], strides = [1, 1, 1]} : vector<9x1x196xf32> to vector<1x1x196xf32>
    %3 = vector.shape_cast %2 : vector<1x1x196xf32> to vector<1x196xf32>
    %c0_3 = arith.constant 0 : index
    %c0_4 = arith.constant 0 : index
    %4 = memref.load %arg3[%c0_3, %c0_4] : memref<9x8xf32, #tpu.memory_space<smem>>
    %5 = vector.broadcast %4 : f32 to vector<1x196xf32>
    %6 = arith.mulf %3, %5 : vector<1x196xf32>
    %7 = vector.extract_strided_slice %1 {offsets = [1, 0, 0], sizes = [1, 1, 196], strides = [1, 1, 1]} : vector<9x1x196xf32> to vector<1x1x196xf32>
    %8 = vector.shape_cast %7 : vector<1x1x196xf32> to vector<1x196xf32>
    %c1 = arith.constant 1 : index
    %c0_5 = arith.constant 0 : index
    %9 = memref.load %arg3[%c1, %c0_5] : memref<9x8xf32, #tpu.memory_space<smem>>
    %10 = vector.broadcast %9 : f32 to vector<1x196xf32>
    %11 = arith.mulf %8, %10 : vector<1x196xf32>
    %12 = arith.addf %6, %11 : vector<1x196xf32>
    %13 = vector.extract_strided_slice %1 {offsets = [2, 0, 0], sizes = [1, 1, 196], strides = [1, 1, 1]} : vector<9x1x196xf32> to vector<1x1x196xf32>
    %14 = vector.shape_cast %13 : vector<1x1x196xf32> to vector<1x196xf32>
    %c2 = arith.constant 2 : index
    %c0_6 = arith.constant 0 : index
    %15 = memref.load %arg3[%c2, %c0_6] : memref<9x8xf32, #tpu.memory_space<smem>>
    %16 = vector.broadcast %15 : f32 to vector<1x196xf32>
    %17 = arith.mulf %14, %16 : vector<1x196xf32>
    %18 = arith.addf %12, %17 : vector<1x196xf32>
    %19 = vector.extract_strided_slice %1 {offsets = [3, 0, 0], sizes = [1, 1, 196], strides = [1, 1, 1]} : vector<9x1x196xf32> to vector<1x1x196xf32>
    %20 = vector.shape_cast %19 : vector<1x1x196xf32> to vector<1x196xf32>
    %c3 = arith.constant 3 : index
    %c0_7 = arith.constant 0 : index
    %21 = memref.load %arg3[%c3, %c0_7] : memref<9x8xf32, #tpu.memory_space<smem>>
    %22 = vector.broadcast %21 : f32 to vector<1x196xf32>
    %23 = arith.mulf %20, %22 : vector<1x196xf32>
    %24 = arith.addf %18, %23 : vector<1x196xf32>
    %25 = vector.extract_strided_slice %1 {offsets = [4, 0, 0], sizes = [1, 1, 196], strides = [1, 1, 1]} : vector<9x1x196xf32> to vector<1x1x196xf32>
    %26 = vector.shape_cast %25 : vector<1x1x196xf32> to vector<1x196xf32>
    %c4 = arith.constant 4 : index
    %c0_8 = arith.constant 0 : index
    %27 = memref.load %arg3[%c4, %c0_8] : memref<9x8xf32, #tpu.memory_space<smem>>
    %28 = vector.broadcast %27 : f32 to vector<1x196xf32>
    %29 = arith.mulf %26, %28 : vector<1x196xf32>
    %30 = arith.addf %24, %29 : vector<1x196xf32>
    %31 = vector.extract_strided_slice %1 {offsets = [5, 0, 0], sizes = [1, 1, 196], strides = [1, 1, 1]} : vector<9x1x196xf32> to vector<1x1x196xf32>
    %32 = vector.shape_cast %31 : vector<1x1x196xf32> to vector<1x196xf32>
    %c5 = arith.constant 5 : index
    %c0_9 = arith.constant 0 : index
    %33 = memref.load %arg3[%c5, %c0_9] : memref<9x8xf32, #tpu.memory_space<smem>>
    %34 = vector.broadcast %33 : f32 to vector<1x196xf32>
    %35 = arith.mulf %32, %34 : vector<1x196xf32>
    %36 = arith.addf %30, %35 : vector<1x196xf32>
    %37 = vector.extract_strided_slice %1 {offsets = [6, 0, 0], sizes = [1, 1, 196], strides = [1, 1, 1]} : vector<9x1x196xf32> to vector<1x1x196xf32>
    %38 = vector.shape_cast %37 : vector<1x1x196xf32> to vector<1x196xf32>
    %c6 = arith.constant 6 : index
    %c0_10 = arith.constant 0 : index
    %39 = memref.load %arg3[%c6, %c0_10] : memref<9x8xf32, #tpu.memory_space<smem>>
    %40 = vector.broadcast %39 : f32 to vector<1x196xf32>
    %41 = arith.mulf %38, %40 : vector<1x196xf32>
    %42 = arith.addf %36, %41 : vector<1x196xf32>
    %43 = vector.extract_strided_slice %1 {offsets = [7, 0, 0], sizes = [1, 1, 196], strides = [1, 1, 1]} : vector<9x1x196xf32> to vector<1x1x196xf32>
    %44 = vector.shape_cast %43 : vector<1x1x196xf32> to vector<1x196xf32>
    %c7 = arith.constant 7 : index
    %c0_11 = arith.constant 0 : index
    %45 = memref.load %arg3[%c7, %c0_11] : memref<9x8xf32, #tpu.memory_space<smem>>
    %46 = vector.broadcast %45 : f32 to vector<1x196xf32>
    %47 = arith.mulf %44, %46 : vector<1x196xf32>
    %48 = arith.addf %42, %47 : vector<1x196xf32>
    %49 = vector.extract_strided_slice %1 {offsets = [8, 0, 0], sizes = [1, 1, 196], strides = [1, 1, 1]} : vector<9x1x196xf32> to vector<1x1x196xf32>
    %50 = vector.shape_cast %49 : vector<1x1x196xf32> to vector<1x196xf32>
    %c8 = arith.constant 8 : index
    %c0_12 = arith.constant 0 : index
    %51 = memref.load %arg3[%c8, %c0_12] : memref<9x8xf32, #tpu.memory_space<smem>>
    %52 = vector.broadcast %51 : f32 to vector<1x196xf32>
    %53 = arith.mulf %50, %52 : vector<1x196xf32>
    %54 = arith.addf %48, %53 : vector<1x196xf32>
    %c0_13 = arith.constant 0 : index
    %55 = memref.load %arg4[%c0_13] : memref<8xf32, #tpu.memory_space<smem>>
    %56 = vector.broadcast %55 : f32 to vector<1x196xf32>
    %57 = arith.addf %54, %56 : vector<1x196xf32>
    %cst = arith.constant 0.000000e+00 : f32
    %58 = vector.broadcast %cst : f32 to vector<1x196xf32>
    %59 = arith.maximumf %57, %58 : vector<1x196xf32>
    %c0_14 = arith.constant 0 : index
    %c0_15 = arith.constant 0 : index
    %c0_16 = arith.constant 0 : index
    %60 = vector.load %arg5[%c0_14, %c0_15, %c0_16] : memref<8x196x32xf32, #tpu.memory_space<vmem>>, vector<1x196x32xf32>
    %61 = vector.shape_cast %60 : vector<1x196x32xf32> to vector<196x32xf32>
    %cst_17 = arith.constant dense<0.000000e+00> : vector<1x32xf32>
    %62 = tpu.matmul %59, %61, %cst_17 {dimension_numbers = #tpu.dot_dimension_numbers<[1], [0], [0], [1], [0, 0, 1, 1], [], []>} : vector<1x196xf32>, vector<196x32xf32>, vector<1x32xf32> -> vector<1x32xf32>
    %63 = vector.extract_strided_slice %1 {offsets = [0, 0, 0], sizes = [1, 1, 196], strides = [1, 1, 1]} : vector<9x1x196xf32> to vector<1x1x196xf32>
    %64 = vector.shape_cast %63 : vector<1x1x196xf32> to vector<1x196xf32>
    %c0_18 = arith.constant 0 : index
    %c1_19 = arith.constant 1 : index
    %65 = memref.load %arg3[%c0_18, %c1_19] : memref<9x8xf32, #tpu.memory_space<smem>>
    %66 = vector.broadcast %65 : f32 to vector<1x196xf32>
    %67 = arith.mulf %64, %66 : vector<1x196xf32>
    %68 = vector.extract_strided_slice %1 {offsets = [1, 0, 0], sizes = [1, 1, 196], strides = [1, 1, 1]} : vector<9x1x196xf32> to vector<1x1x196xf32>
    %69 = vector.shape_cast %68 : vector<1x1x196xf32> to vector<1x196xf32>
    %c1_20 = arith.constant 1 : index
    %c1_21 = arith.constant 1 : index
    %70 = memref.load %arg3[%c1_20, %c1_21] : memref<9x8xf32, #tpu.memory_space<smem>>
    %71 = vector.broadcast %70 : f32 to vector<1x196xf32>
    %72 = arith.mulf %69, %71 : vector<1x196xf32>
    %73 = arith.addf %67, %72 : vector<1x196xf32>
    %74 = vector.extract_strided_slice %1 {offsets = [2, 0, 0], sizes = [1, 1, 196], strides = [1, 1, 1]} : vector<9x1x196xf32> to vector<1x1x196xf32>
    %75 = vector.shape_cast %74 : vector<1x1x196xf32> to vector<1x196xf32>
    %c2_22 = arith.constant 2 : index
    %c1_23 = arith.constant 1 : index
    %76 = memref.load %arg3[%c2_22, %c1_23] : memref<9x8xf32, #tpu.memory_space<smem>>
    %77 = vector.broadcast %76 : f32 to vector<1x196xf32>
    %78 = arith.mulf %75, %77 : vector<1x196xf32>
    %79 = arith.addf %73, %78 : vector<1x196xf32>
    %80 = vector.extract_strided_slice %1 {offsets = [3, 0, 0], sizes = [1, 1, 196], strides = [1, 1, 1]} : vector<9x1x196xf32> to vector<1x1x196xf32>
    %81 = vector.shape_cast %80 : vector<1x1x196xf32> to vector<1x196xf32>
    %c3_24 = arith.constant 3 : index
    %c1_25 = arith.constant 1 : index
    %82 = memref.load %arg3[%c3_24, %c1_25] : memref<9x8xf32, #tpu.memory_space<smem>>
    %83 = vector.broadcast %82 : f32 to vector<1x196xf32>
    %84 = arith.mulf %81, %83 : vector<1x196xf32>
    %85 = arith.addf %79, %84 : vector<1x196xf32>
    %86 = vector.extract_strided_slice %1 {offsets = [4, 0, 0], sizes = [1, 1, 196], strides = [1, 1, 1]} : vector<9x1x196xf32> to vector<1x1x196xf32>
    %87 = vector.shape_cast %86 : vector<1x1x196xf32> to vector<1x196xf32>
    %c4_26 = arith.constant 4 : index
    %c1_27 = arith.constant 1 : index
    %88 = memref.load %arg3[%c4_26, %c1_27] : memref<9x8xf32, #tpu.memory_space<smem>>
    %89 = vector.broadcast %88 : f32 to vector<1x196xf32>
    %90 = arith.mulf %87, %89 : vector<1x196xf32>
    %91 = arith.addf %85, %90 : vector<1x196xf32>
    %92 = vector.extract_strided_slice %1 {offsets = [5, 0, 0], sizes = [1, 1, 196], strides = [1, 1, 1]} : vector<9x1x196xf32> to vector<1x1x196xf32>
    %93 = vector.shape_cast %92 : vector<1x1x196xf32> to vector<1x196xf32>
    %c5_28 = arith.constant 5 : index
    %c1_29 = arith.constant 1 : index
    %94 = memref.load %arg3[%c5_28, %c1_29] : memref<9x8xf32, #tpu.memory_space<smem>>
    %95 = vector.broadcast %94 : f32 to vector<1x196xf32>
    %96 = arith.mulf %93, %95 : vector<1x196xf32>
    %97 = arith.addf %91, %96 : vector<1x196xf32>
    %98 = vector.extract_strided_slice %1 {offsets = [6, 0, 0], sizes = [1, 1, 196], strides = [1, 1, 1]} : vector<9x1x196xf32> to vector<1x1x196xf32>
    %99 = vector.shape_cast %98 : vector<1x1x196xf32> to vector<1x196xf32>
    %c6_30 = arith.constant 6 : index
    %c1_31 = arith.constant 1 : index
    %100 = memref.load %arg3[%c6_30, %c1_31] : memref<9x8xf32, #tpu.memory_space<smem>>
    %101 = vector.broadcast %100 : f32 to vector<1x196xf32>
    %102 = arith.mulf %99, %101 : vector<1x196xf32>
    %103 = arith.addf %97, %102 : vector<1x196xf32>
    %104 = vector.extract_strided_slice %1 {offsets = [7, 0, 0], sizes = [1, 1, 196], strides = [1, 1, 1]} : vector<9x1x196xf32> to vector<1x1x196xf32>
    %105 = vector.shape_cast %104 : vector<1x1x196xf32> to vector<1x196xf32>
    %c7_32 = arith.constant 7 : index
    %c1_33 = arith.constant 1 : index
    %106 = memref.load %arg3[%c7_32, %c1_33] : memref<9x8xf32, #tpu.memory_space<smem>>
    %107 = vector.broadcast %106 : f32 to vector<1x196xf32>
    %108 = arith.mulf %105, %107 : vector<1x196xf32>
    %109 = arith.addf %103, %108 : vector<1x196xf32>
    %110 = vector.extract_strided_slice %1 {offsets = [8, 0, 0], sizes = [1, 1, 196], strides = [1, 1, 1]} : vector<9x1x196xf32> to vector<1x1x196xf32>
    %111 = vector.shape_cast %110 : vector<1x1x196xf32> to vector<1x196xf32>
    %c8_34 = arith.constant 8 : index
    %c1_35 = arith.constant 1 : index
    %112 = memref.load %arg3[%c8_34, %c1_35] : memref<9x8xf32, #tpu.memory_space<smem>>
    %113 = vector.broadcast %112 : f32 to vector<1x196xf32>
    %114 = arith.mulf %111, %113 : vector<1x196xf32>
    %115 = arith.addf %109, %114 : vector<1x196xf32>
    %c1_36 = arith.constant 1 : index
    %116 = memref.load %arg4[%c1_36] : memref<8xf32, #tpu.memory_space<smem>>
    %117 = vector.broadcast %116 : f32 to vector<1x196xf32>
    %118 = arith.addf %115, %117 : vector<1x196xf32>
    %cst_37 = arith.constant 0.000000e+00 : f32
    %119 = vector.broadcast %cst_37 : f32 to vector<1x196xf32>
    %120 = arith.maximumf %118, %119 : vector<1x196xf32>
    %c1_38 = arith.constant 1 : index
    %c0_39 = arith.constant 0 : index
    %c0_40 = arith.constant 0 : index
    %121 = vector.load %arg5[%c1_38, %c0_39, %c0_40] : memref<8x196x32xf32, #tpu.memory_space<vmem>>, vector<1x196x32xf32>
    %122 = vector.shape_cast %121 : vector<1x196x32xf32> to vector<196x32xf32>
    %cst_41 = arith.constant dense<0.000000e+00> : vector<1x32xf32>
    %123 = tpu.matmul %120, %122, %cst_41 {dimension_numbers = #tpu.dot_dimension_numbers<[1], [0], [0], [1], [0, 0, 1, 1], [], []>} : vector<1x196xf32>, vector<196x32xf32>, vector<1x32xf32> -> vector<1x32xf32>
    %124 = arith.addf %62, %123 : vector<1x32xf32>
    %125 = vector.extract_strided_slice %1 {offsets = [0, 0, 0], sizes = [1, 1, 196], strides = [1, 1, 1]} : vector<9x1x196xf32> to vector<1x1x196xf32>
    %126 = vector.shape_cast %125 : vector<1x1x196xf32> to vector<1x196xf32>
    %c0_42 = arith.constant 0 : index
    %c2_43 = arith.constant 2 : index
    %127 = memref.load %arg3[%c0_42, %c2_43] : memref<9x8xf32, #tpu.memory_space<smem>>
    %128 = vector.broadcast %127 : f32 to vector<1x196xf32>
    %129 = arith.mulf %126, %128 : vector<1x196xf32>
    %130 = vector.extract_strided_slice %1 {offsets = [1, 0, 0], sizes = [1, 1, 196], strides = [1, 1, 1]} : vector<9x1x196xf32> to vector<1x1x196xf32>
    %131 = vector.shape_cast %130 : vector<1x1x196xf32> to vector<1x196xf32>
    %c1_44 = arith.constant 1 : index
    %c2_45 = arith.constant 2 : index
    %132 = memref.load %arg3[%c1_44, %c2_45] : memref<9x8xf32, #tpu.memory_space<smem>>
    %133 = vector.broadcast %132 : f32 to vector<1x196xf32>
    %134 = arith.mulf %131, %133 : vector<1x196xf32>
    %135 = arith.addf %129, %134 : vector<1x196xf32>
    %136 = vector.extract_strided_slice %1 {offsets = [2, 0, 0], sizes = [1, 1, 196], strides = [1, 1, 1]} : vector<9x1x196xf32> to vector<1x1x196xf32>
    %137 = vector.shape_cast %136 : vector<1x1x196xf32> to vector<1x196xf32>
    %c2_46 = arith.constant 2 : index
    %c2_47 = arith.constant 2 : index
    %138 = memref.load %arg3[%c2_46, %c2_47] : memref<9x8xf32, #tpu.memory_space<smem>>
    %139 = vector.broadcast %138 : f32 to vector<1x196xf32>
    %140 = arith.mulf %137, %139 : vector<1x196xf32>
    %141 = arith.addf %135, %140 : vector<1x196xf32>
    %142 = vector.extract_strided_slice %1 {offsets = [3, 0, 0], sizes = [1, 1, 196], strides = [1, 1, 1]} : vector<9x1x196xf32> to vector<1x1x196xf32>
    %143 = vector.shape_cast %142 : vector<1x1x196xf32> to vector<1x196xf32>
    %c3_48 = arith.constant 3 : index
    %c2_49 = arith.constant 2 : index
    %144 = memref.load %arg3[%c3_48, %c2_49] : memref<9x8xf32, #tpu.memory_space<smem>>
    %145 = vector.broadcast %144 : f32 to vector<1x196xf32>
    %146 = arith.mulf %143, %145 : vector<1x196xf32>
    %147 = arith.addf %141, %146 : vector<1x196xf32>
    %148 = vector.extract_strided_slice %1 {offsets = [4, 0, 0], sizes = [1, 1, 196], strides = [1, 1, 1]} : vector<9x1x196xf32> to vector<1x1x196xf32>
    %149 = vector.shape_cast %148 : vector<1x1x196xf32> to vector<1x196xf32>
    %c4_50 = arith.constant 4 : index
    %c2_51 = arith.constant 2 : index
    %150 = memref.load %arg3[%c4_50, %c2_51] : memref<9x8xf32, #tpu.memory_space<smem>>
    %151 = vector.broadcast %150 : f32 to vector<1x196xf32>
    %152 = arith.mulf %149, %151 : vector<1x196xf32>
    %153 = arith.addf %147, %152 : vector<1x196xf32>
    %154 = vector.extract_strided_slice %1 {offsets = [5, 0, 0], sizes = [1, 1, 196], strides = [1, 1, 1]} : vector<9x1x196xf32> to vector<1x1x196xf32>
    %155 = vector.shape_cast %154 : vector<1x1x196xf32> to vector<1x196xf32>
    %c5_52 = arith.constant 5 : index
    %c2_53 = arith.constant 2 : index
    %156 = memref.load %arg3[%c5_52, %c2_53] : memref<9x8xf32, #tpu.memory_space<smem>>
    %157 = vector.broadcast %156 : f32 to vector<1x196xf32>
    %158 = arith.mulf %155, %157 : vector<1x196xf32>
    %159 = arith.addf %153, %158 : vector<1x196xf32>
    %160 = vector.extract_strided_slice %1 {offsets = [6, 0, 0], sizes = [1, 1, 196], strides = [1, 1, 1]} : vector<9x1x196xf32> to vector<1x1x196xf32>
    %161 = vector.shape_cast %160 : vector<1x1x196xf32> to vector<1x196xf32>
    %c6_54 = arith.constant 6 : index
    %c2_55 = arith.constant 2 : index
    %162 = memref.load %arg3[%c6_54, %c2_55] : memref<9x8xf32, #tpu.memory_space<smem>>
    %163 = vector.broadcast %162 : f32 to vector<1x196xf32>
    %164 = arith.mulf %161, %163 : vector<1x196xf32>
    %165 = arith.addf %159, %164 : vector<1x196xf32>
    %166 = vector.extract_strided_slice %1 {offsets = [7, 0, 0], sizes = [1, 1, 196], strides = [1, 1, 1]} : vector<9x1x196xf32> to vector<1x1x196xf32>
    %167 = vector.shape_cast %166 : vector<1x1x196xf32> to vector<1x196xf32>
    %c7_56 = arith.constant 7 : index
    %c2_57 = arith.constant 2 : index
    %168 = memref.load %arg3[%c7_56, %c2_57] : memref<9x8xf32, #tpu.memory_space<smem>>
    %169 = vector.broadcast %168 : f32 to vector<1x196xf32>
    %170 = arith.mulf %167, %169 : vector<1x196xf32>
    %171 = arith.addf %165, %170 : vector<1x196xf32>
    %172 = vector.extract_strided_slice %1 {offsets = [8, 0, 0], sizes = [1, 1, 196], strides = [1, 1, 1]} : vector<9x1x196xf32> to vector<1x1x196xf32>
    %173 = vector.shape_cast %172 : vector<1x1x196xf32> to vector<1x196xf32>
    %c8_58 = arith.constant 8 : index
    %c2_59 = arith.constant 2 : index
    %174 = memref.load %arg3[%c8_58, %c2_59] : memref<9x8xf32, #tpu.memory_space<smem>>
    %175 = vector.broadcast %174 : f32 to vector<1x196xf32>
    %176 = arith.mulf %173, %175 : vector<1x196xf32>
    %177 = arith.addf %171, %176 : vector<1x196xf32>
    %c2_60 = arith.constant 2 : index
    %178 = memref.load %arg4[%c2_60] : memref<8xf32, #tpu.memory_space<smem>>
    %179 = vector.broadcast %178 : f32 to vector<1x196xf32>
    %180 = arith.addf %177, %179 : vector<1x196xf32>
    %cst_61 = arith.constant 0.000000e+00 : f32
    %181 = vector.broadcast %cst_61 : f32 to vector<1x196xf32>
    %182 = arith.maximumf %180, %181 : vector<1x196xf32>
    %c2_62 = arith.constant 2 : index
    %c0_63 = arith.constant 0 : index
    %c0_64 = arith.constant 0 : index
    %183 = vector.load %arg5[%c2_62, %c0_63, %c0_64] : memref<8x196x32xf32, #tpu.memory_space<vmem>>, vector<1x196x32xf32>
    %184 = vector.shape_cast %183 : vector<1x196x32xf32> to vector<196x32xf32>
    %cst_65 = arith.constant dense<0.000000e+00> : vector<1x32xf32>
    %185 = tpu.matmul %182, %184, %cst_65 {dimension_numbers = #tpu.dot_dimension_numbers<[1], [0], [0], [1], [0, 0, 1, 1], [], []>} : vector<1x196xf32>, vector<196x32xf32>, vector<1x32xf32> -> vector<1x32xf32>
    %186 = arith.addf %124, %185 : vector<1x32xf32>
    %187 = vector.extract_strided_slice %1 {offsets = [0, 0, 0], sizes = [1, 1, 196], strides = [1, 1, 1]} : vector<9x1x196xf32> to vector<1x1x196xf32>
    %188 = vector.shape_cast %187 : vector<1x1x196xf32> to vector<1x196xf32>
    %c0_66 = arith.constant 0 : index
    %c3_67 = arith.constant 3 : index
    %189 = memref.load %arg3[%c0_66, %c3_67] : memref<9x8xf32, #tpu.memory_space<smem>>
    %190 = vector.broadcast %189 : f32 to vector<1x196xf32>
    %191 = arith.mulf %188, %190 : vector<1x196xf32>
    %192 = vector.extract_strided_slice %1 {offsets = [1, 0, 0], sizes = [1, 1, 196], strides = [1, 1, 1]} : vector<9x1x196xf32> to vector<1x1x196xf32>
    %193 = vector.shape_cast %192 : vector<1x1x196xf32> to vector<1x196xf32>
    %c1_68 = arith.constant 1 : index
    %c3_69 = arith.constant 3 : index
    %194 = memref.load %arg3[%c1_68, %c3_69] : memref<9x8xf32, #tpu.memory_space<smem>>
    %195 = vector.broadcast %194 : f32 to vector<1x196xf32>
    %196 = arith.mulf %193, %195 : vector<1x196xf32>
    %197 = arith.addf %191, %196 : vector<1x196xf32>
    %198 = vector.extract_strided_slice %1 {offsets = [2, 0, 0], sizes = [1, 1, 196], strides = [1, 1, 1]} : vector<9x1x196xf32> to vector<1x1x196xf32>
    %199 = vector.shape_cast %198 : vector<1x1x196xf32> to vector<1x196xf32>
    %c2_70 = arith.constant 2 : index
    %c3_71 = arith.constant 3 : index
    %200 = memref.load %arg3[%c2_70, %c3_71] : memref<9x8xf32, #tpu.memory_space<smem>>
    %201 = vector.broadcast %200 : f32 to vector<1x196xf32>
    %202 = arith.mulf %199, %201 : vector<1x196xf32>
    %203 = arith.addf %197, %202 : vector<1x196xf32>
    %204 = vector.extract_strided_slice %1 {offsets = [3, 0, 0], sizes = [1, 1, 196], strides = [1, 1, 1]} : vector<9x1x196xf32> to vector<1x1x196xf32>
    %205 = vector.shape_cast %204 : vector<1x1x196xf32> to vector<1x196xf32>
    %c3_72 = arith.constant 3 : index
    %c3_73 = arith.constant 3 : index
    %206 = memref.load %arg3[%c3_72, %c3_73] : memref<9x8xf32, #tpu.memory_space<smem>>
    %207 = vector.broadcast %206 : f32 to vector<1x196xf32>
    %208 = arith.mulf %205, %207 : vector<1x196xf32>
    %209 = arith.addf %203, %208 : vector<1x196xf32>
    %210 = vector.extract_strided_slice %1 {offsets = [4, 0, 0], sizes = [1, 1, 196], strides = [1, 1, 1]} : vector<9x1x196xf32> to vector<1x1x196xf32>
    %211 = vector.shape_cast %210 : vector<1x1x196xf32> to vector<1x196xf32>
    %c4_74 = arith.constant 4 : index
    %c3_75 = arith.constant 3 : index
    %212 = memref.load %arg3[%c4_74, %c3_75] : memref<9x8xf32, #tpu.memory_space<smem>>
    %213 = vector.broadcast %212 : f32 to vector<1x196xf32>
    %214 = arith.mulf %211, %213 : vector<1x196xf32>
    %215 = arith.addf %209, %214 : vector<1x196xf32>
    %216 = vector.extract_strided_slice %1 {offsets = [5, 0, 0], sizes = [1, 1, 196], strides = [1, 1, 1]} : vector<9x1x196xf32> to vector<1x1x196xf32>
    %217 = vector.shape_cast %216 : vector<1x1x196xf32> to vector<1x196xf32>
    %c5_76 = arith.constant 5 : index
    %c3_77 = arith.constant 3 : index
    %218 = memref.load %arg3[%c5_76, %c3_77] : memref<9x8xf32, #tpu.memory_space<smem>>
    %219 = vector.broadcast %218 : f32 to vector<1x196xf32>
    %220 = arith.mulf %217, %219 : vector<1x196xf32>
    %221 = arith.addf %215, %220 : vector<1x196xf32>
    %222 = vector.extract_strided_slice %1 {offsets = [6, 0, 0], sizes = [1, 1, 196], strides = [1, 1, 1]} : vector<9x1x196xf32> to vector<1x1x196xf32>
    %223 = vector.shape_cast %222 : vector<1x1x196xf32> to vector<1x196xf32>
    %c6_78 = arith.constant 6 : index
    %c3_79 = arith.constant 3 : index
    %224 = memref.load %arg3[%c6_78, %c3_79] : memref<9x8xf32, #tpu.memory_space<smem>>
    %225 = vector.broadcast %224 : f32 to vector<1x196xf32>
    %226 = arith.mulf %223, %225 : vector<1x196xf32>
    %227 = arith.addf %221, %226 : vector<1x196xf32>
    %228 = vector.extract_strided_slice %1 {offsets = [7, 0, 0], sizes = [1, 1, 196], strides = [1, 1, 1]} : vector<9x1x196xf32> to vector<1x1x196xf32>
    %229 = vector.shape_cast %228 : vector<1x1x196xf32> to vector<1x196xf32>
    %c7_80 = arith.constant 7 : index
    %c3_81 = arith.constant 3 : index
    %230 = memref.load %arg3[%c7_80, %c3_81] : memref<9x8xf32, #tpu.memory_space<smem>>
    %231 = vector.broadcast %230 : f32 to vector<1x196xf32>
    %232 = arith.mulf %229, %231 : vector<1x196xf32>
    %233 = arith.addf %227, %232 : vector<1x196xf32>
    %234 = vector.extract_strided_slice %1 {offsets = [8, 0, 0], sizes = [1, 1, 196], strides = [1, 1, 1]} : vector<9x1x196xf32> to vector<1x1x196xf32>
    %235 = vector.shape_cast %234 : vector<1x1x196xf32> to vector<1x196xf32>
    %c8_82 = arith.constant 8 : index
    %c3_83 = arith.constant 3 : index
    %236 = memref.load %arg3[%c8_82, %c3_83] : memref<9x8xf32, #tpu.memory_space<smem>>
    %237 = vector.broadcast %236 : f32 to vector<1x196xf32>
    %238 = arith.mulf %235, %237 : vector<1x196xf32>
    %239 = arith.addf %233, %238 : vector<1x196xf32>
    %c3_84 = arith.constant 3 : index
    %240 = memref.load %arg4[%c3_84] : memref<8xf32, #tpu.memory_space<smem>>
    %241 = vector.broadcast %240 : f32 to vector<1x196xf32>
    %242 = arith.addf %239, %241 : vector<1x196xf32>
    %cst_85 = arith.constant 0.000000e+00 : f32
    %243 = vector.broadcast %cst_85 : f32 to vector<1x196xf32>
    %244 = arith.maximumf %242, %243 : vector<1x196xf32>
    %c3_86 = arith.constant 3 : index
    %c0_87 = arith.constant 0 : index
    %c0_88 = arith.constant 0 : index
    %245 = vector.load %arg5[%c3_86, %c0_87, %c0_88] : memref<8x196x32xf32, #tpu.memory_space<vmem>>, vector<1x196x32xf32>
    %246 = vector.shape_cast %245 : vector<1x196x32xf32> to vector<196x32xf32>
    %cst_89 = arith.constant dense<0.000000e+00> : vector<1x32xf32>
    %247 = tpu.matmul %244, %246, %cst_89 {dimension_numbers = #tpu.dot_dimension_numbers<[1], [0], [0], [1], [0, 0, 1, 1], [], []>} : vector<1x196xf32>, vector<196x32xf32>, vector<1x32xf32> -> vector<1x32xf32>
    %248 = arith.addf %186, %247 : vector<1x32xf32>
    %249 = vector.extract_strided_slice %1 {offsets = [0, 0, 0], sizes = [1, 1, 196], strides = [1, 1, 1]} : vector<9x1x196xf32> to vector<1x1x196xf32>
    %250 = vector.shape_cast %249 : vector<1x1x196xf32> to vector<1x196xf32>
    %c0_90 = arith.constant 0 : index
    %c4_91 = arith.constant 4 : index
    %251 = memref.load %arg3[%c0_90, %c4_91] : memref<9x8xf32, #tpu.memory_space<smem>>
    %252 = vector.broadcast %251 : f32 to vector<1x196xf32>
    %253 = arith.mulf %250, %252 : vector<1x196xf32>
    %254 = vector.extract_strided_slice %1 {offsets = [1, 0, 0], sizes = [1, 1, 196], strides = [1, 1, 1]} : vector<9x1x196xf32> to vector<1x1x196xf32>
    %255 = vector.shape_cast %254 : vector<1x1x196xf32> to vector<1x196xf32>
    %c1_92 = arith.constant 1 : index
    %c4_93 = arith.constant 4 : index
    %256 = memref.load %arg3[%c1_92, %c4_93] : memref<9x8xf32, #tpu.memory_space<smem>>
    %257 = vector.broadcast %256 : f32 to vector<1x196xf32>
    %258 = arith.mulf %255, %257 : vector<1x196xf32>
    %259 = arith.addf %253, %258 : vector<1x196xf32>
    %260 = vector.extract_strided_slice %1 {offsets = [2, 0, 0], sizes = [1, 1, 196], strides = [1, 1, 1]} : vector<9x1x196xf32> to vector<1x1x196xf32>
    %261 = vector.shape_cast %260 : vector<1x1x196xf32> to vector<1x196xf32>
    %c2_94 = arith.constant 2 : index
    %c4_95 = arith.constant 4 : index
    %262 = memref.load %arg3[%c2_94, %c4_95] : memref<9x8xf32, #tpu.memory_space<smem>>
    %263 = vector.broadcast %262 : f32 to vector<1x196xf32>
    %264 = arith.mulf %261, %263 : vector<1x196xf32>
    %265 = arith.addf %259, %264 : vector<1x196xf32>
    %266 = vector.extract_strided_slice %1 {offsets = [3, 0, 0], sizes = [1, 1, 196], strides = [1, 1, 1]} : vector<9x1x196xf32> to vector<1x1x196xf32>
    %267 = vector.shape_cast %266 : vector<1x1x196xf32> to vector<1x196xf32>
    %c3_96 = arith.constant 3 : index
    %c4_97 = arith.constant 4 : index
    %268 = memref.load %arg3[%c3_96, %c4_97] : memref<9x8xf32, #tpu.memory_space<smem>>
    %269 = vector.broadcast %268 : f32 to vector<1x196xf32>
    %270 = arith.mulf %267, %269 : vector<1x196xf32>
    %271 = arith.addf %265, %270 : vector<1x196xf32>
    %272 = vector.extract_strided_slice %1 {offsets = [4, 0, 0], sizes = [1, 1, 196], strides = [1, 1, 1]} : vector<9x1x196xf32> to vector<1x1x196xf32>
    %273 = vector.shape_cast %272 : vector<1x1x196xf32> to vector<1x196xf32>
    %c4_98 = arith.constant 4 : index
    %c4_99 = arith.constant 4 : index
    %274 = memref.load %arg3[%c4_98, %c4_99] : memref<9x8xf32, #tpu.memory_space<smem>>
    %275 = vector.broadcast %274 : f32 to vector<1x196xf32>
    %276 = arith.mulf %273, %275 : vector<1x196xf32>
    %277 = arith.addf %271, %276 : vector<1x196xf32>
    %278 = vector.extract_strided_slice %1 {offsets = [5, 0, 0], sizes = [1, 1, 196], strides = [1, 1, 1]} : vector<9x1x196xf32> to vector<1x1x196xf32>
    %279 = vector.shape_cast %278 : vector<1x1x196xf32> to vector<1x196xf32>
    %c5_100 = arith.constant 5 : index
    %c4_101 = arith.constant 4 : index
    %280 = memref.load %arg3[%c5_100, %c4_101] : memref<9x8xf32, #tpu.memory_space<smem>>
    %281 = vector.broadcast %280 : f32 to vector<1x196xf32>
    %282 = arith.mulf %279, %281 : vector<1x196xf32>
    %283 = arith.addf %277, %282 : vector<1x196xf32>
    %284 = vector.extract_strided_slice %1 {offsets = [6, 0, 0], sizes = [1, 1, 196], strides = [1, 1, 1]} : vector<9x1x196xf32> to vector<1x1x196xf32>
    %285 = vector.shape_cast %284 : vector<1x1x196xf32> to vector<1x196xf32>
    %c6_102 = arith.constant 6 : index
    %c4_103 = arith.constant 4 : index
    %286 = memref.load %arg3[%c6_102, %c4_103] : memref<9x8xf32, #tpu.memory_space<smem>>
    %287 = vector.broadcast %286 : f32 to vector<1x196xf32>
    %288 = arith.mulf %285, %287 : vector<1x196xf32>
    %289 = arith.addf %283, %288 : vector<1x196xf32>
    %290 = vector.extract_strided_slice %1 {offsets = [7, 0, 0], sizes = [1, 1, 196], strides = [1, 1, 1]} : vector<9x1x196xf32> to vector<1x1x196xf32>
    %291 = vector.shape_cast %290 : vector<1x1x196xf32> to vector<1x196xf32>
    %c7_104 = arith.constant 7 : index
    %c4_105 = arith.constant 4 : index
    %292 = memref.load %arg3[%c7_104, %c4_105] : memref<9x8xf32, #tpu.memory_space<smem>>
    %293 = vector.broadcast %292 : f32 to vector<1x196xf32>
    %294 = arith.mulf %291, %293 : vector<1x196xf32>
    %295 = arith.addf %289, %294 : vector<1x196xf32>
    %296 = vector.extract_strided_slice %1 {offsets = [8, 0, 0], sizes = [1, 1, 196], strides = [1, 1, 1]} : vector<9x1x196xf32> to vector<1x1x196xf32>
    %297 = vector.shape_cast %296 : vector<1x1x196xf32> to vector<1x196xf32>
    %c8_106 = arith.constant 8 : index
    %c4_107 = arith.constant 4 : index
    %298 = memref.load %arg3[%c8_106, %c4_107] : memref<9x8xf32, #tpu.memory_space<smem>>
    %299 = vector.broadcast %298 : f32 to vector<1x196xf32>
    %300 = arith.mulf %297, %299 : vector<1x196xf32>
    %301 = arith.addf %295, %300 : vector<1x196xf32>
    %c4_108 = arith.constant 4 : index
    %302 = memref.load %arg4[%c4_108] : memref<8xf32, #tpu.memory_space<smem>>
    %303 = vector.broadcast %302 : f32 to vector<1x196xf32>
    %304 = arith.addf %301, %303 : vector<1x196xf32>
    %cst_109 = arith.constant 0.000000e+00 : f32
    %305 = vector.broadcast %cst_109 : f32 to vector<1x196xf32>
    %306 = arith.maximumf %304, %305 : vector<1x196xf32>
    %c4_110 = arith.constant 4 : index
    %c0_111 = arith.constant 0 : index
    %c0_112 = arith.constant 0 : index
    %307 = vector.load %arg5[%c4_110, %c0_111, %c0_112] : memref<8x196x32xf32, #tpu.memory_space<vmem>>, vector<1x196x32xf32>
    %308 = vector.shape_cast %307 : vector<1x196x32xf32> to vector<196x32xf32>
    %cst_113 = arith.constant dense<0.000000e+00> : vector<1x32xf32>
    %309 = tpu.matmul %306, %308, %cst_113 {dimension_numbers = #tpu.dot_dimension_numbers<[1], [0], [0], [1], [0, 0, 1, 1], [], []>} : vector<1x196xf32>, vector<196x32xf32>, vector<1x32xf32> -> vector<1x32xf32>
    %310 = arith.addf %248, %309 : vector<1x32xf32>
    %311 = vector.extract_strided_slice %1 {offsets = [0, 0, 0], sizes = [1, 1, 196], strides = [1, 1, 1]} : vector<9x1x196xf32> to vector<1x1x196xf32>
    %312 = vector.shape_cast %311 : vector<1x1x196xf32> to vector<1x196xf32>
    %c0_114 = arith.constant 0 : index
    %c5_115 = arith.constant 5 : index
    %313 = memref.load %arg3[%c0_114, %c5_115] : memref<9x8xf32, #tpu.memory_space<smem>>
    %314 = vector.broadcast %313 : f32 to vector<1x196xf32>
    %315 = arith.mulf %312, %314 : vector<1x196xf32>
    %316 = vector.extract_strided_slice %1 {offsets = [1, 0, 0], sizes = [1, 1, 196], strides = [1, 1, 1]} : vector<9x1x196xf32> to vector<1x1x196xf32>
    %317 = vector.shape_cast %316 : vector<1x1x196xf32> to vector<1x196xf32>
    %c1_116 = arith.constant 1 : index
    %c5_117 = arith.constant 5 : index
    %318 = memref.load %arg3[%c1_116, %c5_117] : memref<9x8xf32, #tpu.memory_space<smem>>
    %319 = vector.broadcast %318 : f32 to vector<1x196xf32>
    %320 = arith.mulf %317, %319 : vector<1x196xf32>
    %321 = arith.addf %315, %320 : vector<1x196xf32>
    %322 = vector.extract_strided_slice %1 {offsets = [2, 0, 0], sizes = [1, 1, 196], strides = [1, 1, 1]} : vector<9x1x196xf32> to vector<1x1x196xf32>
    %323 = vector.shape_cast %322 : vector<1x1x196xf32> to vector<1x196xf32>
    %c2_118 = arith.constant 2 : index
    %c5_119 = arith.constant 5 : index
    %324 = memref.load %arg3[%c2_118, %c5_119] : memref<9x8xf32, #tpu.memory_space<smem>>
    %325 = vector.broadcast %324 : f32 to vector<1x196xf32>
    %326 = arith.mulf %323, %325 : vector<1x196xf32>
    %327 = arith.addf %321, %326 : vector<1x196xf32>
    %328 = vector.extract_strided_slice %1 {offsets = [3, 0, 0], sizes = [1, 1, 196], strides = [1, 1, 1]} : vector<9x1x196xf32> to vector<1x1x196xf32>
    %329 = vector.shape_cast %328 : vector<1x1x196xf32> to vector<1x196xf32>
    %c3_120 = arith.constant 3 : index
    %c5_121 = arith.constant 5 : index
    %330 = memref.load %arg3[%c3_120, %c5_121] : memref<9x8xf32, #tpu.memory_space<smem>>
    %331 = vector.broadcast %330 : f32 to vector<1x196xf32>
    %332 = arith.mulf %329, %331 : vector<1x196xf32>
    %333 = arith.addf %327, %332 : vector<1x196xf32>
    %334 = vector.extract_strided_slice %1 {offsets = [4, 0, 0], sizes = [1, 1, 196], strides = [1, 1, 1]} : vector<9x1x196xf32> to vector<1x1x196xf32>
    %335 = vector.shape_cast %334 : vector<1x1x196xf32> to vector<1x196xf32>
    %c4_122 = arith.constant 4 : index
    %c5_123 = arith.constant 5 : index
    %336 = memref.load %arg3[%c4_122, %c5_123] : memref<9x8xf32, #tpu.memory_space<smem>>
    %337 = vector.broadcast %336 : f32 to vector<1x196xf32>
    %338 = arith.mulf %335, %337 : vector<1x196xf32>
    %339 = arith.addf %333, %338 : vector<1x196xf32>
    %340 = vector.extract_strided_slice %1 {offsets = [5, 0, 0], sizes = [1, 1, 196], strides = [1, 1, 1]} : vector<9x1x196xf32> to vector<1x1x196xf32>
    %341 = vector.shape_cast %340 : vector<1x1x196xf32> to vector<1x196xf32>
    %c5_124 = arith.constant 5 : index
    %c5_125 = arith.constant 5 : index
    %342 = memref.load %arg3[%c5_124, %c5_125] : memref<9x8xf32, #tpu.memory_space<smem>>
    %343 = vector.broadcast %342 : f32 to vector<1x196xf32>
    %344 = arith.mulf %341, %343 : vector<1x196xf32>
    %345 = arith.addf %339, %344 : vector<1x196xf32>
    %346 = vector.extract_strided_slice %1 {offsets = [6, 0, 0], sizes = [1, 1, 196], strides = [1, 1, 1]} : vector<9x1x196xf32> to vector<1x1x196xf32>
    %347 = vector.shape_cast %346 : vector<1x1x196xf32> to vector<1x196xf32>
    %c6_126 = arith.constant 6 : index
    %c5_127 = arith.constant 5 : index
    %348 = memref.load %arg3[%c6_126, %c5_127] : memref<9x8xf32, #tpu.memory_space<smem>>
    %349 = vector.broadcast %348 : f32 to vector<1x196xf32>
    %350 = arith.mulf %347, %349 : vector<1x196xf32>
    %351 = arith.addf %345, %350 : vector<1x196xf32>
    %352 = vector.extract_strided_slice %1 {offsets = [7, 0, 0], sizes = [1, 1, 196], strides = [1, 1, 1]} : vector<9x1x196xf32> to vector<1x1x196xf32>
    %353 = vector.shape_cast %352 : vector<1x1x196xf32> to vector<1x196xf32>
    %c7_128 = arith.constant 7 : index
    %c5_129 = arith.constant 5 : index
    %354 = memref.load %arg3[%c7_128, %c5_129] : memref<9x8xf32, #tpu.memory_space<smem>>
    %355 = vector.broadcast %354 : f32 to vector<1x196xf32>
    %356 = arith.mulf %353, %355 : vector<1x196xf32>
    %357 = arith.addf %351, %356 : vector<1x196xf32>
    %358 = vector.extract_strided_slice %1 {offsets = [8, 0, 0], sizes = [1, 1, 196], strides = [1, 1, 1]} : vector<9x1x196xf32> to vector<1x1x196xf32>
    %359 = vector.shape_cast %358 : vector<1x1x196xf32> to vector<1x196xf32>
    %c8_130 = arith.constant 8 : index
    %c5_131 = arith.constant 5 : index
    %360 = memref.load %arg3[%c8_130, %c5_131] : memref<9x8xf32, #tpu.memory_space<smem>>
    %361 = vector.broadcast %360 : f32 to vector<1x196xf32>
    %362 = arith.mulf %359, %361 : vector<1x196xf32>
    %363 = arith.addf %357, %362 : vector<1x196xf32>
    %c5_132 = arith.constant 5 : index
    %364 = memref.load %arg4[%c5_132] : memref<8xf32, #tpu.memory_space<smem>>
    %365 = vector.broadcast %364 : f32 to vector<1x196xf32>
    %366 = arith.addf %363, %365 : vector<1x196xf32>
    %cst_133 = arith.constant 0.000000e+00 : f32
    %367 = vector.broadcast %cst_133 : f32 to vector<1x196xf32>
    %368 = arith.maximumf %366, %367 : vector<1x196xf32>
    %c5_134 = arith.constant 5 : index
    %c0_135 = arith.constant 0 : index
    %c0_136 = arith.constant 0 : index
    %369 = vector.load %arg5[%c5_134, %c0_135, %c0_136] : memref<8x196x32xf32, #tpu.memory_space<vmem>>, vector<1x196x32xf32>
    %370 = vector.shape_cast %369 : vector<1x196x32xf32> to vector<196x32xf32>
    %cst_137 = arith.constant dense<0.000000e+00> : vector<1x32xf32>
    %371 = tpu.matmul %368, %370, %cst_137 {dimension_numbers = #tpu.dot_dimension_numbers<[1], [0], [0], [1], [0, 0, 1, 1], [], []>} : vector<1x196xf32>, vector<196x32xf32>, vector<1x32xf32> -> vector<1x32xf32>
    %372 = arith.addf %310, %371 : vector<1x32xf32>
    %373 = vector.extract_strided_slice %1 {offsets = [0, 0, 0], sizes = [1, 1, 196], strides = [1, 1, 1]} : vector<9x1x196xf32> to vector<1x1x196xf32>
    %374 = vector.shape_cast %373 : vector<1x1x196xf32> to vector<1x196xf32>
    %c0_138 = arith.constant 0 : index
    %c6_139 = arith.constant 6 : index
    %375 = memref.load %arg3[%c0_138, %c6_139] : memref<9x8xf32, #tpu.memory_space<smem>>
    %376 = vector.broadcast %375 : f32 to vector<1x196xf32>
    %377 = arith.mulf %374, %376 : vector<1x196xf32>
    %378 = vector.extract_strided_slice %1 {offsets = [1, 0, 0], sizes = [1, 1, 196], strides = [1, 1, 1]} : vector<9x1x196xf32> to vector<1x1x196xf32>
    %379 = vector.shape_cast %378 : vector<1x1x196xf32> to vector<1x196xf32>
    %c1_140 = arith.constant 1 : index
    %c6_141 = arith.constant 6 : index
    %380 = memref.load %arg3[%c1_140, %c6_141] : memref<9x8xf32, #tpu.memory_space<smem>>
    %381 = vector.broadcast %380 : f32 to vector<1x196xf32>
    %382 = arith.mulf %379, %381 : vector<1x196xf32>
    %383 = arith.addf %377, %382 : vector<1x196xf32>
    %384 = vector.extract_strided_slice %1 {offsets = [2, 0, 0], sizes = [1, 1, 196], strides = [1, 1, 1]} : vector<9x1x196xf32> to vector<1x1x196xf32>
    %385 = vector.shape_cast %384 : vector<1x1x196xf32> to vector<1x196xf32>
    %c2_142 = arith.constant 2 : index
    %c6_143 = arith.constant 6 : index
    %386 = memref.load %arg3[%c2_142, %c6_143] : memref<9x8xf32, #tpu.memory_space<smem>>
    %387 = vector.broadcast %386 : f32 to vector<1x196xf32>
    %388 = arith.mulf %385, %387 : vector<1x196xf32>
    %389 = arith.addf %383, %388 : vector<1x196xf32>
    %390 = vector.extract_strided_slice %1 {offsets = [3, 0, 0], sizes = [1, 1, 196], strides = [1, 1, 1]} : vector<9x1x196xf32> to vector<1x1x196xf32>
    %391 = vector.shape_cast %390 : vector<1x1x196xf32> to vector<1x196xf32>
    %c3_144 = arith.constant 3 : index
    %c6_145 = arith.constant 6 : index
    %392 = memref.load %arg3[%c3_144, %c6_145] : memref<9x8xf32, #tpu.memory_space<smem>>
    %393 = vector.broadcast %392 : f32 to vector<1x196xf32>
    %394 = arith.mulf %391, %393 : vector<1x196xf32>
    %395 = arith.addf %389, %394 : vector<1x196xf32>
    %396 = vector.extract_strided_slice %1 {offsets = [4, 0, 0], sizes = [1, 1, 196], strides = [1, 1, 1]} : vector<9x1x196xf32> to vector<1x1x196xf32>
    %397 = vector.shape_cast %396 : vector<1x1x196xf32> to vector<1x196xf32>
    %c4_146 = arith.constant 4 : index
    %c6_147 = arith.constant 6 : index
    %398 = memref.load %arg3[%c4_146, %c6_147] : memref<9x8xf32, #tpu.memory_space<smem>>
    %399 = vector.broadcast %398 : f32 to vector<1x196xf32>
    %400 = arith.mulf %397, %399 : vector<1x196xf32>
    %401 = arith.addf %395, %400 : vector<1x196xf32>
    %402 = vector.extract_strided_slice %1 {offsets = [5, 0, 0], sizes = [1, 1, 196], strides = [1, 1, 1]} : vector<9x1x196xf32> to vector<1x1x196xf32>
    %403 = vector.shape_cast %402 : vector<1x1x196xf32> to vector<1x196xf32>
    %c5_148 = arith.constant 5 : index
    %c6_149 = arith.constant 6 : index
    %404 = memref.load %arg3[%c5_148, %c6_149] : memref<9x8xf32, #tpu.memory_space<smem>>
    %405 = vector.broadcast %404 : f32 to vector<1x196xf32>
    %406 = arith.mulf %403, %405 : vector<1x196xf32>
    %407 = arith.addf %401, %406 : vector<1x196xf32>
    %408 = vector.extract_strided_slice %1 {offsets = [6, 0, 0], sizes = [1, 1, 196], strides = [1, 1, 1]} : vector<9x1x196xf32> to vector<1x1x196xf32>
    %409 = vector.shape_cast %408 : vector<1x1x196xf32> to vector<1x196xf32>
    %c6_150 = arith.constant 6 : index
    %c6_151 = arith.constant 6 : index
    %410 = memref.load %arg3[%c6_150, %c6_151] : memref<9x8xf32, #tpu.memory_space<smem>>
    %411 = vector.broadcast %410 : f32 to vector<1x196xf32>
    %412 = arith.mulf %409, %411 : vector<1x196xf32>
    %413 = arith.addf %407, %412 : vector<1x196xf32>
    %414 = vector.extract_strided_slice %1 {offsets = [7, 0, 0], sizes = [1, 1, 196], strides = [1, 1, 1]} : vector<9x1x196xf32> to vector<1x1x196xf32>
    %415 = vector.shape_cast %414 : vector<1x1x196xf32> to vector<1x196xf32>
    %c7_152 = arith.constant 7 : index
    %c6_153 = arith.constant 6 : index
    %416 = memref.load %arg3[%c7_152, %c6_153] : memref<9x8xf32, #tpu.memory_space<smem>>
    %417 = vector.broadcast %416 : f32 to vector<1x196xf32>
    %418 = arith.mulf %415, %417 : vector<1x196xf32>
    %419 = arith.addf %413, %418 : vector<1x196xf32>
    %420 = vector.extract_strided_slice %1 {offsets = [8, 0, 0], sizes = [1, 1, 196], strides = [1, 1, 1]} : vector<9x1x196xf32> to vector<1x1x196xf32>
    %421 = vector.shape_cast %420 : vector<1x1x196xf32> to vector<1x196xf32>
    %c8_154 = arith.constant 8 : index
    %c6_155 = arith.constant 6 : index
    %422 = memref.load %arg3[%c8_154, %c6_155] : memref<9x8xf32, #tpu.memory_space<smem>>
    %423 = vector.broadcast %422 : f32 to vector<1x196xf32>
    %424 = arith.mulf %421, %423 : vector<1x196xf32>
    %425 = arith.addf %419, %424 : vector<1x196xf32>
    %c6_156 = arith.constant 6 : index
    %426 = memref.load %arg4[%c6_156] : memref<8xf32, #tpu.memory_space<smem>>
    %427 = vector.broadcast %426 : f32 to vector<1x196xf32>
    %428 = arith.addf %425, %427 : vector<1x196xf32>
    %cst_157 = arith.constant 0.000000e+00 : f32
    %429 = vector.broadcast %cst_157 : f32 to vector<1x196xf32>
    %430 = arith.maximumf %428, %429 : vector<1x196xf32>
    %c6_158 = arith.constant 6 : index
    %c0_159 = arith.constant 0 : index
    %c0_160 = arith.constant 0 : index
    %431 = vector.load %arg5[%c6_158, %c0_159, %c0_160] : memref<8x196x32xf32, #tpu.memory_space<vmem>>, vector<1x196x32xf32>
    %432 = vector.shape_cast %431 : vector<1x196x32xf32> to vector<196x32xf32>
    %cst_161 = arith.constant dense<0.000000e+00> : vector<1x32xf32>
    %433 = tpu.matmul %430, %432, %cst_161 {dimension_numbers = #tpu.dot_dimension_numbers<[1], [0], [0], [1], [0, 0, 1, 1], [], []>} : vector<1x196xf32>, vector<196x32xf32>, vector<1x32xf32> -> vector<1x32xf32>
    %434 = arith.addf %372, %433 : vector<1x32xf32>
    %435 = vector.extract_strided_slice %1 {offsets = [0, 0, 0], sizes = [1, 1, 196], strides = [1, 1, 1]} : vector<9x1x196xf32> to vector<1x1x196xf32>
    %436 = vector.shape_cast %435 : vector<1x1x196xf32> to vector<1x196xf32>
    %c0_162 = arith.constant 0 : index
    %c7_163 = arith.constant 7 : index
    %437 = memref.load %arg3[%c0_162, %c7_163] : memref<9x8xf32, #tpu.memory_space<smem>>
    %438 = vector.broadcast %437 : f32 to vector<1x196xf32>
    %439 = arith.mulf %436, %438 : vector<1x196xf32>
    %440 = vector.extract_strided_slice %1 {offsets = [1, 0, 0], sizes = [1, 1, 196], strides = [1, 1, 1]} : vector<9x1x196xf32> to vector<1x1x196xf32>
    %441 = vector.shape_cast %440 : vector<1x1x196xf32> to vector<1x196xf32>
    %c1_164 = arith.constant 1 : index
    %c7_165 = arith.constant 7 : index
    %442 = memref.load %arg3[%c1_164, %c7_165] : memref<9x8xf32, #tpu.memory_space<smem>>
    %443 = vector.broadcast %442 : f32 to vector<1x196xf32>
    %444 = arith.mulf %441, %443 : vector<1x196xf32>
    %445 = arith.addf %439, %444 : vector<1x196xf32>
    %446 = vector.extract_strided_slice %1 {offsets = [2, 0, 0], sizes = [1, 1, 196], strides = [1, 1, 1]} : vector<9x1x196xf32> to vector<1x1x196xf32>
    %447 = vector.shape_cast %446 : vector<1x1x196xf32> to vector<1x196xf32>
    %c2_166 = arith.constant 2 : index
    %c7_167 = arith.constant 7 : index
    %448 = memref.load %arg3[%c2_166, %c7_167] : memref<9x8xf32, #tpu.memory_space<smem>>
    %449 = vector.broadcast %448 : f32 to vector<1x196xf32>
    %450 = arith.mulf %447, %449 : vector<1x196xf32>
    %451 = arith.addf %445, %450 : vector<1x196xf32>
    %452 = vector.extract_strided_slice %1 {offsets = [3, 0, 0], sizes = [1, 1, 196], strides = [1, 1, 1]} : vector<9x1x196xf32> to vector<1x1x196xf32>
    %453 = vector.shape_cast %452 : vector<1x1x196xf32> to vector<1x196xf32>
    %c3_168 = arith.constant 3 : index
    %c7_169 = arith.constant 7 : index
    %454 = memref.load %arg3[%c3_168, %c7_169] : memref<9x8xf32, #tpu.memory_space<smem>>
    %455 = vector.broadcast %454 : f32 to vector<1x196xf32>
    %456 = arith.mulf %453, %455 : vector<1x196xf32>
    %457 = arith.addf %451, %456 : vector<1x196xf32>
    %458 = vector.extract_strided_slice %1 {offsets = [4, 0, 0], sizes = [1, 1, 196], strides = [1, 1, 1]} : vector<9x1x196xf32> to vector<1x1x196xf32>
    %459 = vector.shape_cast %458 : vector<1x1x196xf32> to vector<1x196xf32>
    %c4_170 = arith.constant 4 : index
    %c7_171 = arith.constant 7 : index
    %460 = memref.load %arg3[%c4_170, %c7_171] : memref<9x8xf32, #tpu.memory_space<smem>>
    %461 = vector.broadcast %460 : f32 to vector<1x196xf32>
    %462 = arith.mulf %459, %461 : vector<1x196xf32>
    %463 = arith.addf %457, %462 : vector<1x196xf32>
    %464 = vector.extract_strided_slice %1 {offsets = [5, 0, 0], sizes = [1, 1, 196], strides = [1, 1, 1]} : vector<9x1x196xf32> to vector<1x1x196xf32>
    %465 = vector.shape_cast %464 : vector<1x1x196xf32> to vector<1x196xf32>
    %c5_172 = arith.constant 5 : index
    %c7_173 = arith.constant 7 : index
    %466 = memref.load %arg3[%c5_172, %c7_173] : memref<9x8xf32, #tpu.memory_space<smem>>
    %467 = vector.broadcast %466 : f32 to vector<1x196xf32>
    %468 = arith.mulf %465, %467 : vector<1x196xf32>
    %469 = arith.addf %463, %468 : vector<1x196xf32>
    %470 = vector.extract_strided_slice %1 {offsets = [6, 0, 0], sizes = [1, 1, 196], strides = [1, 1, 1]} : vector<9x1x196xf32> to vector<1x1x196xf32>
    %471 = vector.shape_cast %470 : vector<1x1x196xf32> to vector<1x196xf32>
    %c6_174 = arith.constant 6 : index
    %c7_175 = arith.constant 7 : index
    %472 = memref.load %arg3[%c6_174, %c7_175] : memref<9x8xf32, #tpu.memory_space<smem>>
    %473 = vector.broadcast %472 : f32 to vector<1x196xf32>
    %474 = arith.mulf %471, %473 : vector<1x196xf32>
    %475 = arith.addf %469, %474 : vector<1x196xf32>
    %476 = vector.extract_strided_slice %1 {offsets = [7, 0, 0], sizes = [1, 1, 196], strides = [1, 1, 1]} : vector<9x1x196xf32> to vector<1x1x196xf32>
    %477 = vector.shape_cast %476 : vector<1x1x196xf32> to vector<1x196xf32>
    %c7_176 = arith.constant 7 : index
    %c7_177 = arith.constant 7 : index
    %478 = memref.load %arg3[%c7_176, %c7_177] : memref<9x8xf32, #tpu.memory_space<smem>>
    %479 = vector.broadcast %478 : f32 to vector<1x196xf32>
    %480 = arith.mulf %477, %479 : vector<1x196xf32>
    %481 = arith.addf %475, %480 : vector<1x196xf32>
    %482 = vector.extract_strided_slice %1 {offsets = [8, 0, 0], sizes = [1, 1, 196], strides = [1, 1, 1]} : vector<9x1x196xf32> to vector<1x1x196xf32>
    %483 = vector.shape_cast %482 : vector<1x1x196xf32> to vector<1x196xf32>
    %c8_178 = arith.constant 8 : index
    %c7_179 = arith.constant 7 : index
    %484 = memref.load %arg3[%c8_178, %c7_179] : memref<9x8xf32, #tpu.memory_space<smem>>
    %485 = vector.broadcast %484 : f32 to vector<1x196xf32>
    %486 = arith.mulf %483, %485 : vector<1x196xf32>
    %487 = arith.addf %481, %486 : vector<1x196xf32>
    %c7_180 = arith.constant 7 : index
    %488 = memref.load %arg4[%c7_180] : memref<8xf32, #tpu.memory_space<smem>>
    %489 = vector.broadcast %488 : f32 to vector<1x196xf32>
    %490 = arith.addf %487, %489 : vector<1x196xf32>
    %cst_181 = arith.constant 0.000000e+00 : f32
    %491 = vector.broadcast %cst_181 : f32 to vector<1x196xf32>
    %492 = arith.maximumf %490, %491 : vector<1x196xf32>
    %c7_182 = arith.constant 7 : index
    %c0_183 = arith.constant 0 : index
    %c0_184 = arith.constant 0 : index
    %493 = vector.load %arg5[%c7_182, %c0_183, %c0_184] : memref<8x196x32xf32, #tpu.memory_space<vmem>>, vector<1x196x32xf32>
    %494 = vector.shape_cast %493 : vector<1x196x32xf32> to vector<196x32xf32>
    %cst_185 = arith.constant dense<0.000000e+00> : vector<1x32xf32>
    %495 = tpu.matmul %492, %494, %cst_185 {dimension_numbers = #tpu.dot_dimension_numbers<[1], [0], [0], [1], [0, 0, 1, 1], [], []>} : vector<1x196xf32>, vector<196x32xf32>, vector<1x32xf32> -> vector<1x32xf32>
    %496 = arith.addf %434, %495 : vector<1x32xf32>
    %c0_186 = arith.constant 0 : index
    %c0_187 = arith.constant 0 : index
    %497 = vector.load %arg6[%c0_186, %c0_187] : memref<1x32xf32, #tpu.memory_space<vmem>>, vector<1x32xf32>
    %498 = arith.addf %496, %497 : vector<1x32xf32>
    %c0_188 = arith.constant 0 : index
    %c0_189 = arith.constant 0 : index
    %c0_190 = arith.constant 0 : index
    %c0_191 = arith.constant 0 : index
    %499 = vector.load %arg2[%c0_188, %c0_189, %c0_190, %c0_191] : memref<1x9x4x196xf32, #tpu.memory_space<vmem>>, vector<1x9x4x196xf32>
    %500 = vector.shape_cast %499 : vector<1x9x4x196xf32> to vector<9x4x196xf32>
    %501 = vector.extract_strided_slice %500 {offsets = [0, 0, 0], sizes = [1, 4, 196], strides = [1, 1, 1]} : vector<9x4x196xf32> to vector<1x4x196xf32>
    %502 = vector.shape_cast %501 : vector<1x4x196xf32> to vector<4x196xf32>
    %c0_192 = arith.constant 0 : index
    %c0_193 = arith.constant 0 : index
    %503 = memref.load %arg3[%c0_192, %c0_193] : memref<9x8xf32, #tpu.memory_space<smem>>
    %504 = vector.broadcast %503 : f32 to vector<4x196xf32>
    %505 = arith.mulf %502, %504 : vector<4x196xf32>
    %506 = vector.extract_strided_slice %500 {offsets = [1, 0, 0], sizes = [1, 4, 196], strides = [1, 1, 1]} : vector<9x4x196xf32> to vector<1x4x196xf32>
    %507 = vector.shape_cast %506 : vector<1x4x196xf32> to vector<4x196xf32>
    %c1_194 = arith.constant 1 : index
    %c0_195 = arith.constant 0 : index
    %508 = memref.load %arg3[%c1_194, %c0_195] : memref<9x8xf32, #tpu.memory_space<smem>>
    %509 = vector.broadcast %508 : f32 to vector<4x196xf32>
    %510 = arith.mulf %507, %509 : vector<4x196xf32>
    %511 = arith.addf %505, %510 : vector<4x196xf32>
    %512 = vector.extract_strided_slice %500 {offsets = [2, 0, 0], sizes = [1, 4, 196], strides = [1, 1, 1]} : vector<9x4x196xf32> to vector<1x4x196xf32>
    %513 = vector.shape_cast %512 : vector<1x4x196xf32> to vector<4x196xf32>
    %c2_196 = arith.constant 2 : index
    %c0_197 = arith.constant 0 : index
    %514 = memref.load %arg3[%c2_196, %c0_197] : memref<9x8xf32, #tpu.memory_space<smem>>
    %515 = vector.broadcast %514 : f32 to vector<4x196xf32>
    %516 = arith.mulf %513, %515 : vector<4x196xf32>
    %517 = arith.addf %511, %516 : vector<4x196xf32>
    %518 = vector.extract_strided_slice %500 {offsets = [3, 0, 0], sizes = [1, 4, 196], strides = [1, 1, 1]} : vector<9x4x196xf32> to vector<1x4x196xf32>
    %519 = vector.shape_cast %518 : vector<1x4x196xf32> to vector<4x196xf32>
    %c3_198 = arith.constant 3 : index
    %c0_199 = arith.constant 0 : index
    %520 = memref.load %arg3[%c3_198, %c0_199] : memref<9x8xf32, #tpu.memory_space<smem>>
    %521 = vector.broadcast %520 : f32 to vector<4x196xf32>
    %522 = arith.mulf %519, %521 : vector<4x196xf32>
    %523 = arith.addf %517, %522 : vector<4x196xf32>
    %524 = vector.extract_strided_slice %500 {offsets = [4, 0, 0], sizes = [1, 4, 196], strides = [1, 1, 1]} : vector<9x4x196xf32> to vector<1x4x196xf32>
    %525 = vector.shape_cast %524 : vector<1x4x196xf32> to vector<4x196xf32>
    %c4_200 = arith.constant 4 : index
    %c0_201 = arith.constant 0 : index
    %526 = memref.load %arg3[%c4_200, %c0_201] : memref<9x8xf32, #tpu.memory_space<smem>>
    %527 = vector.broadcast %526 : f32 to vector<4x196xf32>
    %528 = arith.mulf %525, %527 : vector<4x196xf32>
    %529 = arith.addf %523, %528 : vector<4x196xf32>
    %530 = vector.extract_strided_slice %500 {offsets = [5, 0, 0], sizes = [1, 4, 196], strides = [1, 1, 1]} : vector<9x4x196xf32> to vector<1x4x196xf32>
    %531 = vector.shape_cast %530 : vector<1x4x196xf32> to vector<4x196xf32>
    %c5_202 = arith.constant 5 : index
    %c0_203 = arith.constant 0 : index
    %532 = memref.load %arg3[%c5_202, %c0_203] : memref<9x8xf32, #tpu.memory_space<smem>>
    %533 = vector.broadcast %532 : f32 to vector<4x196xf32>
    %534 = arith.mulf %531, %533 : vector<4x196xf32>
    %535 = arith.addf %529, %534 : vector<4x196xf32>
    %536 = vector.extract_strided_slice %500 {offsets = [6, 0, 0], sizes = [1, 4, 196], strides = [1, 1, 1]} : vector<9x4x196xf32> to vector<1x4x196xf32>
    %537 = vector.shape_cast %536 : vector<1x4x196xf32> to vector<4x196xf32>
    %c6_204 = arith.constant 6 : index
    %c0_205 = arith.constant 0 : index
    %538 = memref.load %arg3[%c6_204, %c0_205] : memref<9x8xf32, #tpu.memory_space<smem>>
    %539 = vector.broadcast %538 : f32 to vector<4x196xf32>
    %540 = arith.mulf %537, %539 : vector<4x196xf32>
    %541 = arith.addf %535, %540 : vector<4x196xf32>
    %542 = vector.extract_strided_slice %500 {offsets = [7, 0, 0], sizes = [1, 4, 196], strides = [1, 1, 1]} : vector<9x4x196xf32> to vector<1x4x196xf32>
    %543 = vector.shape_cast %542 : vector<1x4x196xf32> to vector<4x196xf32>
    %c7_206 = arith.constant 7 : index
    %c0_207 = arith.constant 0 : index
    %544 = memref.load %arg3[%c7_206, %c0_207] : memref<9x8xf32, #tpu.memory_space<smem>>
    %545 = vector.broadcast %544 : f32 to vector<4x196xf32>
    %546 = arith.mulf %543, %545 : vector<4x196xf32>
    %547 = arith.addf %541, %546 : vector<4x196xf32>
    %548 = vector.extract_strided_slice %500 {offsets = [8, 0, 0], sizes = [1, 4, 196], strides = [1, 1, 1]} : vector<9x4x196xf32> to vector<1x4x196xf32>
    %549 = vector.shape_cast %548 : vector<1x4x196xf32> to vector<4x196xf32>
    %c8_208 = arith.constant 8 : index
    %c0_209 = arith.constant 0 : index
    %550 = memref.load %arg3[%c8_208, %c0_209] : memref<9x8xf32, #tpu.memory_space<smem>>
    %551 = vector.broadcast %550 : f32 to vector<4x196xf32>
    %552 = arith.mulf %549, %551 : vector<4x196xf32>
    %553 = arith.addf %547, %552 : vector<4x196xf32>
    %c0_210 = arith.constant 0 : index
    %554 = memref.load %arg4[%c0_210] : memref<8xf32, #tpu.memory_space<smem>>
    %555 = vector.broadcast %554 : f32 to vector<4x196xf32>
    %556 = arith.addf %553, %555 : vector<4x196xf32>
    %cst_211 = arith.constant 0.000000e+00 : f32
    %557 = vector.broadcast %cst_211 : f32 to vector<4x196xf32>
    %558 = arith.maximumf %556, %557 : vector<4x196xf32>
    %c0_212 = arith.constant 0 : index
    %c0_213 = arith.constant 0 : index
    %c0_214 = arith.constant 0 : index
    %559 = vector.load %arg5[%c0_212, %c0_213, %c0_214] : memref<8x196x32xf32, #tpu.memory_space<vmem>>, vector<1x196x32xf32>
    %560 = vector.shape_cast %559 : vector<1x196x32xf32> to vector<196x32xf32>
    %cst_215 = arith.constant dense<0.000000e+00> : vector<4x32xf32>
    %561 = tpu.matmul %558, %560, %cst_215 {dimension_numbers = #tpu.dot_dimension_numbers<[1], [0], [0], [1], [0, 0, 1, 1], [], []>} : vector<4x196xf32>, vector<196x32xf32>, vector<4x32xf32> -> vector<4x32xf32>
    %562 = vector.extract_strided_slice %500 {offsets = [0, 0, 0], sizes = [1, 4, 196], strides = [1, 1, 1]} : vector<9x4x196xf32> to vector<1x4x196xf32>
    %563 = vector.shape_cast %562 : vector<1x4x196xf32> to vector<4x196xf32>
    %c0_216 = arith.constant 0 : index
    %c1_217 = arith.constant 1 : index
    %564 = memref.load %arg3[%c0_216, %c1_217] : memref<9x8xf32, #tpu.memory_space<smem>>
    %565 = vector.broadcast %564 : f32 to vector<4x196xf32>
    %566 = arith.mulf %563, %565 : vector<4x196xf32>
    %567 = vector.extract_strided_slice %500 {offsets = [1, 0, 0], sizes = [1, 4, 196], strides = [1, 1, 1]} : vector<9x4x196xf32> to vector<1x4x196xf32>
    %568 = vector.shape_cast %567 : vector<1x4x196xf32> to vector<4x196xf32>
    %c1_218 = arith.constant 1 : index
    %c1_219 = arith.constant 1 : index
    %569 = memref.load %arg3[%c1_218, %c1_219] : memref<9x8xf32, #tpu.memory_space<smem>>
    %570 = vector.broadcast %569 : f32 to vector<4x196xf32>
    %571 = arith.mulf %568, %570 : vector<4x196xf32>
    %572 = arith.addf %566, %571 : vector<4x196xf32>
    %573 = vector.extract_strided_slice %500 {offsets = [2, 0, 0], sizes = [1, 4, 196], strides = [1, 1, 1]} : vector<9x4x196xf32> to vector<1x4x196xf32>
    %574 = vector.shape_cast %573 : vector<1x4x196xf32> to vector<4x196xf32>
    %c2_220 = arith.constant 2 : index
    %c1_221 = arith.constant 1 : index
    %575 = memref.load %arg3[%c2_220, %c1_221] : memref<9x8xf32, #tpu.memory_space<smem>>
    %576 = vector.broadcast %575 : f32 to vector<4x196xf32>
    %577 = arith.mulf %574, %576 : vector<4x196xf32>
    %578 = arith.addf %572, %577 : vector<4x196xf32>
    %579 = vector.extract_strided_slice %500 {offsets = [3, 0, 0], sizes = [1, 4, 196], strides = [1, 1, 1]} : vector<9x4x196xf32> to vector<1x4x196xf32>
    %580 = vector.shape_cast %579 : vector<1x4x196xf32> to vector<4x196xf32>
    %c3_222 = arith.constant 3 : index
    %c1_223 = arith.constant 1 : index
    %581 = memref.load %arg3[%c3_222, %c1_223] : memref<9x8xf32, #tpu.memory_space<smem>>
    %582 = vector.broadcast %581 : f32 to vector<4x196xf32>
    %583 = arith.mulf %580, %582 : vector<4x196xf32>
    %584 = arith.addf %578, %583 : vector<4x196xf32>
    %585 = vector.extract_strided_slice %500 {offsets = [4, 0, 0], sizes = [1, 4, 196], strides = [1, 1, 1]} : vector<9x4x196xf32> to vector<1x4x196xf32>
    %586 = vector.shape_cast %585 : vector<1x4x196xf32> to vector<4x196xf32>
    %c4_224 = arith.constant 4 : index
    %c1_225 = arith.constant 1 : index
    %587 = memref.load %arg3[%c4_224, %c1_225] : memref<9x8xf32, #tpu.memory_space<smem>>
    %588 = vector.broadcast %587 : f32 to vector<4x196xf32>
    %589 = arith.mulf %586, %588 : vector<4x196xf32>
    %590 = arith.addf %584, %589 : vector<4x196xf32>
    %591 = vector.extract_strided_slice %500 {offsets = [5, 0, 0], sizes = [1, 4, 196], strides = [1, 1, 1]} : vector<9x4x196xf32> to vector<1x4x196xf32>
    %592 = vector.shape_cast %591 : vector<1x4x196xf32> to vector<4x196xf32>
    %c5_226 = arith.constant 5 : index
    %c1_227 = arith.constant 1 : index
    %593 = memref.load %arg3[%c5_226, %c1_227] : memref<9x8xf32, #tpu.memory_space<smem>>
    %594 = vector.broadcast %593 : f32 to vector<4x196xf32>
    %595 = arith.mulf %592, %594 : vector<4x196xf32>
    %596 = arith.addf %590, %595 : vector<4x196xf32>
    %597 = vector.extract_strided_slice %500 {offsets = [6, 0, 0], sizes = [1, 4, 196], strides = [1, 1, 1]} : vector<9x4x196xf32> to vector<1x4x196xf32>
    %598 = vector.shape_cast %597 : vector<1x4x196xf32> to vector<4x196xf32>
    %c6_228 = arith.constant 6 : index
    %c1_229 = arith.constant 1 : index
    %599 = memref.load %arg3[%c6_228, %c1_229] : memref<9x8xf32, #tpu.memory_space<smem>>
    %600 = vector.broadcast %599 : f32 to vector<4x196xf32>
    %601 = arith.mulf %598, %600 : vector<4x196xf32>
    %602 = arith.addf %596, %601 : vector<4x196xf32>
    %603 = vector.extract_strided_slice %500 {offsets = [7, 0, 0], sizes = [1, 4, 196], strides = [1, 1, 1]} : vector<9x4x196xf32> to vector<1x4x196xf32>
    %604 = vector.shape_cast %603 : vector<1x4x196xf32> to vector<4x196xf32>
    %c7_230 = arith.constant 7 : index
    %c1_231 = arith.constant 1 : index
    %605 = memref.load %arg3[%c7_230, %c1_231] : memref<9x8xf32, #tpu.memory_space<smem>>
    %606 = vector.broadcast %605 : f32 to vector<4x196xf32>
    %607 = arith.mulf %604, %606 : vector<4x196xf32>
    %608 = arith.addf %602, %607 : vector<4x196xf32>
    %609 = vector.extract_strided_slice %500 {offsets = [8, 0, 0], sizes = [1, 4, 196], strides = [1, 1, 1]} : vector<9x4x196xf32> to vector<1x4x196xf32>
    %610 = vector.shape_cast %609 : vector<1x4x196xf32> to vector<4x196xf32>
    %c8_232 = arith.constant 8 : index
    %c1_233 = arith.constant 1 : index
    %611 = memref.load %arg3[%c8_232, %c1_233] : memref<9x8xf32, #tpu.memory_space<smem>>
    %612 = vector.broadcast %611 : f32 to vector<4x196xf32>
    %613 = arith.mulf %610, %612 : vector<4x196xf32>
    %614 = arith.addf %608, %613 : vector<4x196xf32>
    %c1_234 = arith.constant 1 : index
    %615 = memref.load %arg4[%c1_234] : memref<8xf32, #tpu.memory_space<smem>>
    %616 = vector.broadcast %615 : f32 to vector<4x196xf32>
    %617 = arith.addf %614, %616 : vector<4x196xf32>
    %cst_235 = arith.constant 0.000000e+00 : f32
    %618 = vector.broadcast %cst_235 : f32 to vector<4x196xf32>
    %619 = arith.maximumf %617, %618 : vector<4x196xf32>
    %c1_236 = arith.constant 1 : index
    %c0_237 = arith.constant 0 : index
    %c0_238 = arith.constant 0 : index
    %620 = vector.load %arg5[%c1_236, %c0_237, %c0_238] : memref<8x196x32xf32, #tpu.memory_space<vmem>>, vector<1x196x32xf32>
    %621 = vector.shape_cast %620 : vector<1x196x32xf32> to vector<196x32xf32>
    %cst_239 = arith.constant dense<0.000000e+00> : vector<4x32xf32>
    %622 = tpu.matmul %619, %621, %cst_239 {dimension_numbers = #tpu.dot_dimension_numbers<[1], [0], [0], [1], [0, 0, 1, 1], [], []>} : vector<4x196xf32>, vector<196x32xf32>, vector<4x32xf32> -> vector<4x32xf32>
    %623 = arith.addf %561, %622 : vector<4x32xf32>
    %624 = vector.extract_strided_slice %500 {offsets = [0, 0, 0], sizes = [1, 4, 196], strides = [1, 1, 1]} : vector<9x4x196xf32> to vector<1x4x196xf32>
    %625 = vector.shape_cast %624 : vector<1x4x196xf32> to vector<4x196xf32>
    %c0_240 = arith.constant 0 : index
    %c2_241 = arith.constant 2 : index
    %626 = memref.load %arg3[%c0_240, %c2_241] : memref<9x8xf32, #tpu.memory_space<smem>>
    %627 = vector.broadcast %626 : f32 to vector<4x196xf32>
    %628 = arith.mulf %625, %627 : vector<4x196xf32>
    %629 = vector.extract_strided_slice %500 {offsets = [1, 0, 0], sizes = [1, 4, 196], strides = [1, 1, 1]} : vector<9x4x196xf32> to vector<1x4x196xf32>
    %630 = vector.shape_cast %629 : vector<1x4x196xf32> to vector<4x196xf32>
    %c1_242 = arith.constant 1 : index
    %c2_243 = arith.constant 2 : index
    %631 = memref.load %arg3[%c1_242, %c2_243] : memref<9x8xf32, #tpu.memory_space<smem>>
    %632 = vector.broadcast %631 : f32 to vector<4x196xf32>
    %633 = arith.mulf %630, %632 : vector<4x196xf32>
    %634 = arith.addf %628, %633 : vector<4x196xf32>
    %635 = vector.extract_strided_slice %500 {offsets = [2, 0, 0], sizes = [1, 4, 196], strides = [1, 1, 1]} : vector<9x4x196xf32> to vector<1x4x196xf32>
    %636 = vector.shape_cast %635 : vector<1x4x196xf32> to vector<4x196xf32>
    %c2_244 = arith.constant 2 : index
    %c2_245 = arith.constant 2 : index
    %637 = memref.load %arg3[%c2_244, %c2_245] : memref<9x8xf32, #tpu.memory_space<smem>>
    %638 = vector.broadcast %637 : f32 to vector<4x196xf32>
    %639 = arith.mulf %636, %638 : vector<4x196xf32>
    %640 = arith.addf %634, %639 : vector<4x196xf32>
    %641 = vector.extract_strided_slice %500 {offsets = [3, 0, 0], sizes = [1, 4, 196], strides = [1, 1, 1]} : vector<9x4x196xf32> to vector<1x4x196xf32>
    %642 = vector.shape_cast %641 : vector<1x4x196xf32> to vector<4x196xf32>
    %c3_246 = arith.constant 3 : index
    %c2_247 = arith.constant 2 : index
    %643 = memref.load %arg3[%c3_246, %c2_247] : memref<9x8xf32, #tpu.memory_space<smem>>
    %644 = vector.broadcast %643 : f32 to vector<4x196xf32>
    %645 = arith.mulf %642, %644 : vector<4x196xf32>
    %646 = arith.addf %640, %645 : vector<4x196xf32>
    %647 = vector.extract_strided_slice %500 {offsets = [4, 0, 0], sizes = [1, 4, 196], strides = [1, 1, 1]} : vector<9x4x196xf32> to vector<1x4x196xf32>
    %648 = vector.shape_cast %647 : vector<1x4x196xf32> to vector<4x196xf32>
    %c4_248 = arith.constant 4 : index
    %c2_249 = arith.constant 2 : index
    %649 = memref.load %arg3[%c4_248, %c2_249] : memref<9x8xf32, #tpu.memory_space<smem>>
    %650 = vector.broadcast %649 : f32 to vector<4x196xf32>
    %651 = arith.mulf %648, %650 : vector<4x196xf32>
    %652 = arith.addf %646, %651 : vector<4x196xf32>
    %653 = vector.extract_strided_slice %500 {offsets = [5, 0, 0], sizes = [1, 4, 196], strides = [1, 1, 1]} : vector<9x4x196xf32> to vector<1x4x196xf32>
    %654 = vector.shape_cast %653 : vector<1x4x196xf32> to vector<4x196xf32>
    %c5_250 = arith.constant 5 : index
    %c2_251 = arith.constant 2 : index
    %655 = memref.load %arg3[%c5_250, %c2_251] : memref<9x8xf32, #tpu.memory_space<smem>>
    %656 = vector.broadcast %655 : f32 to vector<4x196xf32>
    %657 = arith.mulf %654, %656 : vector<4x196xf32>
    %658 = arith.addf %652, %657 : vector<4x196xf32>
    %659 = vector.extract_strided_slice %500 {offsets = [6, 0, 0], sizes = [1, 4, 196], strides = [1, 1, 1]} : vector<9x4x196xf32> to vector<1x4x196xf32>
    %660 = vector.shape_cast %659 : vector<1x4x196xf32> to vector<4x196xf32>
    %c6_252 = arith.constant 6 : index
    %c2_253 = arith.constant 2 : index
    %661 = memref.load %arg3[%c6_252, %c2_253] : memref<9x8xf32, #tpu.memory_space<smem>>
    %662 = vector.broadcast %661 : f32 to vector<4x196xf32>
    %663 = arith.mulf %660, %662 : vector<4x196xf32>
    %664 = arith.addf %658, %663 : vector<4x196xf32>
    %665 = vector.extract_strided_slice %500 {offsets = [7, 0, 0], sizes = [1, 4, 196], strides = [1, 1, 1]} : vector<9x4x196xf32> to vector<1x4x196xf32>
    %666 = vector.shape_cast %665 : vector<1x4x196xf32> to vector<4x196xf32>
    %c7_254 = arith.constant 7 : index
    %c2_255 = arith.constant 2 : index
    %667 = memref.load %arg3[%c7_254, %c2_255] : memref<9x8xf32, #tpu.memory_space<smem>>
    %668 = vector.broadcast %667 : f32 to vector<4x196xf32>
    %669 = arith.mulf %666, %668 : vector<4x196xf32>
    %670 = arith.addf %664, %669 : vector<4x196xf32>
    %671 = vector.extract_strided_slice %500 {offsets = [8, 0, 0], sizes = [1, 4, 196], strides = [1, 1, 1]} : vector<9x4x196xf32> to vector<1x4x196xf32>
    %672 = vector.shape_cast %671 : vector<1x4x196xf32> to vector<4x196xf32>
    %c8_256 = arith.constant 8 : index
    %c2_257 = arith.constant 2 : index
    %673 = memref.load %arg3[%c8_256, %c2_257] : memref<9x8xf32, #tpu.memory_space<smem>>
    %674 = vector.broadcast %673 : f32 to vector<4x196xf32>
    %675 = arith.mulf %672, %674 : vector<4x196xf32>
    %676 = arith.addf %670, %675 : vector<4x196xf32>
    %c2_258 = arith.constant 2 : index
    %677 = memref.load %arg4[%c2_258] : memref<8xf32, #tpu.memory_space<smem>>
    %678 = vector.broadcast %677 : f32 to vector<4x196xf32>
    %679 = arith.addf %676, %678 : vector<4x196xf32>
    %cst_259 = arith.constant 0.000000e+00 : f32
    %680 = vector.broadcast %cst_259 : f32 to vector<4x196xf32>
    %681 = arith.maximumf %679, %680 : vector<4x196xf32>
    %c2_260 = arith.constant 2 : index
    %c0_261 = arith.constant 0 : index
    %c0_262 = arith.constant 0 : index
    %682 = vector.load %arg5[%c2_260, %c0_261, %c0_262] : memref<8x196x32xf32, #tpu.memory_space<vmem>>, vector<1x196x32xf32>
    %683 = vector.shape_cast %682 : vector<1x196x32xf32> to vector<196x32xf32>
    %cst_263 = arith.constant dense<0.000000e+00> : vector<4x32xf32>
    %684 = tpu.matmul %681, %683, %cst_263 {dimension_numbers = #tpu.dot_dimension_numbers<[1], [0], [0], [1], [0, 0, 1, 1], [], []>} : vector<4x196xf32>, vector<196x32xf32>, vector<4x32xf32> -> vector<4x32xf32>
    %685 = arith.addf %623, %684 : vector<4x32xf32>
    %686 = vector.extract_strided_slice %500 {offsets = [0, 0, 0], sizes = [1, 4, 196], strides = [1, 1, 1]} : vector<9x4x196xf32> to vector<1x4x196xf32>
    %687 = vector.shape_cast %686 : vector<1x4x196xf32> to vector<4x196xf32>
    %c0_264 = arith.constant 0 : index
    %c3_265 = arith.constant 3 : index
    %688 = memref.load %arg3[%c0_264, %c3_265] : memref<9x8xf32, #tpu.memory_space<smem>>
    %689 = vector.broadcast %688 : f32 to vector<4x196xf32>
    %690 = arith.mulf %687, %689 : vector<4x196xf32>
    %691 = vector.extract_strided_slice %500 {offsets = [1, 0, 0], sizes = [1, 4, 196], strides = [1, 1, 1]} : vector<9x4x196xf32> to vector<1x4x196xf32>
    %692 = vector.shape_cast %691 : vector<1x4x196xf32> to vector<4x196xf32>
    %c1_266 = arith.constant 1 : index
    %c3_267 = arith.constant 3 : index
    %693 = memref.load %arg3[%c1_266, %c3_267] : memref<9x8xf32, #tpu.memory_space<smem>>
    %694 = vector.broadcast %693 : f32 to vector<4x196xf32>
    %695 = arith.mulf %692, %694 : vector<4x196xf32>
    %696 = arith.addf %690, %695 : vector<4x196xf32>
    %697 = vector.extract_strided_slice %500 {offsets = [2, 0, 0], sizes = [1, 4, 196], strides = [1, 1, 1]} : vector<9x4x196xf32> to vector<1x4x196xf32>
    %698 = vector.shape_cast %697 : vector<1x4x196xf32> to vector<4x196xf32>
    %c2_268 = arith.constant 2 : index
    %c3_269 = arith.constant 3 : index
    %699 = memref.load %arg3[%c2_268, %c3_269] : memref<9x8xf32, #tpu.memory_space<smem>>
    %700 = vector.broadcast %699 : f32 to vector<4x196xf32>
    %701 = arith.mulf %698, %700 : vector<4x196xf32>
    %702 = arith.addf %696, %701 : vector<4x196xf32>
    %703 = vector.extract_strided_slice %500 {offsets = [3, 0, 0], sizes = [1, 4, 196], strides = [1, 1, 1]} : vector<9x4x196xf32> to vector<1x4x196xf32>
    %704 = vector.shape_cast %703 : vector<1x4x196xf32> to vector<4x196xf32>
    %c3_270 = arith.constant 3 : index
    %c3_271 = arith.constant 3 : index
    %705 = memref.load %arg3[%c3_270, %c3_271] : memref<9x8xf32, #tpu.memory_space<smem>>
    %706 = vector.broadcast %705 : f32 to vector<4x196xf32>
    %707 = arith.mulf %704, %706 : vector<4x196xf32>
    %708 = arith.addf %702, %707 : vector<4x196xf32>
    %709 = vector.extract_strided_slice %500 {offsets = [4, 0, 0], sizes = [1, 4, 196], strides = [1, 1, 1]} : vector<9x4x196xf32> to vector<1x4x196xf32>
    %710 = vector.shape_cast %709 : vector<1x4x196xf32> to vector<4x196xf32>
    %c4_272 = arith.constant 4 : index
    %c3_273 = arith.constant 3 : index
    %711 = memref.load %arg3[%c4_272, %c3_273] : memref<9x8xf32, #tpu.memory_space<smem>>
    %712 = vector.broadcast %711 : f32 to vector<4x196xf32>
    %713 = arith.mulf %710, %712 : vector<4x196xf32>
    %714 = arith.addf %708, %713 : vector<4x196xf32>
    %715 = vector.extract_strided_slice %500 {offsets = [5, 0, 0], sizes = [1, 4, 196], strides = [1, 1, 1]} : vector<9x4x196xf32> to vector<1x4x196xf32>
    %716 = vector.shape_cast %715 : vector<1x4x196xf32> to vector<4x196xf32>
    %c5_274 = arith.constant 5 : index
    %c3_275 = arith.constant 3 : index
    %717 = memref.load %arg3[%c5_274, %c3_275] : memref<9x8xf32, #tpu.memory_space<smem>>
    %718 = vector.broadcast %717 : f32 to vector<4x196xf32>
    %719 = arith.mulf %716, %718 : vector<4x196xf32>
    %720 = arith.addf %714, %719 : vector<4x196xf32>
    %721 = vector.extract_strided_slice %500 {offsets = [6, 0, 0], sizes = [1, 4, 196], strides = [1, 1, 1]} : vector<9x4x196xf32> to vector<1x4x196xf32>
    %722 = vector.shape_cast %721 : vector<1x4x196xf32> to vector<4x196xf32>
    %c6_276 = arith.constant 6 : index
    %c3_277 = arith.constant 3 : index
    %723 = memref.load %arg3[%c6_276, %c3_277] : memref<9x8xf32, #tpu.memory_space<smem>>
    %724 = vector.broadcast %723 : f32 to vector<4x196xf32>
    %725 = arith.mulf %722, %724 : vector<4x196xf32>
    %726 = arith.addf %720, %725 : vector<4x196xf32>
    %727 = vector.extract_strided_slice %500 {offsets = [7, 0, 0], sizes = [1, 4, 196], strides = [1, 1, 1]} : vector<9x4x196xf32> to vector<1x4x196xf32>
    %728 = vector.shape_cast %727 : vector<1x4x196xf32> to vector<4x196xf32>
    %c7_278 = arith.constant 7 : index
    %c3_279 = arith.constant 3 : index
    %729 = memref.load %arg3[%c7_278, %c3_279] : memref<9x8xf32, #tpu.memory_space<smem>>
    %730 = vector.broadcast %729 : f32 to vector<4x196xf32>
    %731 = arith.mulf %728, %730 : vector<4x196xf32>
    %732 = arith.addf %726, %731 : vector<4x196xf32>
    %733 = vector.extract_strided_slice %500 {offsets = [8, 0, 0], sizes = [1, 4, 196], strides = [1, 1, 1]} : vector<9x4x196xf32> to vector<1x4x196xf32>
    %734 = vector.shape_cast %733 : vector<1x4x196xf32> to vector<4x196xf32>
    %c8_280 = arith.constant 8 : index
    %c3_281 = arith.constant 3 : index
    %735 = memref.load %arg3[%c8_280, %c3_281] : memref<9x8xf32, #tpu.memory_space<smem>>
    %736 = vector.broadcast %735 : f32 to vector<4x196xf32>
    %737 = arith.mulf %734, %736 : vector<4x196xf32>
    %738 = arith.addf %732, %737 : vector<4x196xf32>
    %c3_282 = arith.constant 3 : index
    %739 = memref.load %arg4[%c3_282] : memref<8xf32, #tpu.memory_space<smem>>
    %740 = vector.broadcast %739 : f32 to vector<4x196xf32>
    %741 = arith.addf %738, %740 : vector<4x196xf32>
    %cst_283 = arith.constant 0.000000e+00 : f32
    %742 = vector.broadcast %cst_283 : f32 to vector<4x196xf32>
    %743 = arith.maximumf %741, %742 : vector<4x196xf32>
    %c3_284 = arith.constant 3 : index
    %c0_285 = arith.constant 0 : index
    %c0_286 = arith.constant 0 : index
    %744 = vector.load %arg5[%c3_284, %c0_285, %c0_286] : memref<8x196x32xf32, #tpu.memory_space<vmem>>, vector<1x196x32xf32>
    %745 = vector.shape_cast %744 : vector<1x196x32xf32> to vector<196x32xf32>
    %cst_287 = arith.constant dense<0.000000e+00> : vector<4x32xf32>
    %746 = tpu.matmul %743, %745, %cst_287 {dimension_numbers = #tpu.dot_dimension_numbers<[1], [0], [0], [1], [0, 0, 1, 1], [], []>} : vector<4x196xf32>, vector<196x32xf32>, vector<4x32xf32> -> vector<4x32xf32>
    %747 = arith.addf %685, %746 : vector<4x32xf32>
    %748 = vector.extract_strided_slice %500 {offsets = [0, 0, 0], sizes = [1, 4, 196], strides = [1, 1, 1]} : vector<9x4x196xf32> to vector<1x4x196xf32>
    %749 = vector.shape_cast %748 : vector<1x4x196xf32> to vector<4x196xf32>
    %c0_288 = arith.constant 0 : index
    %c4_289 = arith.constant 4 : index
    %750 = memref.load %arg3[%c0_288, %c4_289] : memref<9x8xf32, #tpu.memory_space<smem>>
    %751 = vector.broadcast %750 : f32 to vector<4x196xf32>
    %752 = arith.mulf %749, %751 : vector<4x196xf32>
    %753 = vector.extract_strided_slice %500 {offsets = [1, 0, 0], sizes = [1, 4, 196], strides = [1, 1, 1]} : vector<9x4x196xf32> to vector<1x4x196xf32>
    %754 = vector.shape_cast %753 : vector<1x4x196xf32> to vector<4x196xf32>
    %c1_290 = arith.constant 1 : index
    %c4_291 = arith.constant 4 : index
    %755 = memref.load %arg3[%c1_290, %c4_291] : memref<9x8xf32, #tpu.memory_space<smem>>
    %756 = vector.broadcast %755 : f32 to vector<4x196xf32>
    %757 = arith.mulf %754, %756 : vector<4x196xf32>
    %758 = arith.addf %752, %757 : vector<4x196xf32>
    %759 = vector.extract_strided_slice %500 {offsets = [2, 0, 0], sizes = [1, 4, 196], strides = [1, 1, 1]} : vector<9x4x196xf32> to vector<1x4x196xf32>
    %760 = vector.shape_cast %759 : vector<1x4x196xf32> to vector<4x196xf32>
    %c2_292 = arith.constant 2 : index
    %c4_293 = arith.constant 4 : index
    %761 = memref.load %arg3[%c2_292, %c4_293] : memref<9x8xf32, #tpu.memory_space<smem>>
    %762 = vector.broadcast %761 : f32 to vector<4x196xf32>
    %763 = arith.mulf %760, %762 : vector<4x196xf32>
    %764 = arith.addf %758, %763 : vector<4x196xf32>
    %765 = vector.extract_strided_slice %500 {offsets = [3, 0, 0], sizes = [1, 4, 196], strides = [1, 1, 1]} : vector<9x4x196xf32> to vector<1x4x196xf32>
    %766 = vector.shape_cast %765 : vector<1x4x196xf32> to vector<4x196xf32>
    %c3_294 = arith.constant 3 : index
    %c4_295 = arith.constant 4 : index
    %767 = memref.load %arg3[%c3_294, %c4_295] : memref<9x8xf32, #tpu.memory_space<smem>>
    %768 = vector.broadcast %767 : f32 to vector<4x196xf32>
    %769 = arith.mulf %766, %768 : vector<4x196xf32>
    %770 = arith.addf %764, %769 : vector<4x196xf32>
    %771 = vector.extract_strided_slice %500 {offsets = [4, 0, 0], sizes = [1, 4, 196], strides = [1, 1, 1]} : vector<9x4x196xf32> to vector<1x4x196xf32>
    %772 = vector.shape_cast %771 : vector<1x4x196xf32> to vector<4x196xf32>
    %c4_296 = arith.constant 4 : index
    %c4_297 = arith.constant 4 : index
    %773 = memref.load %arg3[%c4_296, %c4_297] : memref<9x8xf32, #tpu.memory_space<smem>>
    %774 = vector.broadcast %773 : f32 to vector<4x196xf32>
    %775 = arith.mulf %772, %774 : vector<4x196xf32>
    %776 = arith.addf %770, %775 : vector<4x196xf32>
    %777 = vector.extract_strided_slice %500 {offsets = [5, 0, 0], sizes = [1, 4, 196], strides = [1, 1, 1]} : vector<9x4x196xf32> to vector<1x4x196xf32>
    %778 = vector.shape_cast %777 : vector<1x4x196xf32> to vector<4x196xf32>
    %c5_298 = arith.constant 5 : index
    %c4_299 = arith.constant 4 : index
    %779 = memref.load %arg3[%c5_298, %c4_299] : memref<9x8xf32, #tpu.memory_space<smem>>
    %780 = vector.broadcast %779 : f32 to vector<4x196xf32>
    %781 = arith.mulf %778, %780 : vector<4x196xf32>
    %782 = arith.addf %776, %781 : vector<4x196xf32>
    %783 = vector.extract_strided_slice %500 {offsets = [6, 0, 0], sizes = [1, 4, 196], strides = [1, 1, 1]} : vector<9x4x196xf32> to vector<1x4x196xf32>
    %784 = vector.shape_cast %783 : vector<1x4x196xf32> to vector<4x196xf32>
    %c6_300 = arith.constant 6 : index
    %c4_301 = arith.constant 4 : index
    %785 = memref.load %arg3[%c6_300, %c4_301] : memref<9x8xf32, #tpu.memory_space<smem>>
    %786 = vector.broadcast %785 : f32 to vector<4x196xf32>
    %787 = arith.mulf %784, %786 : vector<4x196xf32>
    %788 = arith.addf %782, %787 : vector<4x196xf32>
    %789 = vector.extract_strided_slice %500 {offsets = [7, 0, 0], sizes = [1, 4, 196], strides = [1, 1, 1]} : vector<9x4x196xf32> to vector<1x4x196xf32>
    %790 = vector.shape_cast %789 : vector<1x4x196xf32> to vector<4x196xf32>
    %c7_302 = arith.constant 7 : index
    %c4_303 = arith.constant 4 : index
    %791 = memref.load %arg3[%c7_302, %c4_303] : memref<9x8xf32, #tpu.memory_space<smem>>
    %792 = vector.broadcast %791 : f32 to vector<4x196xf32>
    %793 = arith.mulf %790, %792 : vector<4x196xf32>
    %794 = arith.addf %788, %793 : vector<4x196xf32>
    %795 = vector.extract_strided_slice %500 {offsets = [8, 0, 0], sizes = [1, 4, 196], strides = [1, 1, 1]} : vector<9x4x196xf32> to vector<1x4x196xf32>
    %796 = vector.shape_cast %795 : vector<1x4x196xf32> to vector<4x196xf32>
    %c8_304 = arith.constant 8 : index
    %c4_305 = arith.constant 4 : index
    %797 = memref.load %arg3[%c8_304, %c4_305] : memref<9x8xf32, #tpu.memory_space<smem>>
    %798 = vector.broadcast %797 : f32 to vector<4x196xf32>
    %799 = arith.mulf %796, %798 : vector<4x196xf32>
    %800 = arith.addf %794, %799 : vector<4x196xf32>
    %c4_306 = arith.constant 4 : index
    %801 = memref.load %arg4[%c4_306] : memref<8xf32, #tpu.memory_space<smem>>
    %802 = vector.broadcast %801 : f32 to vector<4x196xf32>
    %803 = arith.addf %800, %802 : vector<4x196xf32>
    %cst_307 = arith.constant 0.000000e+00 : f32
    %804 = vector.broadcast %cst_307 : f32 to vector<4x196xf32>
    %805 = arith.maximumf %803, %804 : vector<4x196xf32>
    %c4_308 = arith.constant 4 : index
    %c0_309 = arith.constant 0 : index
    %c0_310 = arith.constant 0 : index
    %806 = vector.load %arg5[%c4_308, %c0_309, %c0_310] : memref<8x196x32xf32, #tpu.memory_space<vmem>>, vector<1x196x32xf32>
    %807 = vector.shape_cast %806 : vector<1x196x32xf32> to vector<196x32xf32>
    %cst_311 = arith.constant dense<0.000000e+00> : vector<4x32xf32>
    %808 = tpu.matmul %805, %807, %cst_311 {dimension_numbers = #tpu.dot_dimension_numbers<[1], [0], [0], [1], [0, 0, 1, 1], [], []>} : vector<4x196xf32>, vector<196x32xf32>, vector<4x32xf32> -> vector<4x32xf32>
    %809 = arith.addf %747, %808 : vector<4x32xf32>
    %810 = vector.extract_strided_slice %500 {offsets = [0, 0, 0], sizes = [1, 4, 196], strides = [1, 1, 1]} : vector<9x4x196xf32> to vector<1x4x196xf32>
    %811 = vector.shape_cast %810 : vector<1x4x196xf32> to vector<4x196xf32>
    %c0_312 = arith.constant 0 : index
    %c5_313 = arith.constant 5 : index
    %812 = memref.load %arg3[%c0_312, %c5_313] : memref<9x8xf32, #tpu.memory_space<smem>>
    %813 = vector.broadcast %812 : f32 to vector<4x196xf32>
    %814 = arith.mulf %811, %813 : vector<4x196xf32>
    %815 = vector.extract_strided_slice %500 {offsets = [1, 0, 0], sizes = [1, 4, 196], strides = [1, 1, 1]} : vector<9x4x196xf32> to vector<1x4x196xf32>
    %816 = vector.shape_cast %815 : vector<1x4x196xf32> to vector<4x196xf32>
    %c1_314 = arith.constant 1 : index
    %c5_315 = arith.constant 5 : index
    %817 = memref.load %arg3[%c1_314, %c5_315] : memref<9x8xf32, #tpu.memory_space<smem>>
    %818 = vector.broadcast %817 : f32 to vector<4x196xf32>
    %819 = arith.mulf %816, %818 : vector<4x196xf32>
    %820 = arith.addf %814, %819 : vector<4x196xf32>
    %821 = vector.extract_strided_slice %500 {offsets = [2, 0, 0], sizes = [1, 4, 196], strides = [1, 1, 1]} : vector<9x4x196xf32> to vector<1x4x196xf32>
    %822 = vector.shape_cast %821 : vector<1x4x196xf32> to vector<4x196xf32>
    %c2_316 = arith.constant 2 : index
    %c5_317 = arith.constant 5 : index
    %823 = memref.load %arg3[%c2_316, %c5_317] : memref<9x8xf32, #tpu.memory_space<smem>>
    %824 = vector.broadcast %823 : f32 to vector<4x196xf32>
    %825 = arith.mulf %822, %824 : vector<4x196xf32>
    %826 = arith.addf %820, %825 : vector<4x196xf32>
    %827 = vector.extract_strided_slice %500 {offsets = [3, 0, 0], sizes = [1, 4, 196], strides = [1, 1, 1]} : vector<9x4x196xf32> to vector<1x4x196xf32>
    %828 = vector.shape_cast %827 : vector<1x4x196xf32> to vector<4x196xf32>
    %c3_318 = arith.constant 3 : index
    %c5_319 = arith.constant 5 : index
    %829 = memref.load %arg3[%c3_318, %c5_319] : memref<9x8xf32, #tpu.memory_space<smem>>
    %830 = vector.broadcast %829 : f32 to vector<4x196xf32>
    %831 = arith.mulf %828, %830 : vector<4x196xf32>
    %832 = arith.addf %826, %831 : vector<4x196xf32>
    %833 = vector.extract_strided_slice %500 {offsets = [4, 0, 0], sizes = [1, 4, 196], strides = [1, 1, 1]} : vector<9x4x196xf32> to vector<1x4x196xf32>
    %834 = vector.shape_cast %833 : vector<1x4x196xf32> to vector<4x196xf32>
    %c4_320 = arith.constant 4 : index
    %c5_321 = arith.constant 5 : index
    %835 = memref.load %arg3[%c4_320, %c5_321] : memref<9x8xf32, #tpu.memory_space<smem>>
    %836 = vector.broadcast %835 : f32 to vector<4x196xf32>
    %837 = arith.mulf %834, %836 : vector<4x196xf32>
    %838 = arith.addf %832, %837 : vector<4x196xf32>
    %839 = vector.extract_strided_slice %500 {offsets = [5, 0, 0], sizes = [1, 4, 196], strides = [1, 1, 1]} : vector<9x4x196xf32> to vector<1x4x196xf32>
    %840 = vector.shape_cast %839 : vector<1x4x196xf32> to vector<4x196xf32>
    %c5_322 = arith.constant 5 : index
    %c5_323 = arith.constant 5 : index
    %841 = memref.load %arg3[%c5_322, %c5_323] : memref<9x8xf32, #tpu.memory_space<smem>>
    %842 = vector.broadcast %841 : f32 to vector<4x196xf32>
    %843 = arith.mulf %840, %842 : vector<4x196xf32>
    %844 = arith.addf %838, %843 : vector<4x196xf32>
    %845 = vector.extract_strided_slice %500 {offsets = [6, 0, 0], sizes = [1, 4, 196], strides = [1, 1, 1]} : vector<9x4x196xf32> to vector<1x4x196xf32>
    %846 = vector.shape_cast %845 : vector<1x4x196xf32> to vector<4x196xf32>
    %c6_324 = arith.constant 6 : index
    %c5_325 = arith.constant 5 : index
    %847 = memref.load %arg3[%c6_324, %c5_325] : memref<9x8xf32, #tpu.memory_space<smem>>
    %848 = vector.broadcast %847 : f32 to vector<4x196xf32>
    %849 = arith.mulf %846, %848 : vector<4x196xf32>
    %850 = arith.addf %844, %849 : vector<4x196xf32>
    %851 = vector.extract_strided_slice %500 {offsets = [7, 0, 0], sizes = [1, 4, 196], strides = [1, 1, 1]} : vector<9x4x196xf32> to vector<1x4x196xf32>
    %852 = vector.shape_cast %851 : vector<1x4x196xf32> to vector<4x196xf32>
    %c7_326 = arith.constant 7 : index
    %c5_327 = arith.constant 5 : index
    %853 = memref.load %arg3[%c7_326, %c5_327] : memref<9x8xf32, #tpu.memory_space<smem>>
    %854 = vector.broadcast %853 : f32 to vector<4x196xf32>
    %855 = arith.mulf %852, %854 : vector<4x196xf32>
    %856 = arith.addf %850, %855 : vector<4x196xf32>
    %857 = vector.extract_strided_slice %500 {offsets = [8, 0, 0], sizes = [1, 4, 196], strides = [1, 1, 1]} : vector<9x4x196xf32> to vector<1x4x196xf32>
    %858 = vector.shape_cast %857 : vector<1x4x196xf32> to vector<4x196xf32>
    %c8_328 = arith.constant 8 : index
    %c5_329 = arith.constant 5 : index
    %859 = memref.load %arg3[%c8_328, %c5_329] : memref<9x8xf32, #tpu.memory_space<smem>>
    %860 = vector.broadcast %859 : f32 to vector<4x196xf32>
    %861 = arith.mulf %858, %860 : vector<4x196xf32>
    %862 = arith.addf %856, %861 : vector<4x196xf32>
    %c5_330 = arith.constant 5 : index
    %863 = memref.load %arg4[%c5_330] : memref<8xf32, #tpu.memory_space<smem>>
    %864 = vector.broadcast %863 : f32 to vector<4x196xf32>
    %865 = arith.addf %862, %864 : vector<4x196xf32>
    %cst_331 = arith.constant 0.000000e+00 : f32
    %866 = vector.broadcast %cst_331 : f32 to vector<4x196xf32>
    %867 = arith.maximumf %865, %866 : vector<4x196xf32>
    %c5_332 = arith.constant 5 : index
    %c0_333 = arith.constant 0 : index
    %c0_334 = arith.constant 0 : index
    %868 = vector.load %arg5[%c5_332, %c0_333, %c0_334] : memref<8x196x32xf32, #tpu.memory_space<vmem>>, vector<1x196x32xf32>
    %869 = vector.shape_cast %868 : vector<1x196x32xf32> to vector<196x32xf32>
    %cst_335 = arith.constant dense<0.000000e+00> : vector<4x32xf32>
    %870 = tpu.matmul %867, %869, %cst_335 {dimension_numbers = #tpu.dot_dimension_numbers<[1], [0], [0], [1], [0, 0, 1, 1], [], []>} : vector<4x196xf32>, vector<196x32xf32>, vector<4x32xf32> -> vector<4x32xf32>
    %871 = arith.addf %809, %870 : vector<4x32xf32>
    %872 = vector.extract_strided_slice %500 {offsets = [0, 0, 0], sizes = [1, 4, 196], strides = [1, 1, 1]} : vector<9x4x196xf32> to vector<1x4x196xf32>
    %873 = vector.shape_cast %872 : vector<1x4x196xf32> to vector<4x196xf32>
    %c0_336 = arith.constant 0 : index
    %c6_337 = arith.constant 6 : index
    %874 = memref.load %arg3[%c0_336, %c6_337] : memref<9x8xf32, #tpu.memory_space<smem>>
    %875 = vector.broadcast %874 : f32 to vector<4x196xf32>
    %876 = arith.mulf %873, %875 : vector<4x196xf32>
    %877 = vector.extract_strided_slice %500 {offsets = [1, 0, 0], sizes = [1, 4, 196], strides = [1, 1, 1]} : vector<9x4x196xf32> to vector<1x4x196xf32>
    %878 = vector.shape_cast %877 : vector<1x4x196xf32> to vector<4x196xf32>
    %c1_338 = arith.constant 1 : index
    %c6_339 = arith.constant 6 : index
    %879 = memref.load %arg3[%c1_338, %c6_339] : memref<9x8xf32, #tpu.memory_space<smem>>
    %880 = vector.broadcast %879 : f32 to vector<4x196xf32>
    %881 = arith.mulf %878, %880 : vector<4x196xf32>
    %882 = arith.addf %876, %881 : vector<4x196xf32>
    %883 = vector.extract_strided_slice %500 {offsets = [2, 0, 0], sizes = [1, 4, 196], strides = [1, 1, 1]} : vector<9x4x196xf32> to vector<1x4x196xf32>
    %884 = vector.shape_cast %883 : vector<1x4x196xf32> to vector<4x196xf32>
    %c2_340 = arith.constant 2 : index
    %c6_341 = arith.constant 6 : index
    %885 = memref.load %arg3[%c2_340, %c6_341] : memref<9x8xf32, #tpu.memory_space<smem>>
    %886 = vector.broadcast %885 : f32 to vector<4x196xf32>
    %887 = arith.mulf %884, %886 : vector<4x196xf32>
    %888 = arith.addf %882, %887 : vector<4x196xf32>
    %889 = vector.extract_strided_slice %500 {offsets = [3, 0, 0], sizes = [1, 4, 196], strides = [1, 1, 1]} : vector<9x4x196xf32> to vector<1x4x196xf32>
    %890 = vector.shape_cast %889 : vector<1x4x196xf32> to vector<4x196xf32>
    %c3_342 = arith.constant 3 : index
    %c6_343 = arith.constant 6 : index
    %891 = memref.load %arg3[%c3_342, %c6_343] : memref<9x8xf32, #tpu.memory_space<smem>>
    %892 = vector.broadcast %891 : f32 to vector<4x196xf32>
    %893 = arith.mulf %890, %892 : vector<4x196xf32>
    %894 = arith.addf %888, %893 : vector<4x196xf32>
    %895 = vector.extract_strided_slice %500 {offsets = [4, 0, 0], sizes = [1, 4, 196], strides = [1, 1, 1]} : vector<9x4x196xf32> to vector<1x4x196xf32>
    %896 = vector.shape_cast %895 : vector<1x4x196xf32> to vector<4x196xf32>
    %c4_344 = arith.constant 4 : index
    %c6_345 = arith.constant 6 : index
    %897 = memref.load %arg3[%c4_344, %c6_345] : memref<9x8xf32, #tpu.memory_space<smem>>
    %898 = vector.broadcast %897 : f32 to vector<4x196xf32>
    %899 = arith.mulf %896, %898 : vector<4x196xf32>
    %900 = arith.addf %894, %899 : vector<4x196xf32>
    %901 = vector.extract_strided_slice %500 {offsets = [5, 0, 0], sizes = [1, 4, 196], strides = [1, 1, 1]} : vector<9x4x196xf32> to vector<1x4x196xf32>
    %902 = vector.shape_cast %901 : vector<1x4x196xf32> to vector<4x196xf32>
    %c5_346 = arith.constant 5 : index
    %c6_347 = arith.constant 6 : index
    %903 = memref.load %arg3[%c5_346, %c6_347] : memref<9x8xf32, #tpu.memory_space<smem>>
    %904 = vector.broadcast %903 : f32 to vector<4x196xf32>
    %905 = arith.mulf %902, %904 : vector<4x196xf32>
    %906 = arith.addf %900, %905 : vector<4x196xf32>
    %907 = vector.extract_strided_slice %500 {offsets = [6, 0, 0], sizes = [1, 4, 196], strides = [1, 1, 1]} : vector<9x4x196xf32> to vector<1x4x196xf32>
    %908 = vector.shape_cast %907 : vector<1x4x196xf32> to vector<4x196xf32>
    %c6_348 = arith.constant 6 : index
    %c6_349 = arith.constant 6 : index
    %909 = memref.load %arg3[%c6_348, %c6_349] : memref<9x8xf32, #tpu.memory_space<smem>>
    %910 = vector.broadcast %909 : f32 to vector<4x196xf32>
    %911 = arith.mulf %908, %910 : vector<4x196xf32>
    %912 = arith.addf %906, %911 : vector<4x196xf32>
    %913 = vector.extract_strided_slice %500 {offsets = [7, 0, 0], sizes = [1, 4, 196], strides = [1, 1, 1]} : vector<9x4x196xf32> to vector<1x4x196xf32>
    %914 = vector.shape_cast %913 : vector<1x4x196xf32> to vector<4x196xf32>
    %c7_350 = arith.constant 7 : index
    %c6_351 = arith.constant 6 : index
    %915 = memref.load %arg3[%c7_350, %c6_351] : memref<9x8xf32, #tpu.memory_space<smem>>
    %916 = vector.broadcast %915 : f32 to vector<4x196xf32>
    %917 = arith.mulf %914, %916 : vector<4x196xf32>
    %918 = arith.addf %912, %917 : vector<4x196xf32>
    %919 = vector.extract_strided_slice %500 {offsets = [8, 0, 0], sizes = [1, 4, 196], strides = [1, 1, 1]} : vector<9x4x196xf32> to vector<1x4x196xf32>
    %920 = vector.shape_cast %919 : vector<1x4x196xf32> to vector<4x196xf32>
    %c8_352 = arith.constant 8 : index
    %c6_353 = arith.constant 6 : index
    %921 = memref.load %arg3[%c8_352, %c6_353] : memref<9x8xf32, #tpu.memory_space<smem>>
    %922 = vector.broadcast %921 : f32 to vector<4x196xf32>
    %923 = arith.mulf %920, %922 : vector<4x196xf32>
    %924 = arith.addf %918, %923 : vector<4x196xf32>
    %c6_354 = arith.constant 6 : index
    %925 = memref.load %arg4[%c6_354] : memref<8xf32, #tpu.memory_space<smem>>
    %926 = vector.broadcast %925 : f32 to vector<4x196xf32>
    %927 = arith.addf %924, %926 : vector<4x196xf32>
    %cst_355 = arith.constant 0.000000e+00 : f32
    %928 = vector.broadcast %cst_355 : f32 to vector<4x196xf32>
    %929 = arith.maximumf %927, %928 : vector<4x196xf32>
    %c6_356 = arith.constant 6 : index
    %c0_357 = arith.constant 0 : index
    %c0_358 = arith.constant 0 : index
    %930 = vector.load %arg5[%c6_356, %c0_357, %c0_358] : memref<8x196x32xf32, #tpu.memory_space<vmem>>, vector<1x196x32xf32>
    %931 = vector.shape_cast %930 : vector<1x196x32xf32> to vector<196x32xf32>
    %cst_359 = arith.constant dense<0.000000e+00> : vector<4x32xf32>
    %932 = tpu.matmul %929, %931, %cst_359 {dimension_numbers = #tpu.dot_dimension_numbers<[1], [0], [0], [1], [0, 0, 1, 1], [], []>} : vector<4x196xf32>, vector<196x32xf32>, vector<4x32xf32> -> vector<4x32xf32>
    %933 = arith.addf %871, %932 : vector<4x32xf32>
    %934 = vector.extract_strided_slice %500 {offsets = [0, 0, 0], sizes = [1, 4, 196], strides = [1, 1, 1]} : vector<9x4x196xf32> to vector<1x4x196xf32>
    %935 = vector.shape_cast %934 : vector<1x4x196xf32> to vector<4x196xf32>
    %c0_360 = arith.constant 0 : index
    %c7_361 = arith.constant 7 : index
    %936 = memref.load %arg3[%c0_360, %c7_361] : memref<9x8xf32, #tpu.memory_space<smem>>
    %937 = vector.broadcast %936 : f32 to vector<4x196xf32>
    %938 = arith.mulf %935, %937 : vector<4x196xf32>
    %939 = vector.extract_strided_slice %500 {offsets = [1, 0, 0], sizes = [1, 4, 196], strides = [1, 1, 1]} : vector<9x4x196xf32> to vector<1x4x196xf32>
    %940 = vector.shape_cast %939 : vector<1x4x196xf32> to vector<4x196xf32>
    %c1_362 = arith.constant 1 : index
    %c7_363 = arith.constant 7 : index
    %941 = memref.load %arg3[%c1_362, %c7_363] : memref<9x8xf32, #tpu.memory_space<smem>>
    %942 = vector.broadcast %941 : f32 to vector<4x196xf32>
    %943 = arith.mulf %940, %942 : vector<4x196xf32>
    %944 = arith.addf %938, %943 : vector<4x196xf32>
    %945 = vector.extract_strided_slice %500 {offsets = [2, 0, 0], sizes = [1, 4, 196], strides = [1, 1, 1]} : vector<9x4x196xf32> to vector<1x4x196xf32>
    %946 = vector.shape_cast %945 : vector<1x4x196xf32> to vector<4x196xf32>
    %c2_364 = arith.constant 2 : index
    %c7_365 = arith.constant 7 : index
    %947 = memref.load %arg3[%c2_364, %c7_365] : memref<9x8xf32, #tpu.memory_space<smem>>
    %948 = vector.broadcast %947 : f32 to vector<4x196xf32>
    %949 = arith.mulf %946, %948 : vector<4x196xf32>
    %950 = arith.addf %944, %949 : vector<4x196xf32>
    %951 = vector.extract_strided_slice %500 {offsets = [3, 0, 0], sizes = [1, 4, 196], strides = [1, 1, 1]} : vector<9x4x196xf32> to vector<1x4x196xf32>
    %952 = vector.shape_cast %951 : vector<1x4x196xf32> to vector<4x196xf32>
    %c3_366 = arith.constant 3 : index
    %c7_367 = arith.constant 7 : index
    %953 = memref.load %arg3[%c3_366, %c7_367] : memref<9x8xf32, #tpu.memory_space<smem>>
    %954 = vector.broadcast %953 : f32 to vector<4x196xf32>
    %955 = arith.mulf %952, %954 : vector<4x196xf32>
    %956 = arith.addf %950, %955 : vector<4x196xf32>
    %957 = vector.extract_strided_slice %500 {offsets = [4, 0, 0], sizes = [1, 4, 196], strides = [1, 1, 1]} : vector<9x4x196xf32> to vector<1x4x196xf32>
    %958 = vector.shape_cast %957 : vector<1x4x196xf32> to vector<4x196xf32>
    %c4_368 = arith.constant 4 : index
    %c7_369 = arith.constant 7 : index
    %959 = memref.load %arg3[%c4_368, %c7_369] : memref<9x8xf32, #tpu.memory_space<smem>>
    %960 = vector.broadcast %959 : f32 to vector<4x196xf32>
    %961 = arith.mulf %958, %960 : vector<4x196xf32>
    %962 = arith.addf %956, %961 : vector<4x196xf32>
    %963 = vector.extract_strided_slice %500 {offsets = [5, 0, 0], sizes = [1, 4, 196], strides = [1, 1, 1]} : vector<9x4x196xf32> to vector<1x4x196xf32>
    %964 = vector.shape_cast %963 : vector<1x4x196xf32> to vector<4x196xf32>
    %c5_370 = arith.constant 5 : index
    %c7_371 = arith.constant 7 : index
    %965 = memref.load %arg3[%c5_370, %c7_371] : memref<9x8xf32, #tpu.memory_space<smem>>
    %966 = vector.broadcast %965 : f32 to vector<4x196xf32>
    %967 = arith.mulf %964, %966 : vector<4x196xf32>
    %968 = arith.addf %962, %967 : vector<4x196xf32>
    %969 = vector.extract_strided_slice %500 {offsets = [6, 0, 0], sizes = [1, 4, 196], strides = [1, 1, 1]} : vector<9x4x196xf32> to vector<1x4x196xf32>
    %970 = vector.shape_cast %969 : vector<1x4x196xf32> to vector<4x196xf32>
    %c6_372 = arith.constant 6 : index
    %c7_373 = arith.constant 7 : index
    %971 = memref.load %arg3[%c6_372, %c7_373] : memref<9x8xf32, #tpu.memory_space<smem>>
    %972 = vector.broadcast %971 : f32 to vector<4x196xf32>
    %973 = arith.mulf %970, %972 : vector<4x196xf32>
    %974 = arith.addf %968, %973 : vector<4x196xf32>
    %975 = vector.extract_strided_slice %500 {offsets = [7, 0, 0], sizes = [1, 4, 196], strides = [1, 1, 1]} : vector<9x4x196xf32> to vector<1x4x196xf32>
    %976 = vector.shape_cast %975 : vector<1x4x196xf32> to vector<4x196xf32>
    %c7_374 = arith.constant 7 : index
    %c7_375 = arith.constant 7 : index
    %977 = memref.load %arg3[%c7_374, %c7_375] : memref<9x8xf32, #tpu.memory_space<smem>>
    %978 = vector.broadcast %977 : f32 to vector<4x196xf32>
    %979 = arith.mulf %976, %978 : vector<4x196xf32>
    %980 = arith.addf %974, %979 : vector<4x196xf32>
    %981 = vector.extract_strided_slice %500 {offsets = [8, 0, 0], sizes = [1, 4, 196], strides = [1, 1, 1]} : vector<9x4x196xf32> to vector<1x4x196xf32>
    %982 = vector.shape_cast %981 : vector<1x4x196xf32> to vector<4x196xf32>
    %c8_376 = arith.constant 8 : index
    %c7_377 = arith.constant 7 : index
    %983 = memref.load %arg3[%c8_376, %c7_377] : memref<9x8xf32, #tpu.memory_space<smem>>
    %984 = vector.broadcast %983 : f32 to vector<4x196xf32>
    %985 = arith.mulf %982, %984 : vector<4x196xf32>
    %986 = arith.addf %980, %985 : vector<4x196xf32>
    %c7_378 = arith.constant 7 : index
    %987 = memref.load %arg4[%c7_378] : memref<8xf32, #tpu.memory_space<smem>>
    %988 = vector.broadcast %987 : f32 to vector<4x196xf32>
    %989 = arith.addf %986, %988 : vector<4x196xf32>
    %cst_379 = arith.constant 0.000000e+00 : f32
    %990 = vector.broadcast %cst_379 : f32 to vector<4x196xf32>
    %991 = arith.maximumf %989, %990 : vector<4x196xf32>
    %c7_380 = arith.constant 7 : index
    %c0_381 = arith.constant 0 : index
    %c0_382 = arith.constant 0 : index
    %992 = vector.load %arg5[%c7_380, %c0_381, %c0_382] : memref<8x196x32xf32, #tpu.memory_space<vmem>>, vector<1x196x32xf32>
    %993 = vector.shape_cast %992 : vector<1x196x32xf32> to vector<196x32xf32>
    %cst_383 = arith.constant dense<0.000000e+00> : vector<4x32xf32>
    %994 = tpu.matmul %991, %993, %cst_383 {dimension_numbers = #tpu.dot_dimension_numbers<[1], [0], [0], [1], [0, 0, 1, 1], [], []>} : vector<4x196xf32>, vector<196x32xf32>, vector<4x32xf32> -> vector<4x32xf32>
    %995 = arith.addf %933, %994 : vector<4x32xf32>
    %c0_384 = arith.constant 0 : index
    %c0_385 = arith.constant 0 : index
    %996 = vector.load %arg6[%c0_384, %c0_385] : memref<1x32xf32, #tpu.memory_space<vmem>>, vector<1x32xf32>
    %997 = vector.broadcast %996 : vector<1x32xf32> to vector<4x32xf32>
    %998 = arith.addf %995, %997 : vector<4x32xf32>
    %c0_386 = arith.constant 0 : index
    %c0_387 = arith.constant 0 : index
    %c0_388 = arith.constant 0 : index
    %999 = vector.load %arg7[%c0_386, %c0_387, %c0_388] : memref<1x1x32xf32, #tpu.memory_space<vmem>>, vector<1x1x32xf32>
    %1000 = vector.shape_cast %999 : vector<1x1x32xf32> to vector<1x32xf32>
    %1001 = vector.shape_cast %498 : vector<1x32xf32> to vector<1x1x32xf32>
    tpu.vector_store %arg7[%c0_386, %c0_387, %c0_388], %1001 {strides = array<i32>} : memref<1x1x32xf32, #tpu.memory_space<vmem>>, vector<1x1x32xf32>,
    %c0_389 = arith.constant 0 : index
    %c0_390 = arith.constant 0 : index
    %c0_391 = arith.constant 0 : index
    %1002 = vector.load %arg8[%c0_389, %c0_390, %c0_391] : memref<1x4x32xf32, #tpu.memory_space<vmem>>, vector<1x4x32xf32>
    %1003 = vector.shape_cast %1002 : vector<1x4x32xf32> to vector<4x32xf32>
    %1004 = vector.shape_cast %998 : vector<4x32xf32> to vector<1x4x32xf32>
    tpu.vector_store %arg8[%c0_389, %c0_390, %c0_391], %1004 {strides = array<i32>} : memref<1x4x32xf32, #tpu.memory_space<vmem>>, vector<1x4x32xf32>,
    %1005 = vector.broadcast %498 : vector<1x32xf32> to vector<4x32xf32>
    %1006 = arith.subf %1005, %998 : vector<4x32xf32>
    %1007 = arith.mulf %1006, %1006 : vector<4x32xf32>
    %cst_392 = arith.constant dense<0.000000e+00> : vector<4xf32>
    %1008 = vector.multi_reduction <add>, %1007, %cst_392 [1] : vector<4x32xf32> to vector<4xf32>
    %1009 = vector.shape_cast %1008 : vector<4xf32> to vector<4x1xf32>
    %c0_393 = arith.constant 0 : index
    %c0_394 = arith.constant 0 : index
    %c0_395 = arith.constant 0 : index
    %1010 = vector.load %arg9[%c0_393, %c0_394, %c0_395] : memref<1x4x1xf32, #tpu.memory_space<vmem>>, vector<1x4x1xf32>
    %1011 = vector.shape_cast %1010 : vector<1x4x1xf32> to vector<4x1xf32>
    %1012 = vector.shape_cast %1009 : vector<4x1xf32> to vector<1x4x1xf32>
    tpu.vector_store %arg9[%c0_393, %c0_394, %c0_395], %1012 {strides = array<i32>} : memref<1x4x1xf32, #tpu.memory_space<vmem>>, vector<1x4x1xf32>,
    return
  }
  func.func @transform_0(%arg0: i32) -> (i32, i32, i32, i32) {
    %c0_i32 = arith.constant 0 : i32
    %c0_i32_0 = arith.constant 0 : i32
    %c0_i32_1 = arith.constant 0 : i32
    %c0_i32_2 = arith.constant 0 : i32
    return %arg0, %c0_i32, %c0_i32_0, %c0_i32_1 : i32, i32, i32, i32
  }
  func.func @transform_1(%arg0: i32) -> (i32, i32, i32, i32) {
    %c0_i32 = arith.constant 0 : i32
    %c0_i32_0 = arith.constant 0 : i32
    %c0_i32_1 = arith.constant 0 : i32
    %c0_i32_2 = arith.constant 0 : i32
    return %arg0, %c0_i32, %c0_i32_0, %c0_i32_1 : i32, i32, i32, i32
  }
  func.func @transform_2(%arg0: i32) -> (i32, i32) {
    %c0_i32 = arith.constant 0 : i32
    %c0_i32_0 = arith.constant 0 : i32
    %c0_i32_1 = arith.constant 0 : i32
    return %c0_i32, %c0_i32_0 : i32, i32
  }
  func.func @transform_3(%arg0: i32) -> i32 {
    %c0_i32 = arith.constant 0 : i32
    %c0_i32_0 = arith.constant 0 : i32
    return %c0_i32 : i32
  }
  func.func @transform_4(%arg0: i32) -> (i32, i32, i32) {
    %c0_i32 = arith.constant 0 : i32
    %c0_i32_0 = arith.constant 0 : i32
    %c0_i32_1 = arith.constant 0 : i32
    %c0_i32_2 = arith.constant 0 : i32
    return %c0_i32, %c0_i32_0, %c0_i32_1 : i32, i32, i32
  }
  func.func @transform_5(%arg0: i32) -> (i32, i32) {
    %c0_i32 = arith.constant 0 : i32
    %c0_i32_0 = arith.constant 0 : i32
    %c0_i32_1 = arith.constant 0 : i32
    return %c0_i32, %c0_i32_0 : i32, i32
  }
  func.func @transform_6(%arg0: i32) -> (i32, i32, i32) {
    %c0_i32 = arith.constant 0 : i32
    %c0_i32_0 = arith.constant 0 : i32
    %c0_i32_1 = arith.constant 0 : i32
    return %arg0, %c0_i32, %c0_i32_0 : i32, i32, i32
  }
  func.func @transform_7(%arg0: i32) -> (i32, i32, i32) {
    %c0_i32 = arith.constant 0 : i32
    %c0_i32_0 = arith.constant 0 : i32
    %c0_i32_1 = arith.constant 0 : i32
    return %arg0, %c0_i32, %c0_i32_0 : i32, i32, i32
  }
  func.func @transform_8(%arg0: i32) -> (i32, i32, i32) {
    %c0_i32 = arith.constant 0 : i32
    %c0_i32_0 = arith.constant 0 : i32
    %c0_i32_1 = arith.constant 0 : i32
    return %arg0, %c0_i32, %c0_i32_0 : i32, i32, i32
  }
}

</mosaic_0001>

<llo_original>
// kernel: siamese_forward.1
$region0: #{siamese_forward.1}
  #allocation0 [shape = 'u32[]', space=smem, size = 0x4, offset = 0x4, fixed_abs, tag = 'smem constant byte address 0x4 - core index']
  #allocation1 [shape = 'u32[144,128]{1,0:T(1,128)}', space=vmem, size = 0x12000, scoped, tag = 'internal scratch']
  %s0 = inlined_call_operand.vmem [shape: f32[2,9,1,196], index: 0, kind: input, shape index: {}]
  %s1 = inlined_call_operand.vmem [shape: f32[2,9,4,196], index: 1, kind: input, shape index: {}]
  %s2 = inlined_call_operand.vmem [shape: f32[9,8], index: 2, kind: input, shape index: {}]
  %s3 = inlined_call_operand.vmem [shape: f32[8], index: 3, kind: input, shape index: {}]
  %s4 = inlined_call_operand.vmem [shape: f32[8,196,32], index: 4, kind: input, shape index: {}]
  %s5 = inlined_call_operand.vmem [shape: f32[1,32], index: 5, kind: input, shape index: {}]
  %s6 = inlined_call_operand.hbm [shape: f32[2,1,32], index: 6, kind: output, shape index: {0}]
  %s7 = inlined_call_operand.vmem [shape: f32[2,4,32], index: 7, kind: output, shape index: {1}]
  %s8 = inlined_call_operand.vmem [shape: f32[2,4,1], index: 8, kind: output, shape index: {2}]
  %9 = xla_tuple %s6, %s7, %s8
  %s10 = sld [smem:[#allocation0]]
  $region81: #{siamese_forward.1} parent=0
    _
  %s12 = ssub.s32 1, %s10
  %s13 = scalar_select 0, %s12, %s10
  $region1: #{siamese_forward.1} parent=0
    #allocation2 [shape = 'u8[8192]{0}', space=smem, size = 0x2000, scoped, tag = 'input window, operand 2, single buffered']
    #allocation3 [shape = 's32[2]{0}', space=sflag, size = 0x8, scoped, tag = 'scoped memory for siamese_forward.1']
    #allocation4 [shape = 's32[2]{0}', space=sflag, size = 0x8, scoped, tag = 'scoped memory for siamese_forward.1']
    #allocation5 [shape = 'u8[512]{0}', space=smem, size = 0x200, scoped, tag = 'input window, operand 3, single buffered']
    #allocation6 [shape = 's32[1]{0}', space=sflag, size = 0x4, scoped, tag = 'scoped memory for siamese_forward.1']
    #allocation7 [shape = 'u8[1024]{0}', space=vmem, size = 0x400, scoped, tag = 'output window, operand 0']
    %14 = vsyncpa [#allocation4], 0
    %15 = vsyncpa [#allocation6], 0
    %16 = vsyncpa [#allocation3], 0
    %s17 = scalar_lea.sflag [#allocation3], 1
    %18 = vsyncpa %s17, 0
    loop: start=0, step=1, limit=4
    $region2: #{siamese_forward.1} parent=1 // loop_pre_header
      _
    $region3: #{siamese_forward.1} parent=1 // loop_header
      %s20 = sphi 0, %s24
      %p21 = scmp.ge.s32.totalorder %s20, 4
      %s30 = sphi 0, %s32
      %s33 = sphi 0, %s30
      %s34 = sphi 0, %s33
      %s50 = sphi 0, %s34
      %s56 = sphi 0, %s58
      %s59 = sphi 0, %s56
      %s60 = sphi 0, %s59
      %s76 = sphi 0, %s60
      %s80 = sphi 0, %s80
      %s82 = sphi 0, %s80
      %s83 = sphi 0, %s82
      %s97 = sphi 0, %s83
      %s101 = sphi 0, %s101
      %s103 = sphi 0, %s101
      %s104 = sphi 0, %s103
      %s118 = sphi 0, %s104
      %s122 = sphi 0, %s122
      %s124 = sphi 0, %s122
      %s125 = sphi 0, %s124
      %s139 = sphi 0, %s125
      %s143 = sphi 0, %s143
      %s145 = sphi 0, %s143
      %s146 = sphi 0, %s145
      %s160 = sphi 0, %s146
      %s166 = sphi 0, %s168
      %s169 = sphi 0, %s166
      %s170 = sphi 0, %s169
      %s186 = sphi 0, %s170
      %s192 = sphi 0, %s194
      %s195 = sphi 0, %s192
      %s196 = sphi 0, %s195
      %s212 = sphi 0, %s196
      %s218 = sphi 0, %s220
      %s221 = sphi 0, %s218
      %s222 = sphi 0, %s221
      %s238 = sphi 0, %s222
    $region4: #{siamese_forward.1} parent=1 // loop_header_branch
      %23 = sbr.rel (%p21) target = $region8
    $region5: #{siamese_forward.1} parent=1 // loop_body
      %s25 = ssub.s32 %s20, 1
      %s26 = ssub.s32 %s20, 2
      %s27 = sadd.s32 %s20, 1
      %s28 = ssub.s32 %s20, %s27
      %p29 = scmp.eq.s32.totalorder %s28, 0
      %s31 = sadd.s32 %s30, 1
      %s32 = scalar_select %p29, %s30, %s31
      %p35 = pneg %p29
      %p36 = scmp.eq.s32.totalorder %s20, 1
      %p37 = por %p35, %p36
      %p38 = scmp.ne.s32.totalorder %s30, %s33
      %p39 = scmp.eq.s32.totalorder %s20, 0
      %p40 = por %p38, %p39
      %p41 = scmp.ne.s32.totalorder %s30, %s33
      %p42 = scmp.eq.s32.totalorder %s25, 1
      %p43 = por %p41, %p42
      %p44 = scmp.ne.s32.totalorder %s33, %s34
      %p45 = scmp.eq.s32.totalorder %s25, 0
      %p46 = por %p44, %p45
      %p47 = scmp.ne.s32.totalorder %s33, %s34
      %p48 = scmp.eq.s32.totalorder %s26, 1
      %p49 = por %p47, %p48
      %p51 = scmp.ne.s32.totalorder %s34, %s50
      %p52 = scmp.eq.s32.totalorder %s26, 0
      %p53 = por %p51, %p52
      %s54 = ssub.s32 %s20, %s27
      %p55 = scmp.eq.s32.totalorder %s54, 0
      %s57 = sadd.s32 %s56, 1
      %s58 = scalar_select %p55, %s56, %s57
      %p61 = pneg %p55
      %p62 = scmp.eq.s32.totalorder %s20, 1
      %p63 = por %p61, %p62
      %p64 = scmp.ne.s32.totalorder %s56, %s59
      %p65 = scmp.eq.s32.totalorder %s20, 0
      %p66 = por %p64, %p65
      %p67 = scmp.ne.s32.totalorder %s56, %s59
      %p68 = scmp.eq.s32.totalorder %s25, 1
      %p69 = por %p67, %p68
      %p70 = scmp.ne.s32.totalorder %s59, %s60
      %p71 = scmp.eq.s32.totalorder %s25, 0
      %p72 = por %p70, %p71
      %p73 = scmp.ne.s32.totalorder %s59, %s60
      %p74 = scmp.eq.s32.totalorder %s26, 1
      %p75 = por %p73, %p74
      %p77 = scmp.ne.s32.totalorder %s60, %s76
      %p78 = scmp.eq.s32.totalorder %s26, 0
      %p79 = por %p77, %p78
      %s81 = sadd.s32 %s80, 1
      %p84 = scmp.eq.s32.totalorder %s20, 1
      %p85 = scmp.ne.s32.totalorder %s80, %s82
      %p86 = scmp.eq.s32.totalorder %s20, 0
      %p87 = por %p85, %p86
      %p88 = scmp.ne.s32.totalorder %s80, %s82
      %p89 = scmp.eq.s32.totalorder %s25, 1
      %p90 = por %p88, %p89
      %p91 = scmp.ne.s32.totalorder %s82, %s83
      %p92 = scmp.eq.s32.totalorder %s25, 0
      %p93 = por %p91, %p92
      %p94 = scmp.ne.s32.totalorder %s82, %s83
      %p95 = scmp.eq.s32.totalorder %s26, 1
      %p96 = por %p94, %p95
      %p98 = scmp.ne.s32.totalorder %s83, %s97
      %p99 = scmp.eq.s32.totalorder %s26, 0
      %p100 = por %p98, %p99
      %s102 = sadd.s32 %s101, 1
      %p105 = scmp.eq.s32.totalorder %s20, 1
      %p106 = scmp.ne.s32.totalorder %s101, %s103
      %p107 = scmp.eq.s32.totalorder %s20, 0
      %p108 = por %p106, %p107
      %p109 = scmp.ne.s32.totalorder %s101, %s103
      %p110 = scmp.eq.s32.totalorder %s25, 1
      %p111 = por %p109, %p110
      %p112 = scmp.ne.s32.totalorder %s103, %s104
      %p113 = scmp.eq.s32.totalorder %s25, 0
      %p114 = por %p112, %p113
      %p115 = scmp.ne.s32.totalorder %s103, %s104
      %p116 = scmp.eq.s32.totalorder %s26, 1
      %p117 = por %p115, %p116
      %p119 = scmp.ne.s32.totalorder %s104, %s118
      %p120 = scmp.eq.s32.totalorder %s26, 0
      %p121 = por %p119, %p120
      %s123 = sadd.s32 %s122, 1
      %p126 = scmp.eq.s32.totalorder %s20, 1
      %p127 = scmp.ne.s32.totalorder %s122, %s124
      %p128 = scmp.eq.s32.totalorder %s20, 0
      %p129 = por %p127, %p128
      %p130 = scmp.ne.s32.totalorder %s122, %s124
      %p131 = scmp.eq.s32.totalorder %s25, 1
      %p132 = por %p130, %p131
      %p133 = scmp.ne.s32.totalorder %s124, %s125
      %p134 = scmp.eq.s32.totalorder %s25, 0
      %p135 = por %p133, %p134
      %p136 = scmp.ne.s32.totalorder %s124, %s125
      %p137 = scmp.eq.s32.totalorder %s26, 1
      %p138 = por %p136, %p137
      %p140 = scmp.ne.s32.totalorder %s125, %s139
      %p141 = scmp.eq.s32.totalorder %s26, 0
      %p142 = por %p140, %p141
      %s144 = sadd.s32 %s143, 1
      %p147 = scmp.eq.s32.totalorder %s20, 1
      %p148 = scmp.ne.s32.totalorder %s143, %s145
      %p149 = scmp.eq.s32.totalorder %s20, 0
      %p150 = por %p148, %p149
      %p151 = scmp.ne.s32.totalorder %s143, %s145
      %p152 = scmp.eq.s32.totalorder %s25, 1
      %p153 = por %p151, %p152
      %p154 = scmp.ne.s32.totalorder %s145, %s146
      %p155 = scmp.eq.s32.totalorder %s25, 0
      %p156 = por %p154, %p155
      %p157 = scmp.ne.s32.totalorder %s145, %s146
      %p158 = scmp.eq.s32.totalorder %s26, 1
      %p159 = por %p157, %p158
      %p161 = scmp.ne.s32.totalorder %s146, %s160
      %p162 = scmp.eq.s32.totalorder %s26, 0
      %p163 = por %p161, %p162
      %s164 = ssub.s32 %s20, %s27
      %p165 = scmp.eq.s32.totalorder %s164, 0
      %s167 = sadd.s32 %s166, 1
      %s168 = scalar_select %p165, %s166, %s167
      %p171 = pneg %p165
      %p172 = scmp.eq.s32.totalorder %s20, 1
      %p173 = por %p171, %p172
      %p174 = scmp.ne.s32.totalorder %s166, %s169
      %p175 = scmp.eq.s32.totalorder %s20, 0
      %p176 = por %p174, %p175
      %p177 = scmp.ne.s32.totalorder %s166, %s169
      %p178 = scmp.eq.s32.totalorder %s25, 1
      %p179 = por %p177, %p178
      %p180 = scmp.ne.s32.totalorder %s169, %s170
      %p181 = scmp.eq.s32.totalorder %s25, 0
      %p182 = por %p180, %p181
      %p183 = scmp.ne.s32.totalorder %s169, %s170
      %p184 = scmp.eq.s32.totalorder %s26, 1
      %p185 = por %p183, %p184
      %p187 = scmp.ne.s32.totalorder %s170, %s186
      %p188 = scmp.eq.s32.totalorder %s26, 0
      %p189 = por %p187, %p188
      %s190 = ssub.s32 %s20, %s27
      %p191 = scmp.eq.s32.totalorder %s190, 0
      %s193 = sadd.s32 %s192, 1
      %s194 = scalar_select %p191, %s192, %s193
      %p197 = pneg %p191
      %p198 = scmp.eq.s32.totalorder %s20, 1
      %p199 = por %p197, %p198
      %p200 = scmp.ne.s32.totalorder %s192, %s195
      %p201 = scmp.eq.s32.totalorder %s20, 0
      %p202 = por %p200, %p201
      %p203 = scmp.ne.s32.totalorder %s192, %s195
      %p204 = scmp.eq.s32.totalorder %s25, 1
      %p205 = por %p203, %p204
      %p206 = scmp.ne.s32.totalorder %s195, %s196
      %p207 = scmp.eq.s32.totalorder %s25, 0
      %p208 = por %p206, %p207
      %p209 = scmp.ne.s32.totalorder %s195, %s196
      %p210 = scmp.eq.s32.totalorder %s26, 1
      %p211 = por %p209, %p210
      %p213 = scmp.ne.s32.totalorder %s196, %s212
      %p214 = scmp.eq.s32.totalorder %s26, 0
      %p215 = por %p213, %p214
      %s216 = ssub.s32 %s20, %s27
      %p217 = scmp.eq.s32.totalorder %s216, 0
      %s219 = sadd.s32 %s218, 1
      %s220 = scalar_select %p217, %s218, %s219
      %p223 = pneg %p217
      %p224 = scmp.eq.s32.totalorder %s20, 1
      %p225 = por %p223, %p224
      %p226 = scmp.ne.s32.totalorder %s218, %s221
      %p227 = scmp.eq.s32.totalorder %s20, 0
      %p228 = por %p226, %p227
      %p229 = scmp.ne.s32.totalorder %s218, %s221
      %p230 = scmp.eq.s32.totalorder %s25, 1
      %p231 = por %p229, %p230
      %p232 = scmp.ne.s32.totalorder %s221, %s222
      %p233 = scmp.eq.s32.totalorder %s25, 0
      %p234 = por %p232, %p233
      %p235 = scmp.ne.s32.totalorder %s221, %s222
      %p236 = scmp.eq.s32.totalorder %s26, 1
      %p237 = por %p235, %p236
      %p239 = scmp.ne.s32.totalorder %s222, %s238
      %p240 = scmp.eq.s32.totalorder %s26, 0
      %p241 = por %p239, %p240
      %p242 = scmp.le.s32.totalorder 1, %s20
      %p243 = scmp.lt.s32.totalorder %s20, 3
      %p244 = pnand %p242, %p243
      %p245 = pneg %p244
      // Predicated region
      $region9: #{siamese_forward.1} parent=5 // pred_check
        _
      $region10: #{siamese_forward.1} parent=5 // pred_check_branch
        %247 = sbr.rel (%p244) target = $region12
      $region11: #{siamese_forward.1} parent=5 // pred_region
        %s248 = ssub.s32 %s20, 1
        // Predicated region
        $region13: #{siamese_forward.1} parent=11 // pred_check
          %p249 = pneg %p93
        $region14: #{siamese_forward.1} parent=11 // pred_check_branch
          %251 = sbr.rel (%p249) target = $region16
        $region15: #{siamese_forward.1} parent=11 // pred_region
          %s253 = ssub.s32 256, 256
          %254 = vsyncadd [#allocation4], %s253
          %s255 = sshll.u32 %s2, 4
          %s256 = int_to_ptr.vmem [resolvable:$true] %s255
          %261 = dma.vmem_to_smem %s256, 256, [#allocation2], [#allocation4], 128, 128, 8
        $region16: #{siamese_forward.1} parent=11 // pred_fallthru
          _
        // Predicated region
        $region17: #{siamese_forward.1} parent=11 // pred_check
          %p262 = pneg %p114
        $region18: #{siamese_forward.1} parent=11 // pred_check_branch
          %264 = sbr.rel (%p262) target = $region20
        $region19: #{siamese_forward.1} parent=11 // pred_region
          %s266 = ssub.s32 16, 16
          %267 = vsyncadd [#allocation6], %s266
          %s269 = sshll.u32 %s3, 4
          %s270 = int_to_ptr.vmem [resolvable:$true] %s269
          %272 = dma.vmem_to_smem %s270, 16, [#allocation5], [#allocation6]
        $region20: #{siamese_forward.1} parent=11 // pred_fallthru
          _
        // Predicated region
        $region21: #{siamese_forward.1} parent=11 // pred_check
          %p273 = pneg %p135
        $region22: #{siamese_forward.1} parent=11 // pred_check_branch
          %275 = sbr.rel (%p273) target = $region24
        $region23: #{siamese_forward.1} parent=11 // pred_region
          _
        $region24: #{siamese_forward.1} parent=11 // pred_fallthru
          _
        // Predicated region
        $region25: #{siamese_forward.1} parent=11 // pred_check
          %p276 = pneg %p156
        $region26: #{siamese_forward.1} parent=11 // pred_check_branch
          %278 = sbr.rel (%p276) target = $region28
        $region27: #{siamese_forward.1} parent=11 // pred_region
          _
        $region28: #{siamese_forward.1} parent=11 // pred_fallthru
          _
      $region12: #{siamese_forward.1} parent=5 // pred_fallthru
        _
      %p279 = scmp.lt.s32.totalorder %s20, 2
      // Predicated region
      $region29: #{siamese_forward.1} parent=5 // pred_check
        %p280 = pneg %p279
      $region30: #{siamese_forward.1} parent=5 // pred_check_branch
        %282 = sbr.rel (%p280) target = $region32
      $region31: #{siamese_forward.1} parent=5 // pred_region
        // Predicated region
        $region33: #{siamese_forward.1} parent=31 // pred_check
          %p283 = pneg %p40
        $region34: #{siamese_forward.1} parent=31 // pred_check_branch
          %285 = sbr.rel (%p283) target = $region36
        $region35: #{siamese_forward.1} parent=31 // pred_region
          %p286 = scmp.lt.s32.totalorder %s20, 1
          %s287 = scalar_select %p286, %s20, 1
          %s288 = smul.addr %s287, 18
          %s289 = scalar_lea.vmem %s0, %s288
        $region36: #{siamese_forward.1} parent=31 // pred_fallthru
          _
        // Predicated region
        $region37: #{siamese_forward.1} parent=31 // pred_check
          %p290 = pneg %p66
        $region38: #{siamese_forward.1} parent=31 // pred_check_branch
          %292 = sbr.rel (%p290) target = $region40
        $region39: #{siamese_forward.1} parent=31 // pred_region
          %p293 = scmp.lt.s32.totalorder %s20, 1
          %s294 = scalar_select %p293, %s20, 1
          %s295 = smul.addr %s294, 18
          %s296 = smul.addr %s295, 4
          %s297 = scalar_lea.vmem %s1, %s296
        $region40: #{siamese_forward.1} parent=31 // pred_fallthru
          _
      $region32: #{siamese_forward.1} parent=5 // pred_fallthru
        _
      %p298 = scmp.le.s32.totalorder 1, %s20
      %p299 = scmp.lt.s32.totalorder %s20, 3
      %p300 = pnand %p298, %p299
      %p301 = pneg %p300
      // Predicated region
      $region41: #{siamese_forward.1} parent=5 // pred_check
        _
      $region42: #{siamese_forward.1} parent=5 // pred_check_branch
        %303 = sbr.rel (%p300) target = $region44
      $region43: #{siamese_forward.1} parent=5 // pred_region
        %s304 = ssub.s32 %s20, 1
        // Predicated region
        $region45: #{siamese_forward.1} parent=43 // pred_check
          %p305 = pneg %p93
        $region46: #{siamese_forward.1} parent=43 // pred_check_branch
          %307 = sbr.rel (%p305) target = $region48
        $region47: #{siamese_forward.1} parent=43 // pred_region
          %308 = dma.done [#allocation4], 256
        $region48: #{siamese_forward.1} parent=43 // pred_fallthru
          _
        // Predicated region
        $region49: #{siamese_forward.1} parent=43 // pred_check
          %p309 = pneg %p114
        $region50: #{siamese_forward.1} parent=43 // pred_check_branch
          %311 = sbr.rel (%p309) target = $region52
        $region51: #{siamese_forward.1} parent=43 // pred_region
          %312 = dma.done [#allocation6], 16
        $region52: #{siamese_forward.1} parent=43 // pred_fallthru
          _
        %313 = sfence
        %p314 = scmp.lt.s32.totalorder %s25, 1
        %s315 = scalar_select %p314, %s25, 1
        %s316 = smul.addr %s315, 18
        %s317 = scalar_lea.vmem %s0, %s316
        %p318 = pneg %p46
        %p319 = pneg %p43
        %p320 = scmp.lt.s32.totalorder %s25, 1
        %s321 = scalar_select %p320, %s25, 1
        %s322 = smul.addr %s321, 18
        %s323 = smul.addr %s322, 4
        %s324 = scalar_lea.vmem %s1, %s323
        %p325 = pneg %p72
        %p326 = pneg %p69
        %p327 = pneg %p93
        %p328 = pneg %p90
        %p329 = pneg %p114
        %p330 = pneg %p111
        %p331 = pneg %p135
        %p332 = pneg %p132
        %p333 = pneg %p156
        %p334 = pneg %p153
        %p335 = pneg %p182
        %p336 = pneg %p179
        %s337 = sand.u32 %s169, 1
        %s338 = scalar_lea.sflag [#allocation3], %s337
        %s339 = sand.u32 %s169, 1
        %s340 = scalar_lea.vmem [#allocation7], %s339
        %p341 = pneg %p208
        %p342 = pneg %p205
        %p343 = scmp.lt.s32.totalorder %s25, 1
        %s344 = scalar_select %p343, %s25, 1
        %s345 = smul.addr %s344, 4
        %s346 = scalar_lea.vmem %s7, %s345
        %p347 = pneg %p234
        %p348 = pneg %p231
        %p349 = scmp.lt.s32.totalorder %s25, 1
        %s350 = scalar_select %p349, %s25, 1
        %s351 = smul.addr %s350, 4
        %s352 = scalar_lea.vmem %s8, %s351
        %p353 = scmp.lt.s32.totalorder %s25, 1
        %s354 = scalar_select %p353, %s25, 1
        %s355 = smul.addr %s354, 18
        %s356 = scalar_lea.vmem %s0, %s355
        %p357 = scmp.lt.s32.totalorder %s25, 1
        %s358 = scalar_select %p357, %s25, 1
        %s359 = smul.addr %s358, 18
        %s360 = smul.addr %s359, 4
        %s361 = scalar_lea.vmem %s1, %s360
        %p362 = scmp.lt.s32.totalorder %s25, 1
        %s363 = scalar_select %p362, %s25, 1
        %s364 = smul.addr %s363, 4
        %s365 = scalar_lea.vmem %s7, %s364
        %p366 = scmp.lt.s32.totalorder %s25, 1
        %s367 = scalar_select %p366, %s25, 1
        %s368 = smul.addr %s367, 4
        %s369 = scalar_lea.vmem %s8, %s368
        %v370 = vld [vmem:[%s356] sm:$0x3]
        %v371 = vld [vmem:[%s356 + $0x2] sm:$0x3]
        %v372 = vld [vmem:[%s356 + $0x4] sm:$0x3]
        %v373 = vld [vmem:[%s356 + $0x6] sm:$0x3]
        %v374 = vld [vmem:[%s356 + $0x8] sm:$0x3]
        %v375 = vld [vmem:[%s356 + $0xa] sm:$0x3]
        %v376 = vld [vmem:[%s356 + $0xc] sm:$0x3]
        %v377 = vld [vmem:[%s356 + $0xe] sm:$0x3]
        %v378 = vld [vmem:[%s356 + $0x10] sm:$0x3]
        %s379 = sld [smem:[#allocation2]]
        %v380 = vstv %s379
        %v381 = vmul.f32 %v370, %v380
        %s382 = sld [smem:[#allocation2 + $0x80]]
        %v383 = vstv %s382
        %v384 = vmul.f32 %v371, %v383
        %v385 = vadd.f32 %v381, %v384
        %s386 = sld [smem:[#allocation2 + $0x100]]
        %v387 = vstv %s386
        %v388 = vmul.f32 %v372, %v387
        %v389 = vadd.f32 %v385, %v388
        %s390 = sld [smem:[#allocation2 + $0x180]]
        %v391 = vstv %s390
        %v392 = vmul.f32 %v373, %v391
        %v393 = vadd.f32 %v389, %v392
        %s394 = sld [smem:[#allocation2 + $0x200]]
        %v395 = vstv %s394
        %v396 = vmul.f32 %v374, %v395
        %v397 = vadd.f32 %v393, %v396
        %s398 = sld [smem:[#allocation2 + $0x280]]
        %v399 = vstv %s398
        %v400 = vmul.f32 %v375, %v399
        %v401 = vadd.f32 %v397, %v400
        %s402 = sld [smem:[#allocation2 + $0x300]]
        %v403 = vstv %s402
        %v404 = vmul.f32 %v376, %v403
        %v405 = vadd.f32 %v401, %v404
        %s406 = sld [smem:[#allocation2 + $0x380]]
        %v407 = vstv %s406
        %v408 = vmul.f32 %v377, %v407
        %v409 = vadd.f32 %v405, %v408
        %s410 = sld [smem:[#allocation2 + $0x400]]
        %v411 = vstv %s410
        %v412 = vmul.f32 %v378, %v411
        %v413 = vadd.f32 %v409, %v412
        %s414 = sld [smem:[#allocation5]]
        %v415 = vstv %s414
        %v416 = vadd.f32 %v413, %v415
        %v417 = vmax.f32 %v416, 0.0
        %v418 = vld [vmem:[%s4] sm:$0xff]
        %v419 = vld [vmem:[%s4 + $0x8] sm:$0xff]
        %v420 = vld [vmem:[%s4 + $0x10] sm:$0xff]
        %v421 = vld [vmem:[%s4 + $0x18] sm:$0xff]
        %v422 = vld [vmem:[%s4 + $0x20] sm:$0xff]
        %v423 = vld [vmem:[%s4 + $0x28] sm:$0xff]
        %v424 = vld [vmem:[%s4 + $0x30] sm:$0xff]
        %v425 = vld [vmem:[%s4 + $0x38] sm:$0xff]
        %v426 = vld [vmem:[%s4 + $0x40] sm:$0xff]
        %v427 = vld [vmem:[%s4 + $0x48] sm:$0xff]
        %v428 = vld [vmem:[%s4 + $0x50] sm:$0xff]
        %v429 = vld [vmem:[%s4 + $0x58] sm:$0xff]
        %v430 = vld [vmem:[%s4 + $0x60] sm:$0xff]
        %v431 = vld [vmem:[%s4 + $0x68] sm:$0xff]
        %v432 = vld [vmem:[%s4 + $0x70] sm:$0xff]
        %v433 = vld [vmem:[%s4 + $0x78] sm:$0xff]
        %v434 = vld [vmem:[%s4 + $0x80] sm:$0xff]
        %v435 = vld [vmem:[%s4 + $0x88] sm:$0xff]
        %v436 = vld [vmem:[%s4 + $0x90] sm:$0xff]
        %v437 = vld [vmem:[%s4 + $0x98] sm:$0xff]
        %v438 = vld [vmem:[%s4 + $0xa0] sm:$0xff]
        %v439 = vld [vmem:[%s4 + $0xa8] sm:$0xff]
        %v440 = vld [vmem:[%s4 + $0xb0] sm:$0xff]
        %v441 = vld [vmem:[%s4 + $0xb8] sm:$0xff]
        %v442 = vld [vmem:[%s4 + $0xc0] sm:$0xf]
        %s443 = sld [smem:[#allocation2 + $0x1]]
        %v444 = vstv %s443
        %v445 = vmul.f32 %v370, %v444
        %s446 = sld [smem:[#allocation2 + $0x81]]
        %v447 = vstv %s446
        %v448 = vmul.f32 %v371, %v447
        %v449 = vadd.f32 %v445, %v448
        %s450 = sld [smem:[#allocation2 + $0x101]]
        %v451 = vstv %s450
        %v452 = vmul.f32 %v372, %v451
        %v453 = vadd.f32 %v449, %v452
        %s454 = sld [smem:[#allocation2 + $0x181]]
        %v455 = vstv %s454
        %v456 = vmul.f32 %v373, %v455
        %v457 = vadd.f32 %v453, %v456
        %s458 = sld [smem:[#allocation2 + $0x201]]
        %v459 = vstv %s458
        %v460 = vmul.f32 %v374, %v459
        %v461 = vadd.f32 %v457, %v460
        %s462 = sld [smem:[#allocation2 + $0x281]]
        %v463 = vstv %s462
        %v464 = vmul.f32 %v375, %v463
        %v465 = vadd.f32 %v461, %v464
        %s466 = sld [smem:[#allocation2 + $0x301]]
        %v467 = vstv %s466
        %v468 = vmul.f32 %v376, %v467
        %v469 = vadd.f32 %v465, %v468
        %s470 = sld [smem:[#allocation2 + $0x381]]
        %v471 = vstv %s470
        %v472 = vmul.f32 %v377, %v471
        %v473 = vadd.f32 %v469, %v472
        %s474 = sld [smem:[#allocation2 + $0x401]]
        %v475 = vstv %s474
        %v476 = vmul.f32 %v378, %v475
        %v477 = vadd.f32 %v473, %v476
        %s478 = sld [smem:[#allocation5 + $0x1]]
        %v479 = vstv %s478
        %v480 = vadd.f32 %v477, %v479
        %v481 = vmax.f32 %v480, 0.0
        %s482 = scalar_lea.vmem %s4, 200
        %v483 = vld [vmem:[%s482] sm:$0xff]
        %v484 = vld [vmem:[%s482 + $0x8] sm:$0xff]
        %v485 = vld [vmem:[%s482 + $0x10] sm:$0xff]
        %v486 = vld [vmem:[%s482 + $0x18] sm:$0xff]
        %v487 = vld [vmem:[%s482 + $0x20] sm:$0xff]
        %v488 = vld [vmem:[%s482 + $0x28] sm:$0xff]
        %v489 = vld [vmem:[%s482 + $0x30] sm:$0xff]
        %v490 = vld [vmem:[%s482 + $0x38] sm:$0xff]
        %v491 = vld [vmem:[%s482 + $0x40] sm:$0xff]
        %v492 = vld [vmem:[%s482 + $0x48] sm:$0xff]
        %v493 = vld [vmem:[%s482 + $0x50] sm:$0xff]
        %v494 = vld [vmem:[%s482 + $0x58] sm:$0xff]
        %v495 = vld [vmem:[%s482 + $0x60] sm:$0xff]
        %v496 = vld [vmem:[%s482 + $0x68] sm:$0xff]
        %v497 = vld [vmem:[%s482 + $0x70] sm:$0xff]
        %v498 = vld [vmem:[%s482 + $0x78] sm:$0xff]
        %v499 = vld [vmem:[%s482 + $0x80] sm:$0xff]
        %v500 = vld [vmem:[%s482 + $0x88] sm:$0xff]
        %v501 = vld [vmem:[%s482 + $0x90] sm:$0xff]
        %v502 = vld [vmem:[%s482 + $0x98] sm:$0xff]
        %v503 = vld [vmem:[%s482 + $0xa0] sm:$0xff]
        %v504 = vld [vmem:[%s482 + $0xa8] sm:$0xff]
        %v505 = vld [vmem:[%s482 + $0xb0] sm:$0xff]
        %v506 = vld [vmem:[%s482 + $0xb8] sm:$0xff]
        %v507 = vld [vmem:[%s482 + $0xc0] sm:$0xf]
        %v509 = vlaneseq
        %v510 = vshrl.u32 %v509, 7
        %v511 = vsub.s32 0, %v510
        %v512 = vrot.slane %v481, %v511
        %v513 = vlaneseq
        %v514 = vshrl.u32 %v513, 7
        %v515 = vsub.s32 1, %v514
        %v516 = vrot.slane %v481, %v515
        %vm518 = vcmask 556032
        %v519 = vsel %vm518, %v516, 0
        %vm521 = vcmask 1043456
        %v523 = vsel %vm521, %v507, 0
        %525 = vmatprep.subr.mxu0 0.0
        %526 = vmatpush1.msra.mxu0 %v498
        %527 = vmatprep.subr.mxu0 0.0
        %528 = vmatpush1.msra.mxu0 %v497
        %529 = vmatprep.subr.mxu0 0.0
        %530 = vmatpush1.msra.mxu0 %v496
        %531 = vmatprep.subr.mxu0 0.0
        %532 = vmatpush1.msra.mxu0 %v495
        %533 = vmatprep.subr.mxu0 0.0
        %534 = vmatpush1.msra.mxu0 %v494
        %535 = vmatprep.subr.mxu0 0.0
        %536 = vmatpush1.msra.mxu0 %v493
        %537 = vmatprep.subr.mxu0 0.0
        %538 = vmatpush1.msra.mxu0 %v492
        %539 = vmatprep.subr.mxu0 0.0
        %540 = vmatpush1.msra.mxu0 %v491
        %541 = vmatprep.subr.mxu0 0.0
        %542 = vmatpush1.msra.mxu0 %v490
        %543 = vmatprep.subr.mxu0 0.0
        %544 = vmatpush1.msra.mxu0 %v489
        %545 = vmatprep.subr.mxu0 0.0
        %546 = vmatpush1.msra.mxu0 %v488
        %547 = vmatprep.subr.mxu0 0.0
        %548 = vmatpush1.msra.mxu0 %v487
        %549 = vmatprep.subr.mxu0 0.0
        %550 = vmatpush1.msra.mxu0 %v486
        %551 = vmatprep.subr.mxu0 0.0
        %552 = vmatpush1.msra.mxu0 %v485
        %553 = vmatprep.subr.mxu0 0.0
        %554 = vmatpush1.msra.mxu0 %v484
        %555 = vmatprep.subr.mxu0 0.0
        %556 = vmatpush1.msra.mxu0 %v483
        %557 = vmatprep.subr.mxu0 0.0
        %558 = vmatpush2.msra.mxu0 0.0
        %559 = vmatprep.subr.mxu0 0.0
        %560 = vmatpush2.msra.mxu0 0.0
        %561 = vmatprep.subr.mxu0 0.0
        %562 = vmatpush2.msra.mxu0 0.0
        %563 = vmatprep.subr.mxu0 0.0
        %564 = vmatpush2.msra.mxu0 0.0
        %565 = vmatprep.subr.mxu0 0.0
        %566 = vmatpush2.msra.mxu0 0.0
        %567 = vmatprep.subr.mxu0 0.0
        %568 = vmatpush2.msra.mxu0 0.0
        %569 = vmatprep.subr.mxu0 0.0
        %570 = vmatpush2.msra.mxu0 0.0
        %571 = vmatprep.subr.mxu0 0.0
        %572 = vmatpush2.msra.mxu0 %v523
        %573 = vmatprep.subr.mxu0 0.0
        %574 = vmatpush2.msra.mxu0 %v506
        %575 = vmatprep.subr.mxu0 0.0
        %576 = vmatpush2.msra.mxu0 %v505
        %577 = vmatprep.subr.mxu0 0.0
        %578 = vmatpush2.msra.mxu0 %v504
        %579 = vmatprep.subr.mxu0 0.0
        %580 = vmatpush2.msra.mxu0 %v503
        %581 = vmatprep.subr.mxu0 0.0
        %582 = vmatpush2.msra.mxu0 %v502
        %583 = vmatprep.subr.mxu0 0.0
        %584 = vmatpush2.msra.mxu0 %v501
        %585 = vmatprep.subr.mxu0 0.0
        %586 = vmatpush2.msra.mxu0 %v500
        %587 = vmatprep.subr.mxu0 0.0
        %588 = vmatpush2.msra.mxu0 %v499
        %589 = vmatprep.mubr.f32.mxu0 %v519
        %590 = vmatmul.mubr.f32.gmra.mxu0 %v512
        %v591 = vpop.f32.mrf.mxu0
        %v592 = vadd.f32 0.0, %v591
        %v593 = vpop.f32.mrf.mxu0
        %594 = vdwg.mxu0
        %v596 = vlaneseq
        %v597 = vshrl.u32 %v596, 7
        %v598 = vsub.s32 0, %v597
        %v599 = vrot.slane %v417, %v598
        %v600 = vlaneseq
        %v601 = vshrl.u32 %v600, 7
        %v602 = vsub.s32 1, %v601
        %v603 = vrot.slane %v417, %v602
        %v605 = vsel %vm518, %v603, 0
        %v608 = vsel %vm521, %v442, 0
        %610 = vmatprep.subr.mxu0 0.0
        %611 = vmatpush1.msra.mxu0 %v433
        %612 = vmatprep.subr.mxu0 0.0
        %613 = vmatpush1.msra.mxu0 %v432
        %614 = vmatprep.subr.mxu0 0.0
        %615 = vmatpush1.msra.mxu0 %v431
        %616 = vmatprep.subr.mxu0 0.0
        %617 = vmatpush1.msra.mxu0 %v430
        %618 = vmatprep.subr.mxu0 0.0
        %619 = vmatpush1.msra.mxu0 %v429
        %620 = vmatprep.subr.mxu0 0.0
        %621 = vmatpush1.msra.mxu0 %v428
        %622 = vmatprep.subr.mxu0 0.0
        %623 = vmatpush1.msra.mxu0 %v427
        %624 = vmatprep.subr.mxu0 0.0
        %625 = vmatpush1.msra.mxu0 %v426
        %626 = vmatprep.subr.mxu0 0.0
        %627 = vmatpush1.msra.mxu0 %v425
        %628 = vmatprep.subr.mxu0 0.0
        %629 = vmatpush1.msra.mxu0 %v424
        %630 = vmatprep.subr.mxu0 0.0
        %631 = vmatpush1.msra.mxu0 %v423
        %632 = vmatprep.subr.mxu0 0.0
        %633 = vmatpush1.msra.mxu0 %v422
        %634 = vmatprep.subr.mxu0 0.0
        %635 = vmatpush1.msra.mxu0 %v421
        %636 = vmatprep.subr.mxu0 0.0
        %637 = vmatpush1.msra.mxu0 %v420
        %638 = vmatprep.subr.mxu0 0.0
        %639 = vmatpush1.msra.mxu0 %v419
        %640 = vmatprep.subr.mxu0 0.0
        %641 = vmatpush1.msra.mxu0 %v418
        %642 = vmatprep.subr.mxu0 0.0
        %643 = vmatpush2.msra.mxu0 0.0
        %644 = vmatprep.subr.mxu0 0.0
        %645 = vmatpush2.msra.mxu0 0.0
        %646 = vmatprep.subr.mxu0 0.0
        %647 = vmatpush2.msra.mxu0 0.0
        %648 = vmatprep.subr.mxu0 0.0
        %649 = vmatpush2.msra.mxu0 0.0
        %650 = vmatprep.subr.mxu0 0.0
        %651 = vmatpush2.msra.mxu0 0.0
        %652 = vmatprep.subr.mxu0 0.0
        %653 = vmatpush2.msra.mxu0 0.0
        %654 = vmatprep.subr.mxu0 0.0
        %655 = vmatpush2.msra.mxu0 0.0
        %656 = vmatprep.subr.mxu0 0.0
        %657 = vmatpush2.msra.mxu0 %v608
        %658 = vmatprep.subr.mxu0 0.0
        %659 = vmatpush2.msra.mxu0 %v441
        %660 = vmatprep.subr.mxu0 0.0
        %661 = vmatpush2.msra.mxu0 %v440
        %662 = vmatprep.subr.mxu0 0.0
        %663 = vmatpush2.msra.mxu0 %v439
        %664 = vmatprep.subr.mxu0 0.0
        %665 = vmatpush2.msra.mxu0 %v438
        %666 = vmatprep.subr.mxu0 0.0
        %667 = vmatpush2.msra.mxu0 %v437
        %668 = vmatprep.subr.mxu0 0.0
        %669 = vmatpush2.msra.mxu0 %v436
        %670 = vmatprep.subr.mxu0 0.0
        %671 = vmatpush2.msra.mxu0 %v435
        %672 = vmatprep.subr.mxu0 0.0
        %673 = vmatpush2.msra.mxu0 %v434
        %674 = vmatprep.mubr.f32.mxu0 %v605
        %675 = vmatmul.mubr.f32.gmra.mxu0 %v599
        %v676 = vpop.f32.mrf.mxu0
        %v677 = vadd.f32 %v592, %v676
        %v678 = vpop.f32.mrf.mxu0
        %679 = vdwg.mxu0
        %s680 = sld [smem:[#allocation2 + $0x2]]
        %v681 = vstv %s680
        %v682 = vmul.f32 %v370, %v681
        %s683 = sld [smem:[#allocation2 + $0x82]]
        %v684 = vstv %s683
        %v685 = vmul.f32 %v371, %v684
        %v686 = vadd.f32 %v682, %v685
        %s687 = sld [smem:[#allocation2 + $0x102]]
        %v688 = vstv %s687
        %v689 = vmul.f32 %v372, %v688
        %v690 = vadd.f32 %v686, %v689
        %s691 = sld [smem:[#allocation2 + $0x182]]
        %v692 = vstv %s691
        %v693 = vmul.f32 %v373, %v692
        %v694 = vadd.f32 %v690, %v693
        %s695 = sld [smem:[#allocation2 + $0x202]]
        %v696 = vstv %s695
        %v697 = vmul.f32 %v374, %v696
        %v698 = vadd.f32 %v694, %v697
        %s699 = sld [smem:[#allocation2 + $0x282]]
        %v700 = vstv %s699
        %v701 = vmul.f32 %v375, %v700
        %v702 = vadd.f32 %v698, %v701
        %s703 = sld [smem:[#allocation2 + $0x302]]
        %v704 = vstv %s703
        %v705 = vmul.f32 %v376, %v704
        %v706 = vadd.f32 %v702, %v705
        %s707 = sld [smem:[#allocation2 + $0x382]]
        %v708 = vstv %s707
        %v709 = vmul.f32 %v377, %v708
        %v710 = vadd.f32 %v706, %v709
        %s711 = sld [smem:[#allocation2 + $0x402]]
        %v712 = vstv %s711
        %v713 = vmul.f32 %v378, %v712
        %v714 = vadd.f32 %v710, %v713
        %s715 = sld [smem:[#allocation5 + $0x2]]
        %v716 = vstv %s715
        %v717 = vadd.f32 %v714, %v716
        %v718 = vmax.f32 %v717, 0.0
        %s719 = scalar_lea.vmem %s4, 400
        %v720 = vld [vmem:[%s719] sm:$0xff]
        %v721 = vld [vmem:[%s719 + $0x8] sm:$0xff]
        %v722 = vld [vmem:[%s719 + $0x10] sm:$0xff]
        %v723 = vld [vmem:[%s719 + $0x18] sm:$0xff]
        %v724 = vld [vmem:[%s719 + $0x20] sm:$0xff]
        %v725 = vld [vmem:[%s719 + $0x28] sm:$0xff]
        %v726 = vld [vmem:[%s719 + $0x30] sm:$0xff]
        %v727 = vld [vmem:[%s719 + $0x38] sm:$0xff]
        %v728 = vld [vmem:[%s719 + $0x40] sm:$0xff]
        %v729 = vld [vmem:[%s719 + $0x48] sm:$0xff]
        %v730 = vld [vmem:[%s719 + $0x50] sm:$0xff]
        %v731 = vld [vmem:[%s719 + $0x58] sm:$0xff]
        %v732 = vld [vmem:[%s719 + $0x60] sm:$0xff]
        %v733 = vld [vmem:[%s719 + $0x68] sm:$0xff]
        %v734 = vld [vmem:[%s719 + $0x70] sm:$0xff]
        %v735 = vld [vmem:[%s719 + $0x78] sm:$0xff]
        %v736 = vld [vmem:[%s719 + $0x80] sm:$0xff]
        %v737 = vld [vmem:[%s719 + $0x88] sm:$0xff]
        %v738 = vld [vmem:[%s719 + $0x90] sm:$0xff]
        %v739 = vld [vmem:[%s719 + $0x98] sm:$0xff]
        %v740 = vld [vmem:[%s719 + $0xa0] sm:$0xff]
        %v741 = vld [vmem:[%s719 + $0xa8] sm:$0xff]
        %v742 = vld [vmem:[%s719 + $0xb0] sm:$0xff]
        %v743 = vld [vmem:[%s719 + $0xb8] sm:$0xff]
        %v744 = vld [vmem:[%s719 + $0xc0] sm:$0xf]
        %v746 = vlaneseq
        %v747 = vshrl.u32 %v746, 7
        %v748 = vsub.s32 0, %v747
        %v749 = vrot.slane %v718, %v748
        %v750 = vlaneseq
        %v751 = vshrl.u32 %v750, 7
        %v752 = vsub.s32 1, %v751
        %v753 = vrot.slane %v718, %v752
        %v755 = vsel %vm518, %v753, 0
        %v758 = vsel %vm521, %v744, 0
        %760 = vmatprep.subr.mxu0 0.0
        %761 = vmatpush1.msra.mxu0 %v735
        %762 = vmatprep.subr.mxu0 0.0
        %763 = vmatpush1.msra.mxu0 %v734
        %764 = vmatprep.subr.mxu0 0.0
        %765 = vmatpush1.msra.mxu0 %v733
        %766 = vmatprep.subr.mxu0 0.0
        %767 = vmatpush1.msra.mxu0 %v732
        %768 = vmatprep.subr.mxu0 0.0
        %769 = vmatpush1.msra.mxu0 %v731
        %770 = vmatprep.subr.mxu0 0.0
        %771 = vmatpush1.msra.mxu0 %v730
        %772 = vmatprep.subr.mxu0 0.0
        %773 = vmatpush1.msra.mxu0 %v729
        %774 = vmatprep.subr.mxu0 0.0
        %775 = vmatpush1.msra.mxu0 %v728
        %776 = vmatprep.subr.mxu0 0.0
        %777 = vmatpush1.msra.mxu0 %v727
        %778 = vmatprep.subr.mxu0 0.0
        %779 = vmatpush1.msra.mxu0 %v726
        %780 = vmatprep.subr.mxu0 0.0
        %781 = vmatpush1.msra.mxu0 %v725
        %782 = vmatprep.subr.mxu0 0.0
        %783 = vmatpush1.msra.mxu0 %v724
        %784 = vmatprep.subr.mxu0 0.0
        %785 = vmatpush1.msra.mxu0 %v723
        %786 = vmatprep.subr.mxu0 0.0
        %787 = vmatpush1.msra.mxu0 %v722
        %788 = vmatprep.subr.mxu0 0.0
        %789 = vmatpush1.msra.mxu0 %v721
        %790 = vmatprep.subr.mxu0 0.0
        %791 = vmatpush1.msra.mxu0 %v720
        %792 = vmatprep.subr.mxu0 0.0
        %793 = vmatpush2.msra.mxu0 0.0
        %794 = vmatprep.subr.mxu0 0.0
        %795 = vmatpush2.msra.mxu0 0.0
        %796 = vmatprep.subr.mxu0 0.0
        %797 = vmatpush2.msra.mxu0 0.0
        %798 = vmatprep.subr.mxu0 0.0
        %799 = vmatpush2.msra.mxu0 0.0
        %800 = vmatprep.subr.mxu0 0.0
        %801 = vmatpush2.msra.mxu0 0.0
        %802 = vmatprep.subr.mxu0 0.0
        %803 = vmatpush2.msra.mxu0 0.0
        %804 = vmatprep.subr.mxu0 0.0
        %805 = vmatpush2.msra.mxu0 0.0
        %806 = vmatprep.subr.mxu0 0.0
        %807 = vmatpush2.msra.mxu0 %v758
        %808 = vmatprep.subr.mxu0 0.0
        %809 = vmatpush2.msra.mxu0 %v743
        %810 = vmatprep.subr.mxu0 0.0
        %811 = vmatpush2.msra.mxu0 %v742
        %812 = vmatprep.subr.mxu0 0.0
        %813 = vmatpush2.msra.mxu0 %v741
        %814 = vmatprep.subr.mxu0 0.0
        %815 = vmatpush2.msra.mxu0 %v740
        %816 = vmatprep.subr.mxu0 0.0
        %817 = vmatpush2.msra.mxu0 %v739
        %818 = vmatprep.subr.mxu0 0.0
        %819 = vmatpush2.msra.mxu0 %v738
        %820 = vmatprep.subr.mxu0 0.0
        %821 = vmatpush2.msra.mxu0 %v737
        %822 = vmatprep.subr.mxu0 0.0
        %823 = vmatpush2.msra.mxu0 %v736
        %824 = vmatprep.mubr.f32.mxu0 %v755
        %825 = vmatmul.mubr.f32.gmra.mxu0 %v749
        %v826 = vpop.f32.mrf.mxu0
        %v827 = vadd.f32 0.0, %v826
        %v828 = vpop.f32.mrf.mxu0
        %829 = vdwg.mxu0
        %v830 = vadd.f32 %v677, %v827
        %s831 = sld [smem:[#allocation2 + $0x3]]
        %v832 = vstv %s831
        %v833 = vmul.f32 %v370, %v832
        %s834 = sld [smem:[#allocation2 + $0x83]]
        %v835 = vstv %s834
        %v836 = vmul.f32 %v371, %v835
        %v837 = vadd.f32 %v833, %v836
        %s838 = sld [smem:[#allocation2 + $0x103]]
        %v839 = vstv %s838
        %v840 = vmul.f32 %v372, %v839
        %v841 = vadd.f32 %v837, %v840
        %s842 = sld [smem:[#allocation2 + $0x183]]
        %v843 = vstv %s842
        %v844 = vmul.f32 %v373, %v843
        %v845 = vadd.f32 %v841, %v844
        %s846 = sld [smem:[#allocation2 + $0x203]]
        %v847 = vstv %s846
        %v848 = vmul.f32 %v374, %v847
        %v849 = vadd.f32 %v845, %v848
        %s850 = sld [smem:[#allocation2 + $0x283]]
        %v851 = vstv %s850
        %v852 = vmul.f32 %v375, %v851
        %v853 = vadd.f32 %v849, %v852
        %s854 = sld [smem:[#allocation2 + $0x303]]
        %v855 = vstv %s854
        %v856 = vmul.f32 %v376, %v855
        %v857 = vadd.f32 %v853, %v856
        %s858 = sld [smem:[#allocation2 + $0x383]]
        %v859 = vstv %s858
        %v860 = vmul.f32 %v377, %v859
        %v861 = vadd.f32 %v857, %v860
        %s862 = sld [smem:[#allocation2 + $0x403]]
        %v863 = vstv %s862
        %v864 = vmul.f32 %v378, %v863
        %v865 = vadd.f32 %v861, %v864
        %s866 = sld [smem:[#allocation5 + $0x3]]
        %v867 = vstv %s866
        %v868 = vadd.f32 %v865, %v867
        %v869 = vmax.f32 %v868, 0.0
        %s870 = scalar_lea.vmem %s4, 600
        %v871 = vld [vmem:[%s870] sm:$0xff]
        %v872 = vld [vmem:[%s870 + $0x8] sm:$0xff]
        %v873 = vld [vmem:[%s870 + $0x10] sm:$0xff]
        %v874 = vld [vmem:[%s870 + $0x18] sm:$0xff]
        %v875 = vld [vmem:[%s870 + $0x20] sm:$0xff]
        %v876 = vld [vmem:[%s870 + $0x28] sm:$0xff]
        %v877 = vld [vmem:[%s870 + $0x30] sm:$0xff]
        %v878 = vld [vmem:[%s870 + $0x38] sm:$0xff]
        %v879 = vld [vmem:[%s870 + $0x40] sm:$0xff]
        %v880 = vld [vmem:[%s870 + $0x48] sm:$0xff]
        %v881 = vld [vmem:[%s870 + $0x50] sm:$0xff]
        %v882 = vld [vmem:[%s870 + $0x58] sm:$0xff]
        %v883 = vld [vmem:[%s870 + $0x60] sm:$0xff]
        %v884 = vld [vmem:[%s870 + $0x68] sm:$0xff]
        %v885 = vld [vmem:[%s870 + $0x70] sm:$0xff]
        %v886 = vld [vmem:[%s870 + $0x78] sm:$0xff]
        %v887 = vld [vmem:[%s870 + $0x80] sm:$0xff]
        %v888 = vld [vmem:[%s870 + $0x88] sm:$0xff]
        %v889 = vld [vmem:[%s870 + $0x90] sm:$0xff]
        %v890 = vld [vmem:[%s870 + $0x98] sm:$0xff]
        %v891 = vld [vmem:[%s870 + $0xa0] sm:$0xff]
        %v892 = vld [vmem:[%s870 + $0xa8] sm:$0xff]
        %v893 = vld [vmem:[%s870 + $0xb0] sm:$0xff]
        %v894 = vld [vmem:[%s870 + $0xb8] sm:$0xff]
        %v895 = vld [vmem:[%s870 + $0xc0] sm:$0xf]
        %v897 = vlaneseq
        %v898 = vshrl.u32 %v897, 7
        %v899 = vsub.s32 0, %v898
        %v900 = vrot.slane %v869, %v899
        %v901 = vlaneseq
        %v902 = vshrl.u32 %v901, 7
        %v903 = vsub.s32 1, %v902
        %v904 = vrot.slane %v869, %v903
        %v906 = vsel %vm518, %v904, 0
        %v909 = vsel %vm521, %v895, 0
        %911 = vmatprep.subr.mxu0 0.0
        %912 = vmatpush1.msra.mxu0 %v886
        %913 = vmatprep.subr.mxu0 0.0
        %914 = vmatpush1.msra.mxu0 %v885
        %915 = vmatprep.subr.mxu0 0.0
        %916 = vmatpush1.msra.mxu0 %v884
        %917 = vmatprep.subr.mxu0 0.0
        %918 = vmatpush1.msra.mxu0 %v883
        %919 = vmatprep.subr.mxu0 0.0
        %920 = vmatpush1.msra.mxu0 %v882
        %921 = vmatprep.subr.mxu0 0.0
        %922 = vmatpush1.msra.mxu0 %v881
        %923 = vmatprep.subr.mxu0 0.0
        %924 = vmatpush1.msra.mxu0 %v880
        %925 = vmatprep.subr.mxu0 0.0
        %926 = vmatpush1.msra.mxu0 %v879
        %927 = vmatprep.subr.mxu0 0.0
        %928 = vmatpush1.msra.mxu0 %v878
        %929 = vmatprep.subr.mxu0 0.0
        %930 = vmatpush1.msra.mxu0 %v877
        %931 = vmatprep.subr.mxu0 0.0
        %932 = vmatpush1.msra.mxu0 %v876
        %933 = vmatprep.subr.mxu0 0.0
        %934 = vmatpush1.msra.mxu0 %v875
        %935 = vmatprep.subr.mxu0 0.0
        %936 = vmatpush1.msra.mxu0 %v874
        %937 = vmatprep.subr.mxu0 0.0
        %938 = vmatpush1.msra.mxu0 %v873
        %939 = vmatprep.subr.mxu0 0.0
        %940 = vmatpush1.msra.mxu0 %v872
        %941 = vmatprep.subr.mxu0 0.0
        %942 = vmatpush1.msra.mxu0 %v871
        %943 = vmatprep.subr.mxu0 0.0
        %944 = vmatpush2.msra.mxu0 0.0
        %945 = vmatprep.subr.mxu0 0.0
        %946 = vmatpush2.msra.mxu0 0.0
        %947 = vmatprep.subr.mxu0 0.0
        %948 = vmatpush2.msra.mxu0 0.0
        %949 = vmatprep.subr.mxu0 0.0
        %950 = vmatpush2.msra.mxu0 0.0
        %951 = vmatprep.subr.mxu0 0.0
        %952 = vmatpush2.msra.mxu0 0.0
        %953 = vmatprep.subr.mxu0 0.0
        %954 = vmatpush2.msra.mxu0 0.0
        %955 = vmatprep.subr.mxu0 0.0
        %956 = vmatpush2.msra.mxu0 0.0
        %957 = vmatprep.subr.mxu0 0.0
        %958 = vmatpush2.msra.mxu0 %v909
        %959 = vmatprep.subr.mxu0 0.0
        %960 = vmatpush2.msra.mxu0 %v894
        %961 = vmatprep.subr.mxu0 0.0
        %962 = vmatpush2.msra.mxu0 %v893
        %963 = vmatprep.subr.mxu0 0.0
        %964 = vmatpush2.msra.mxu0 %v892
        %965 = vmatprep.subr.mxu0 0.0
        %966 = vmatpush2.msra.mxu0 %v891
        %967 = vmatprep.subr.mxu0 0.0
        %968 = vmatpush2.msra.mxu0 %v890
        %969 = vmatprep.subr.mxu0 0.0
        %970 = vmatpush2.msra.mxu0 %v889
        %971 = vmatprep.subr.mxu0 0.0
        %972 = vmatpush2.msra.mxu0 %v888
        %973 = vmatprep.subr.mxu0 0.0
        %974 = vmatpush2.msra.mxu0 %v887
        %975 = vmatprep.mubr.f32.mxu0 %v906
        %976 = vmatmul.mubr.f32.gmra.mxu0 %v900
        %v977 = vpop.f32.mrf.mxu0
        %v978 = vadd.f32 0.0, %v977
        %v979 = vpop.f32.mrf.mxu0
        %980 = vdwg.mxu0
        %v981 = vadd.f32 %v830, %v978
        %s982 = sld [smem:[#allocation2 + $0x4]]
        %v983 = vstv %s982
        %v984 = vmul.f32 %v370, %v983
        %s985 = sld [smem:[#allocation2 + $0x84]]
        %v986 = vstv %s985
        %v987 = vmul.f32 %v371, %v986
        %v988 = vadd.f32 %v984, %v987
        %s989 = sld [smem:[#allocation2 + $0x104]]
        %v990 = vstv %s989
        %v991 = vmul.f32 %v372, %v990
        %v992 = vadd.f32 %v988, %v991
        %s993 = sld [smem:[#allocation2 + $0x184]]
        %v994 = vstv %s993
        %v995 = vmul.f32 %v373, %v994
        %v996 = vadd.f32 %v992, %v995
        %s997 = sld [smem:[#allocation2 + $0x204]]
        %v998 = vstv %s997
        %v999 = vmul.f32 %v374, %v998
        %v1000 = vadd.f32 %v996, %v999
        %s1001 = sld [smem:[#allocation2 + $0x284]]
        %v1002 = vstv %s1001
        %v1003 = vmul.f32 %v375, %v1002
        %v1004 = vadd.f32 %v1000, %v1003
        %s1005 = sld [smem:[#allocation2 + $0x304]]
        %v1006 = vstv %s1005
        %v1007 = vmul.f32 %v376, %v1006
        %v1008 = vadd.f32 %v1004, %v1007
        %s1009 = sld [smem:[#allocation2 + $0x384]]
        %v1010 = vstv %s1009
        %v1011 = vmul.f32 %v377, %v1010
        %v1012 = vadd.f32 %v1008, %v1011
        %s1013 = sld [smem:[#allocation2 + $0x404]]
        %v1014 = vstv %s1013
        %v1015 = vmul.f32 %v378, %v1014
        %v1016 = vadd.f32 %v1012, %v1015
        %s1017 = sld [smem:[#allocation5 + $0x4]]
        %v1018 = vstv %s1017
        %v1019 = vadd.f32 %v1016, %v1018
        %v1020 = vmax.f32 %v1019, 0.0
        %s1021 = scalar_lea.vmem %s4, 800
        %v1022 = vld [vmem:[%s1021] sm:$0xff]
        %v1023 = vld [vmem:[%s1021 + $0x8] sm:$0xff]
        %v1024 = vld [vmem:[%s1021 + $0x10] sm:$0xff]
        %v1025 = vld [vmem:[%s1021 + $0x18] sm:$0xff]
        %v1026 = vld [vmem:[%s1021 + $0x20] sm:$0xff]
        %v1027 = vld [vmem:[%s1021 + $0x28] sm:$0xff]
        %v1028 = vld [vmem:[%s1021 + $0x30] sm:$0xff]
        %v1029 = vld [vmem:[%s1021 + $0x38] sm:$0xff]
        %v1030 = vld [vmem:[%s1021 + $0x40] sm:$0xff]
        %v1031 = vld [vmem:[%s1021 + $0x48] sm:$0xff]
        %v1032 = vld [vmem:[%s1021 + $0x50] sm:$0xff]
        %v1033 = vld [vmem:[%s1021 + $0x58] sm:$0xff]
        %v1034 = vld [vmem:[%s1021 + $0x60] sm:$0xff]
        %v1035 = vld [vmem:[%s1021 + $0x68] sm:$0xff]
        %v1036 = vld [vmem:[%s1021 + $0x70] sm:$0xff]
        %v1037 = vld [vmem:[%s1021 + $0x78] sm:$0xff]
        %v1038 = vld [vmem:[%s1021 + $0x80] sm:$0xff]
        %v1039 = vld [vmem:[%s1021 + $0x88] sm:$0xff]
        %v1040 = vld [vmem:[%s1021 + $0x90] sm:$0xff]
        %v1041 = vld [vmem:[%s1021 + $0x98] sm:$0xff]
        %v1042 = vld [vmem:[%s1021 + $0xa0] sm:$0xff]
        %v1043 = vld [vmem:[%s1021 + $0xa8] sm:$0xff]
        %v1044 = vld [vmem:[%s1021 + $0xb0] sm:$0xff]
        %v1045 = vld [vmem:[%s1021 + $0xb8] sm:$0xff]
        %v1046 = vld [vmem:[%s1021 + $0xc0] sm:$0xf]
        %v1048 = vlaneseq
        %v1049 = vshrl.u32 %v1048, 7
        %v1050 = vsub.s32 0, %v1049
        %v1051 = vrot.slane %v1020, %v1050
        %v1052 = vlaneseq
        %v1053 = vshrl.u32 %v1052, 7
        %v1054 = vsub.s32 1, %v1053
        %v1055 = vrot.slane %v1020, %v1054
        %v1057 = vsel %vm518, %v1055, 0
        %v1060 = vsel %vm521, %v1046, 0
        %1062 = vmatprep.subr.mxu0 0.0
        %1063 = vmatpush1.msra.mxu0 %v1037
        %1064 = vmatprep.subr.mxu0 0.0
        %1065 = vmatpush1.msra.mxu0 %v1036
        %1066 = vmatprep.subr.mxu0 0.0
        %1067 = vmatpush1.msra.mxu0 %v1035
        %1068 = vmatprep.subr.mxu0 0.0
        %1069 = vmatpush1.msra.mxu0 %v1034
        %1070 = vmatprep.subr.mxu0 0.0
        %1071 = vmatpush1.msra.mxu0 %v1033
        %1072 = vmatprep.subr.mxu0 0.0
        %1073 = vmatpush1.msra.mxu0 %v1032
        %1074 = vmatprep.subr.mxu0 0.0
        %1075 = vmatpush1.msra.mxu0 %v1031
        %1076 = vmatprep.subr.mxu0 0.0
        %1077 = vmatpush1.msra.mxu0 %v1030
        %1078 = vmatprep.subr.mxu0 0.0
        %1079 = vmatpush1.msra.mxu0 %v1029
        %1080 = vmatprep.subr.mxu0 0.0
        %1081 = vmatpush1.msra.mxu0 %v1028
        %1082 = vmatprep.subr.mxu0 0.0
        %1083 = vmatpush1.msra.mxu0 %v1027
        %1084 = vmatprep.subr.mxu0 0.0
        %1085 = vmatpush1.msra.mxu0 %v1026
        %1086 = vmatprep.subr.mxu0 0.0
        %1087 = vmatpush1.msra.mxu0 %v1025
        %1088 = vmatprep.subr.mxu0 0.0
        %1089 = vmatpush1.msra.mxu0 %v1024
        %1090 = vmatprep.subr.mxu0 0.0
        %1091 = vmatpush1.msra.mxu0 %v1023
        %1092 = vmatprep.subr.mxu0 0.0
        %1093 = vmatpush1.msra.mxu0 %v1022
        %1094 = vmatprep.subr.mxu0 0.0
        %1095 = vmatpush2.msra.mxu0 0.0
        %1096 = vmatprep.subr.mxu0 0.0
        %1097 = vmatpush2.msra.mxu0 0.0
        %1098 = vmatprep.subr.mxu0 0.0
        %1099 = vmatpush2.msra.mxu0 0.0
        %1100 = vmatprep.subr.mxu0 0.0
        %1101 = vmatpush2.msra.mxu0 0.0
        %1102 = vmatprep.subr.mxu0 0.0
        %1103 = vmatpush2.msra.mxu0 0.0
        %1104 = vmatprep.subr.mxu0 0.0
        %1105 = vmatpush2.msra.mxu0 0.0
        %1106 = vmatprep.subr.mxu0 0.0
        %1107 = vmatpush2.msra.mxu0 0.0
        %1108 = vmatprep.subr.mxu0 0.0
        %1109 = vmatpush2.msra.mxu0 %v1060
        %1110 = vmatprep.subr.mxu0 0.0
        %1111 = vmatpush2.msra.mxu0 %v1045
        %1112 = vmatprep.subr.mxu0 0.0
        %1113 = vmatpush2.msra.mxu0 %v1044
        %1114 = vmatprep.subr.mxu0 0.0
        %1115 = vmatpush2.msra.mxu0 %v1043
        %1116 = vmatprep.subr.mxu0 0.0
        %1117 = vmatpush2.msra.mxu0 %v1042
        %1118 = vmatprep.subr.mxu0 0.0
        %1119 = vmatpush2.msra.mxu0 %v1041
        %1120 = vmatprep.subr.mxu0 0.0
        %1121 = vmatpush2.msra.mxu0 %v1040
        %1122 = vmatprep.subr.mxu0 0.0
        %1123 = vmatpush2.msra.mxu0 %v1039
        %1124 = vmatprep.subr.mxu0 0.0
        %1125 = vmatpush2.msra.mxu0 %v1038
        %1126 = vmatprep.mubr.f32.mxu0 %v1057
        %1127 = vmatmul.mubr.f32.gmra.mxu0 %v1051
        %v1128 = vpop.f32.mrf.mxu0
        %v1129 = vadd.f32 0.0, %v1128
        %v1130 = vpop.f32.mrf.mxu0
        %1131 = vdwg.mxu0
        %v1132 = vadd.f32 %v981, %v1129
        %s1133 = sld [smem:[#allocation2 + $0x5]]
        %v1134 = vstv %s1133
        %v1135 = vmul.f32 %v370, %v1134
        %s1136 = sld [smem:[#allocation2 + $0x85]]
        %v1137 = vstv %s1136
        %v1138 = vmul.f32 %v371, %v1137
        %v1139 = vadd.f32 %v1135, %v1138
        %s1140 = sld [smem:[#allocation2 + $0x105]]
        %v1141 = vstv %s1140
        %v1142 = vmul.f32 %v372, %v1141
        %v1143 = vadd.f32 %v1139, %v1142
        %s1144 = sld [smem:[#allocation2 + $0x185]]
        %v1145 = vstv %s1144
        %v1146 = vmul.f32 %v373, %v1145
        %v1147 = vadd.f32 %v1143, %v1146
        %s1148 = sld [smem:[#allocation2 + $0x205]]
        %v1149 = vstv %s1148
        %v1150 = vmul.f32 %v374, %v1149
        %v1151 = vadd.f32 %v1147, %v1150
        %s1152 = sld [smem:[#allocation2 + $0x285]]
        %v1153 = vstv %s1152
        %v1154 = vmul.f32 %v375, %v1153
        %v1155 = vadd.f32 %v1151, %v1154
        %s1156 = sld [smem:[#allocation2 + $0x305]]
        %v1157 = vstv %s1156
        %v1158 = vmul.f32 %v376, %v1157
        %v1159 = vadd.f32 %v1155, %v1158
        %s1160 = sld [smem:[#allocation2 + $0x385]]
        %v1161 = vstv %s1160
        %v1162 = vmul.f32 %v377, %v1161
        %v1163 = vadd.f32 %v1159, %v1162
        %s1164 = sld [smem:[#allocation2 + $0x405]]
        %v1165 = vstv %s1164
        %v1166 = vmul.f32 %v378, %v1165
        %v1167 = vadd.f32 %v1163, %v1166
        %s1168 = sld [smem:[#allocation5 + $0x5]]
        %v1169 = vstv %s1168
        %v1170 = vadd.f32 %v1167, %v1169
        %v1171 = vmax.f32 %v1170, 0.0
        %s1172 = scalar_lea.vmem %s4, 1000
        %v1173 = vld [vmem:[%s1172] sm:$0xff]
        %v1174 = vld [vmem:[%s1172 + $0x8] sm:$0xff]
        %v1175 = vld [vmem:[%s1172 + $0x10] sm:$0xff]
        %v1176 = vld [vmem:[%s1172 + $0x18] sm:$0xff]
        %v1177 = vld [vmem:[%s1172 + $0x20] sm:$0xff]
        %v1178 = vld [vmem:[%s1172 + $0x28] sm:$0xff]
        %v1179 = vld [vmem:[%s1172 + $0x30] sm:$0xff]
        %v1180 = vld [vmem:[%s1172 + $0x38] sm:$0xff]
        %v1181 = vld [vmem:[%s1172 + $0x40] sm:$0xff]
        %v1182 = vld [vmem:[%s1172 + $0x48] sm:$0xff]
        %v1183 = vld [vmem:[%s1172 + $0x50] sm:$0xff]
        %v1184 = vld [vmem:[%s1172 + $0x58] sm:$0xff]
        %v1185 = vld [vmem:[%s1172 + $0x60] sm:$0xff]
        %v1186 = vld [vmem:[%s1172 + $0x68] sm:$0xff]
        %v1187 = vld [vmem:[%s1172 + $0x70] sm:$0xff]
        %v1188 = vld [vmem:[%s1172 + $0x78] sm:$0xff]
        %v1189 = vld [vmem:[%s1172 + $0x80] sm:$0xff]
        %v1190 = vld [vmem:[%s1172 + $0x88] sm:$0xff]
        %v1191 = vld [vmem:[%s1172 + $0x90] sm:$0xff]
        %v1192 = vld [vmem:[%s1172 + $0x98] sm:$0xff]
        %v1193 = vld [vmem:[%s1172 + $0xa0] sm:$0xff]
        %v1194 = vld [vmem:[%s1172 + $0xa8] sm:$0xff]
        %v1195 = vld [vmem:[%s1172 + $0xb0] sm:$0xff]
        %v1196 = vld [vmem:[%s1172 + $0xb8] sm:$0xff]
        %v1197 = vld [vmem:[%s1172 + $0xc0] sm:$0xf]
        %v1199 = vlaneseq
        %v1200 = vshrl.u32 %v1199, 7
        %v1201 = vsub.s32 0, %v1200
        %v1202 = vrot.slane %v1171, %v1201
        %v1203 = vlaneseq
        %v1204 = vshrl.u32 %v1203, 7
        %v1205 = vsub.s32 1, %v1204
        %v1206 = vrot.slane %v1171, %v1205
        %v1208 = vsel %vm518, %v1206, 0
        %v1211 = vsel %vm521, %v1197, 0
        %1213 = vmatprep.subr.mxu0 0.0
        %1214 = vmatpush1.msra.mxu0 %v1188
        %1215 = vmatprep.subr.mxu0 0.0
        %1216 = vmatpush1.msra.mxu0 %v1187
        %1217 = vmatprep.subr.mxu0 0.0
        %1218 = vmatpush1.msra.mxu0 %v1186
        %1219 = vmatprep.subr.mxu0 0.0
        %1220 = vmatpush1.msra.mxu0 %v1185
        %1221 = vmatprep.subr.mxu0 0.0
        %1222 = vmatpush1.msra.mxu0 %v1184
        %1223 = vmatprep.subr.mxu0 0.0
        %1224 = vmatpush1.msra.mxu0 %v1183
        %1225 = vmatprep.subr.mxu0 0.0
        %1226 = vmatpush1.msra.mxu0 %v1182
        %1227 = vmatprep.subr.mxu0 0.0
        %1228 = vmatpush1.msra.mxu0 %v1181
        %1229 = vmatprep.subr.mxu0 0.0
        %1230 = vmatpush1.msra.mxu0 %v1180
        %1231 = vmatprep.subr.mxu0 0.0
        %1232 = vmatpush1.msra.mxu0 %v1179
        %1233 = vmatprep.subr.mxu0 0.0
        %1234 = vmatpush1.msra.mxu0 %v1178
        %1235 = vmatprep.subr.mxu0 0.0
        %1236 = vmatpush1.msra.mxu0 %v1177
        %1237 = vmatprep.subr.mxu0 0.0
        %1238 = vmatpush1.msra.mxu0 %v1176
        %1239 = vmatprep.subr.mxu0 0.0
        %1240 = vmatpush1.msra.mxu0 %v1175
        %1241 = vmatprep.subr.mxu0 0.0
        %1242 = vmatpush1.msra.mxu0 %v1174
        %1243 = vmatprep.subr.mxu0 0.0
        %1244 = vmatpush1.msra.mxu0 %v1173
        %1245 = vmatprep.subr.mxu0 0.0
        %1246 = vmatpush2.msra.mxu0 0.0
        %1247 = vmatprep.subr.mxu0 0.0
        %1248 = vmatpush2.msra.mxu0 0.0
        %1249 = vmatprep.subr.mxu0 0.0
        %1250 = vmatpush2.msra.mxu0 0.0
        %1251 = vmatprep.subr.mxu0 0.0
        %1252 = vmatpush2.msra.mxu0 0.0
        %1253 = vmatprep.subr.mxu0 0.0
        %1254 = vmatpush2.msra.mxu0 0.0
        %1255 = vmatprep.subr.mxu0 0.0
        %1256 = vmatpush2.msra.mxu0 0.0
        %1257 = vmatprep.subr.mxu0 0.0
        %1258 = vmatpush2.msra.mxu0 0.0
        %1259 = vmatprep.subr.mxu0 0.0
        %1260 = vmatpush2.msra.mxu0 %v1211
        %1261 = vmatprep.subr.mxu0 0.0
        %1262 = vmatpush2.msra.mxu0 %v1196
        %1263 = vmatprep.subr.mxu0 0.0
        %1264 = vmatpush2.msra.mxu0 %v1195
        %1265 = vmatprep.subr.mxu0 0.0
        %1266 = vmatpush2.msra.mxu0 %v1194
        %1267 = vmatprep.subr.mxu0 0.0
        %1268 = vmatpush2.msra.mxu0 %v1193
        %1269 = vmatprep.subr.mxu0 0.0
        %1270 = vmatpush2.msra.mxu0 %v1192
        %1271 = vmatprep.subr.mxu0 0.0
        %1272 = vmatpush2.msra.mxu0 %v1191
        %1273 = vmatprep.subr.mxu0 0.0
        %1274 = vmatpush2.msra.mxu0 %v1190
        %1275 = vmatprep.subr.mxu0 0.0
        %1276 = vmatpush2.msra.mxu0 %v1189
        %1277 = vmatprep.mubr.f32.mxu0 %v1208
        %1278 = vmatmul.mubr.f32.gmra.mxu0 %v1202
        %v1279 = vpop.f32.mrf.mxu0
        %v1280 = vadd.f32 0.0, %v1279
        %v1281 = vpop.f32.mrf.mxu0
        %1282 = vdwg.mxu0
        %v1283 = vadd.f32 %v1132, %v1280
        %s1284 = sld [smem:[#allocation2 + $0x6]]
        %v1285 = vstv %s1284
        %v1286 = vmul.f32 %v370, %v1285
        %s1287 = sld [smem:[#allocation2 + $0x86]]
        %v1288 = vstv %s1287
        %v1289 = vmul.f32 %v371, %v1288
        %v1290 = vadd.f32 %v1286, %v1289
        %s1291 = sld [smem:[#allocation2 + $0x106]]
        %v1292 = vstv %s1291
        %v1293 = vmul.f32 %v372, %v1292
        %v1294 = vadd.f32 %v1290, %v1293
        %s1295 = sld [smem:[#allocation2 + $0x186]]
        %v1296 = vstv %s1295
        %v1297 = vmul.f32 %v373, %v1296
        %v1298 = vadd.f32 %v1294, %v1297
        %s1299 = sld [smem:[#allocation2 + $0x206]]
        %v1300 = vstv %s1299
        %v1301 = vmul.f32 %v374, %v1300
        %v1302 = vadd.f32 %v1298, %v1301
        %s1303 = sld [smem:[#allocation2 + $0x286]]
        %v1304 = vstv %s1303
        %v1305 = vmul.f32 %v375, %v1304
        %v1306 = vadd.f32 %v1302, %v1305
        %s1307 = sld [smem:[#allocation2 + $0x306]]
        %v1308 = vstv %s1307
        %v1309 = vmul.f32 %v376, %v1308
        %v1310 = vadd.f32 %v1306, %v1309
        %s1311 = sld [smem:[#allocation2 + $0x386]]
        %v1312 = vstv %s1311
        %v1313 = vmul.f32 %v377, %v1312
        %v1314 = vadd.f32 %v1310, %v1313
        %s1315 = sld [smem:[#allocation2 + $0x406]]
        %v1316 = vstv %s1315
        %v1317 = vmul.f32 %v378, %v1316
        %v1318 = vadd.f32 %v1314, %v1317
        %s1319 = sld [smem:[#allocation5 + $0x6]]
        %v1320 = vstv %s1319
        %v1321 = vadd.f32 %v1318, %v1320
        %v1322 = vmax.f32 %v1321, 0.0
        %s1323 = scalar_lea.vmem %s4, 1200
        %v1324 = vld [vmem:[%s1323] sm:$0xff]
        %v1325 = vld [vmem:[%s1323 + $0x8] sm:$0xff]
        %v1326 = vld [vmem:[%s1323 + $0x10] sm:$0xff]
        %v1327 = vld [vmem:[%s1323 + $0x18] sm:$0xff]
        %v1328 = vld [vmem:[%s1323 + $0x20] sm:$0xff]
        %v1329 = vld [vmem:[%s1323 + $0x28] sm:$0xff]
        %v1330 = vld [vmem:[%s1323 + $0x30] sm:$0xff]
        %v1331 = vld [vmem:[%s1323 + $0x38] sm:$0xff]
        %v1332 = vld [vmem:[%s1323 + $0x40] sm:$0xff]
        %v1333 = vld [vmem:[%s1323 + $0x48] sm:$0xff]
        %v1334 = vld [vmem:[%s1323 + $0x50] sm:$0xff]
        %v1335 = vld [vmem:[%s1323 + $0x58] sm:$0xff]
        %v1336 = vld [vmem:[%s1323 + $0x60] sm:$0xff]
        %v1337 = vld [vmem:[%s1323 + $0x68] sm:$0xff]
        %v1338 = vld [vmem:[%s1323 + $0x70] sm:$0xff]
        %v1339 = vld [vmem:[%s1323 + $0x78] sm:$0xff]
        %v1340 = vld [vmem:[%s1323 + $0x80] sm:$0xff]
        %v1341 = vld [vmem:[%s1323 + $0x88] sm:$0xff]
        %v1342 = vld [vmem:[%s1323 + $0x90] sm:$0xff]
        %v1343 = vld [vmem:[%s1323 + $0x98] sm:$0xff]
        %v1344 = vld [vmem:[%s1323 + $0xa0] sm:$0xff]
        %v1345 = vld [vmem:[%s1323 + $0xa8] sm:$0xff]
        %v1346 = vld [vmem:[%s1323 + $0xb0] sm:$0xff]
        %v1347 = vld [vmem:[%s1323 + $0xb8] sm:$0xff]
        %v1348 = vld [vmem:[%s1323 + $0xc0] sm:$0xf]
        %v1350 = vlaneseq
        %v1351 = vshrl.u32 %v1350, 7
        %v1352 = vsub.s32 0, %v1351
        %v1353 = vrot.slane %v1322, %v1352
        %v1354 = vlaneseq
        %v1355 = vshrl.u32 %v1354, 7
        %v1356 = vsub.s32 1, %v1355
        %v1357 = vrot.slane %v1322, %v1356
        %v1359 = vsel %vm518, %v1357, 0
        %v1362 = vsel %vm521, %v1348, 0
        %1364 = vmatprep.subr.mxu0 0.0
        %1365 = vmatpush1.msra.mxu0 %v1339
        %1366 = vmatprep.subr.mxu0 0.0
        %1367 = vmatpush1.msra.mxu0 %v1338
        %1368 = vmatprep.subr.mxu0 0.0
        %1369 = vmatpush1.msra.mxu0 %v1337
        %1370 = vmatprep.subr.mxu0 0.0
        %1371 = vmatpush1.msra.mxu0 %v1336
        %1372 = vmatprep.subr.mxu0 0.0
        %1373 = vmatpush1.msra.mxu0 %v1335
        %1374 = vmatprep.subr.mxu0 0.0
        %1375 = vmatpush1.msra.mxu0 %v1334
        %1376 = vmatprep.subr.mxu0 0.0
        %1377 = vmatpush1.msra.mxu0 %v1333
        %1378 = vmatprep.subr.mxu0 0.0
        %1379 = vmatpush1.msra.mxu0 %v1332
        %1380 = vmatprep.subr.mxu0 0.0
        %1381 = vmatpush1.msra.mxu0 %v1331
        %1382 = vmatprep.subr.mxu0 0.0
        %1383 = vmatpush1.msra.mxu0 %v1330
        %1384 = vmatprep.subr.mxu0 0.0
        %1385 = vmatpush1.msra.mxu0 %v1329
        %1386 = vmatprep.subr.mxu0 0.0
        %1387 = vmatpush1.msra.mxu0 %v1328
        %1388 = vmatprep.subr.mxu0 0.0
        %1389 = vmatpush1.msra.mxu0 %v1327
        %1390 = vmatprep.subr.mxu0 0.0
        %1391 = vmatpush1.msra.mxu0 %v1326
        %1392 = vmatprep.subr.mxu0 0.0
        %1393 = vmatpush1.msra.mxu0 %v1325
        %1394 = vmatprep.subr.mxu0 0.0
        %1395 = vmatpush1.msra.mxu0 %v1324
        %1396 = vmatprep.subr.mxu0 0.0
        %1397 = vmatpush2.msra.mxu0 0.0
        %1398 = vmatprep.subr.mxu0 0.0
        %1399 = vmatpush2.msra.mxu0 0.0
        %1400 = vmatprep.subr.mxu0 0.0
        %1401 = vmatpush2.msra.mxu0 0.0
        %1402 = vmatprep.subr.mxu0 0.0
        %1403 = vmatpush2.msra.mxu0 0.0
        %1404 = vmatprep.subr.mxu0 0.0
        %1405 = vmatpush2.msra.mxu0 0.0
        %1406 = vmatprep.subr.mxu0 0.0
        %1407 = vmatpush2.msra.mxu0 0.0
        %1408 = vmatprep.subr.mxu0 0.0
        %1409 = vmatpush2.msra.mxu0 0.0
        %1410 = vmatprep.subr.mxu0 0.0
        %1411 = vmatpush2.msra.mxu0 %v1362
        %1412 = vmatprep.subr.mxu0 0.0
        %1413 = vmatpush2.msra.mxu0 %v1347
        %1414 = vmatprep.subr.mxu0 0.0
        %1415 = vmatpush2.msra.mxu0 %v1346
        %1416 = vmatprep.subr.mxu0 0.0
        %1417 = vmatpush2.msra.mxu0 %v1345
        %1418 = vmatprep.subr.mxu0 0.0
        %1419 = vmatpush2.msra.mxu0 %v1344
        %1420 = vmatprep.subr.mxu0 0.0
        %1421 = vmatpush2.msra.mxu0 %v1343
        %1422 = vmatprep.subr.mxu0 0.0
        %1423 = vmatpush2.msra.mxu0 %v1342
        %1424 = vmatprep.subr.mxu0 0.0
        %1425 = vmatpush2.msra.mxu0 %v1341
        %1426 = vmatprep.subr.mxu0 0.0
        %1427 = vmatpush2.msra.mxu0 %v1340
        %1428 = vmatprep.mubr.f32.mxu0 %v1359
        %1429 = vmatmul.mubr.f32.gmra.mxu0 %v1353
        %v1430 = vpop.f32.mrf.mxu0
        %v1431 = vadd.f32 0.0, %v1430
        %v1432 = vpop.f32.mrf.mxu0
        %1433 = vdwg.mxu0
        %v1434 = vadd.f32 %v1283, %v1431
        %s1435 = sld [smem:[#allocation2 + $0x7]]
        %v1436 = vstv %s1435
        %v1437 = vmul.f32 %v370, %v1436
        %s1438 = sld [smem:[#allocation2 + $0x87]]
        %v1439 = vstv %s1438
        %v1440 = vmul.f32 %v371, %v1439
        %v1441 = vadd.f32 %v1437, %v1440
        %s1442 = sld [smem:[#allocation2 + $0x107]]
        %v1443 = vstv %s1442
        %v1444 = vmul.f32 %v372, %v1443
        %v1445 = vadd.f32 %v1441, %v1444
        %s1446 = sld [smem:[#allocation2 + $0x187]]
        %v1447 = vstv %s1446
        %v1448 = vmul.f32 %v373, %v1447
        %v1449 = vadd.f32 %v1445, %v1448
        %s1450 = sld [smem:[#allocation2 + $0x207]]
        %v1451 = vstv %s1450
        %v1452 = vmul.f32 %v374, %v1451
        %v1453 = vadd.f32 %v1449, %v1452
        %s1454 = sld [smem:[#allocation2 + $0x287]]
        %v1455 = vstv %s1454
        %v1456 = vmul.f32 %v375, %v1455
        %v1457 = vadd.f32 %v1453, %v1456
        %s1458 = sld [smem:[#allocation2 + $0x307]]
        %v1459 = vstv %s1458
        %v1460 = vmul.f32 %v376, %v1459
        %v1461 = vadd.f32 %v1457, %v1460
        %s1462 = sld [smem:[#allocation2 + $0x387]]
        %v1463 = vstv %s1462
        %v1464 = vmul.f32 %v377, %v1463
        %v1465 = vadd.f32 %v1461, %v1464
        %s1466 = sld [smem:[#allocation2 + $0x407]]
        %v1467 = vstv %s1466
        %v1468 = vmul.f32 %v378, %v1467
        %v1469 = vadd.f32 %v1465, %v1468
        %s1470 = sld [smem:[#allocation5 + $0x7]]
        %v1471 = vstv %s1470
        %v1472 = vadd.f32 %v1469, %v1471
        %v1473 = vmax.f32 %v1472, 0.0
        %s1474 = scalar_lea.vmem %s4, 1400
        %v1475 = vld [vmem:[%s1474] sm:$0xff]
        %v1476 = vld [vmem:[%s1474 + $0x8] sm:$0xff]
        %v1477 = vld [vmem:[%s1474 + $0x10] sm:$0xff]
        %v1478 = vld [vmem:[%s1474 + $0x18] sm:$0xff]
        %v1479 = vld [vmem:[%s1474 + $0x20] sm:$0xff]
        %v1480 = vld [vmem:[%s1474 + $0x28] sm:$0xff]
        %v1481 = vld [vmem:[%s1474 + $0x30] sm:$0xff]
        %v1482 = vld [vmem:[%s1474 + $0x38] sm:$0xff]
        %v1483 = vld [vmem:[%s1474 + $0x40] sm:$0xff]
        %v1484 = vld [vmem:[%s1474 + $0x48] sm:$0xff]
        %v1485 = vld [vmem:[%s1474 + $0x50] sm:$0xff]
        %v1486 = vld [vmem:[%s1474 + $0x58] sm:$0xff]
        %v1487 = vld [vmem:[%s1474 + $0x60] sm:$0xff]
        %v1488 = vld [vmem:[%s1474 + $0x68] sm:$0xff]
        %v1489 = vld [vmem:[%s1474 + $0x70] sm:$0xff]
        %v1490 = vld [vmem:[%s1474 + $0x78] sm:$0xff]
        %v1491 = vld [vmem:[%s1474 + $0x80] sm:$0xff]
        %v1492 = vld [vmem:[%s1474 + $0x88] sm:$0xff]
        %v1493 = vld [vmem:[%s1474 + $0x90] sm:$0xff]
        %v1494 = vld [vmem:[%s1474 + $0x98] sm:$0xff]
        %v1495 = vld [vmem:[%s1474 + $0xa0] sm:$0xff]
        %v1496 = vld [vmem:[%s1474 + $0xa8] sm:$0xff]
        %v1497 = vld [vmem:[%s1474 + $0xb0] sm:$0xff]
        %v1498 = vld [vmem:[%s1474 + $0xb8] sm:$0xff]
        %v1499 = vld [vmem:[%s1474 + $0xc0] sm:$0xf]
        %v1501 = vlaneseq
        %v1502 = vshrl.u32 %v1501, 7
        %v1503 = vsub.s32 0, %v1502
        %v1504 = vrot.slane %v1473, %v1503
        %v1505 = vlaneseq
        %v1506 = vshrl.u32 %v1505, 7
        %v1507 = vsub.s32 1, %v1506
        %v1508 = vrot.slane %v1473, %v1507
        %v1510 = vsel %vm518, %v1508, 0
        %v1513 = vsel %vm521, %v1499, 0
        %1515 = vmatprep.subr.mxu0 0.0
        %1516 = vmatpush1.msra.mxu0 %v1490
        %1517 = vmatprep.subr.mxu0 0.0
        %1518 = vmatpush1.msra.mxu0 %v1489
        %1519 = vmatprep.subr.mxu0 0.0
        %1520 = vmatpush1.msra.mxu0 %v1488
        %1521 = vmatprep.subr.mxu0 0.0
        %1522 = vmatpush1.msra.mxu0 %v1487
        %1523 = vmatprep.subr.mxu0 0.0
        %1524 = vmatpush1.msra.mxu0 %v1486
        %1525 = vmatprep.subr.mxu0 0.0
        %1526 = vmatpush1.msra.mxu0 %v1485
        %1527 = vmatprep.subr.mxu0 0.0
        %1528 = vmatpush1.msra.mxu0 %v1484
        %1529 = vmatprep.subr.mxu0 0.0
        %1530 = vmatpush1.msra.mxu0 %v1483
        %1531 = vmatprep.subr.mxu0 0.0
        %1532 = vmatpush1.msra.mxu0 %v1482
        %1533 = vmatprep.subr.mxu0 0.0
        %1534 = vmatpush1.msra.mxu0 %v1481
        %1535 = vmatprep.subr.mxu0 0.0
        %1536 = vmatpush1.msra.mxu0 %v1480
        %1537 = vmatprep.subr.mxu0 0.0
        %1538 = vmatpush1.msra.mxu0 %v1479
        %1539 = vmatprep.subr.mxu0 0.0
        %1540 = vmatpush1.msra.mxu0 %v1478
        %1541 = vmatprep.subr.mxu0 0.0
        %1542 = vmatpush1.msra.mxu0 %v1477
        %1543 = vmatprep.subr.mxu0 0.0
        %1544 = vmatpush1.msra.mxu0 %v1476
        %1545 = vmatprep.subr.mxu0 0.0
        %1546 = vmatpush1.msra.mxu0 %v1475
        %1547 = vmatprep.subr.mxu0 0.0
        %1548 = vmatpush2.msra.mxu0 0.0
        %1549 = vmatprep.subr.mxu0 0.0
        %1550 = vmatpush2.msra.mxu0 0.0
        %1551 = vmatprep.subr.mxu0 0.0
        %1552 = vmatpush2.msra.mxu0 0.0
        %1553 = vmatprep.subr.mxu0 0.0
        %1554 = vmatpush2.msra.mxu0 0.0
        %1555 = vmatprep.subr.mxu0 0.0
        %1556 = vmatpush2.msra.mxu0 0.0
        %1557 = vmatprep.subr.mxu0 0.0
        %1558 = vmatpush2.msra.mxu0 0.0
        %1559 = vmatprep.subr.mxu0 0.0
        %1560 = vmatpush2.msra.mxu0 0.0
        %1561 = vmatprep.subr.mxu0 0.0
        %1562 = vmatpush2.msra.mxu0 %v1513
        %1563 = vmatprep.subr.mxu0 0.0
        %1564 = vmatpush2.msra.mxu0 %v1498
        %1565 = vmatprep.subr.mxu0 0.0
        %1566 = vmatpush2.msra.mxu0 %v1497
        %1567 = vmatprep.subr.mxu0 0.0
        %1568 = vmatpush2.msra.mxu0 %v1496
        %1569 = vmatprep.subr.mxu0 0.0
        %1570 = vmatpush2.msra.mxu0 %v1495
        %1571 = vmatprep.subr.mxu0 0.0
        %1572 = vmatpush2.msra.mxu0 %v1494
        %1573 = vmatprep.subr.mxu0 0.0
        %1574 = vmatpush2.msra.mxu0 %v1493
        %1575 = vmatprep.subr.mxu0 0.0
        %1576 = vmatpush2.msra.mxu0 %v1492
        %1577 = vmatprep.subr.mxu0 0.0
        %1578 = vmatpush2.msra.mxu0 %v1491
        %1579 = vmatprep.mubr.f32.mxu0 %v1510
        %1580 = vmatmul.mubr.f32.gmra.mxu0 %v1504
        %v1581 = vpop.f32.mrf.mxu0
        %v1582 = vadd.f32 0.0, %v1581
        %v1583 = vpop.f32.mrf.mxu0
        %1584 = vdwg.mxu0
        %v1585 = vadd.f32 %v1434, %v1582
        %v1586 = vld [vmem:[%s5] sm:$0x1]
        %v1587 = vadd.f32 %v1585, %v1586
        %v1588 = vld [vmem:[%s361] sm:$0xff]
        %v1589 = vld [vmem:[%s361 + $0x8] sm:$0xff]
        %v1590 = vld [vmem:[%s361 + $0x10] sm:$0xff]
        %v1591 = vld [vmem:[%s361 + $0x18] sm:$0xff]
        %v1592 = vld [vmem:[%s361 + $0x20] sm:$0xff]
        %v1593 = vld [vmem:[%s361 + $0x28] sm:$0xff]
        %v1594 = vld [vmem:[%s361 + $0x30] sm:$0xff]
        %v1595 = vld [vmem:[%s361 + $0x38] sm:$0xff]
        %v1596 = vld [vmem:[%s361 + $0x40] sm:$0xff]
        %v1597 = vmul.f32 %v1588, %v380
        %v1598 = vmul.f32 %v1589, %v383
        %v1599 = vadd.f32 %v1597, %v1598
        %v1600 = vmul.f32 %v1590, %v387
        %v1601 = vadd.f32 %v1599, %v1600
        %v1602 = vmul.f32 %v1591, %v391
        %v1603 = vadd.f32 %v1601, %v1602
        %v1604 = vmul.f32 %v1592, %v395
        %v1605 = vadd.f32 %v1603, %v1604
        %v1606 = vmul.f32 %v1593, %v399
        %v1607 = vadd.f32 %v1605, %v1606
        %v1608 = vmul.f32 %v1594, %v403
        %v1609 = vadd.f32 %v1607, %v1608
        %v1610 = vmul.f32 %v1595, %v407
        %v1611 = vadd.f32 %v1609, %v1610
        %v1612 = vmul.f32 %v1596, %v411
        %v1613 = vadd.f32 %v1611, %v1612
        %v1614 = vadd.f32 %v1613, %v415
        %v1615 = vmax.f32 %v1614, 0.0
        %v1616 = vmul.f32 %v1588, %v444
        %v1617 = vmul.f32 %v1589, %v447
        %v1618 = vadd.f32 %v1616, %v1617
        %v1619 = vmul.f32 %v1590, %v451
        %v1620 = vadd.f32 %v1618, %v1619
        %v1621 = vmul.f32 %v1591, %v455
        %v1622 = vadd.f32 %v1620, %v1621
        %v1623 = vmul.f32 %v1592, %v459
        %v1624 = vadd.f32 %v1622, %v1623
        %v1625 = vmul.f32 %v1593, %v463
        %v1626 = vadd.f32 %v1624, %v1625
        %v1627 = vmul.f32 %v1594, %v467
        %v1628 = vadd.f32 %v1626, %v1627
        %v1629 = vmul.f32 %v1595, %v471
        %v1630 = vadd.f32 %v1628, %v1629
        %v1631 = vmul.f32 %v1596, %v475
        %v1632 = vadd.f32 %v1630, %v1631
        %v1633 = vadd.f32 %v1632, %v479
        %v1634 = vmax.f32 %v1633, 0.0
        %v1636 = vcombine.high %v1634, %v1634
        %v1637 = vsel %vm518, %v1636, 0
        %1639 = vmatprep.subr.mxu0 0.0
        %1640 = vmatpush1.msra.mxu0 %v498
        %1641 = vmatprep.subr.mxu0 0.0
        %1642 = vmatpush1.msra.mxu0 %v497
        %1643 = vmatprep.subr.mxu0 0.0
        %1644 = vmatpush1.msra.mxu0 %v496
        %1645 = vmatprep.subr.mxu0 0.0
        %1646 = vmatpush1.msra.mxu0 %v495
        %1647 = vmatprep.subr.mxu0 0.0
        %1648 = vmatpush1.msra.mxu0 %v494
        %1649 = vmatprep.subr.mxu0 0.0
        %1650 = vmatpush1.msra.mxu0 %v493
        %1651 = vmatprep.subr.mxu0 0.0
        %1652 = vmatpush1.msra.mxu0 %v492
        %1653 = vmatprep.subr.mxu0 0.0
        %1654 = vmatpush1.msra.mxu0 %v491
        %1655 = vmatprep.subr.mxu0 0.0
        %1656 = vmatpush1.msra.mxu0 %v490
        %1657 = vmatprep.subr.mxu0 0.0
        %1658 = vmatpush1.msra.mxu0 %v489
        %1659 = vmatprep.subr.mxu0 0.0
        %1660 = vmatpush1.msra.mxu0 %v488
        %1661 = vmatprep.subr.mxu0 0.0
        %1662 = vmatpush1.msra.mxu0 %v487
        %1663 = vmatprep.subr.mxu0 0.0
        %1664 = vmatpush1.msra.mxu0 %v486
        %1665 = vmatprep.subr.mxu0 0.0
        %1666 = vmatpush1.msra.mxu0 %v485
        %1667 = vmatprep.subr.mxu0 0.0
        %1668 = vmatpush1.msra.mxu0 %v484
        %1669 = vmatprep.subr.mxu0 0.0
        %1670 = vmatpush1.msra.mxu0 %v483
        %1671 = vmatprep.subr.mxu0 0.0
        %1672 = vmatpush2.msra.mxu0 0.0
        %1673 = vmatprep.subr.mxu0 0.0
        %1674 = vmatpush2.msra.mxu0 0.0
        %1675 = vmatprep.subr.mxu0 0.0
        %1676 = vmatpush2.msra.mxu0 0.0
        %1677 = vmatprep.subr.mxu0 0.0
        %1678 = vmatpush2.msra.mxu0 0.0
        %1679 = vmatprep.subr.mxu0 0.0
        %1680 = vmatpush2.msra.mxu0 0.0
        %1681 = vmatprep.subr.mxu0 0.0
        %1682 = vmatpush2.msra.mxu0 0.0
        %1683 = vmatprep.subr.mxu0 0.0
        %1684 = vmatpush2.msra.mxu0 0.0
        %1685 = vmatprep.subr.mxu0 0.0
        %1686 = vmatpush2.msra.mxu0 %v523
        %1687 = vmatprep.subr.mxu0 0.0
        %1688 = vmatpush2.msra.mxu0 %v506
        %1689 = vmatprep.subr.mxu0 0.0
        %1690 = vmatpush2.msra.mxu0 %v505
        %1691 = vmatprep.subr.mxu0 0.0
        %1692 = vmatpush2.msra.mxu0 %v504
        %1693 = vmatprep.subr.mxu0 0.0
        %1694 = vmatpush2.msra.mxu0 %v503
        %1695 = vmatprep.subr.mxu0 0.0
        %1696 = vmatpush2.msra.mxu0 %v502
        %1697 = vmatprep.subr.mxu0 0.0
        %1698 = vmatpush2.msra.mxu0 %v501
        %1699 = vmatprep.subr.mxu0 0.0
        %1700 = vmatpush2.msra.mxu0 %v500
        %1701 = vmatprep.subr.mxu0 0.0
        %1702 = vmatpush2.msra.mxu0 %v499
        %1703 = vmatprep.mubr.f32.mxu0 %v1637
        %1704 = vmatmul.mubr.f32.gmra.mxu0 %v1634
        %v1705 = vpop.f32.mrf.mxu0
        %v1706 = vadd.f32 0.0, %v1705
        %v1707 = vpop.f32.mrf.mxu0
        %1708 = vdwg.mxu0
        %v1710 = vcombine.high %v1615, %v1615
        %v1711 = vsel %vm518, %v1710, 0
        %1713 = vmatprep.subr.mxu0 0.0
        %1714 = vmatpush1.msra.mxu0 %v433
        %1715 = vmatprep.subr.mxu0 0.0
        %1716 = vmatpush1.msra.mxu0 %v432
        %1717 = vmatprep.subr.mxu0 0.0
        %1718 = vmatpush1.msra.mxu0 %v431
        %1719 = vmatprep.subr.mxu0 0.0
        %1720 = vmatpush1.msra.mxu0 %v430
        %1721 = vmatprep.subr.mxu0 0.0
        %1722 = vmatpush1.msra.mxu0 %v429
        %1723 = vmatprep.subr.mxu0 0.0
        %1724 = vmatpush1.msra.mxu0 %v428
        %1725 = vmatprep.subr.mxu0 0.0
        %1726 = vmatpush1.msra.mxu0 %v427
        %1727 = vmatprep.subr.mxu0 0.0
        %1728 = vmatpush1.msra.mxu0 %v426
        %1729 = vmatprep.subr.mxu0 0.0
        %1730 = vmatpush1.msra.mxu0 %v425
        %1731 = vmatprep.subr.mxu0 0.0
        %1732 = vmatpush1.msra.mxu0 %v424
        %1733 = vmatprep.subr.mxu0 0.0
        %1734 = vmatpush1.msra.mxu0 %v423
        %1735 = vmatprep.subr.mxu0 0.0
        %1736 = vmatpush1.msra.mxu0 %v422
        %1737 = vmatprep.subr.mxu0 0.0
        %1738 = vmatpush1.msra.mxu0 %v421
        %1739 = vmatprep.subr.mxu0 0.0
        %1740 = vmatpush1.msra.mxu0 %v420
        %1741 = vmatprep.subr.mxu0 0.0
        %1742 = vmatpush1.msra.mxu0 %v419
        %1743 = vmatprep.subr.mxu0 0.0
        %1744 = vmatpush1.msra.mxu0 %v418
        %1745 = vmatprep.subr.mxu0 0.0
        %1746 = vmatpush2.msra.mxu0 0.0
        %1747 = vmatprep.subr.mxu0 0.0
        %1748 = vmatpush2.msra.mxu0 0.0
        %1749 = vmatprep.subr.mxu0 0.0
        %1750 = vmatpush2.msra.mxu0 0.0
        %1751 = vmatprep.subr.mxu0 0.0
        %1752 = vmatpush2.msra.mxu0 0.0
        %1753 = vmatprep.subr.mxu0 0.0
        %1754 = vmatpush2.msra.mxu0 0.0
        %1755 = vmatprep.subr.mxu0 0.0
        %1756 = vmatpush2.msra.mxu0 0.0
        %1757 = vmatprep.subr.mxu0 0.0
        %1758 = vmatpush2.msra.mxu0 0.0
        %1759 = vmatprep.subr.mxu0 0.0
        %1760 = vmatpush2.msra.mxu0 %v608
        %1761 = vmatprep.subr.mxu0 0.0
        %1762 = vmatpush2.msra.mxu0 %v441
        %1763 = vmatprep.subr.mxu0 0.0
        %1764 = vmatpush2.msra.mxu0 %v440
        %1765 = vmatprep.subr.mxu0 0.0
        %1766 = vmatpush2.msra.mxu0 %v439
        %1767 = vmatprep.subr.mxu0 0.0
        %1768 = vmatpush2.msra.mxu0 %v438
        %1769 = vmatprep.subr.mxu0 0.0
        %1770 = vmatpush2.msra.mxu0 %v437
        %1771 = vmatprep.subr.mxu0 0.0
        %1772 = vmatpush2.msra.mxu0 %v436
        %1773 = vmatprep.subr.mxu0 0.0
        %1774 = vmatpush2.msra.mxu0 %v435
        %1775 = vmatprep.subr.mxu0 0.0
        %1776 = vmatpush2.msra.mxu0 %v434
        %1777 = vmatprep.mubr.f32.mxu0 %v1711
        %1778 = vmatmul.mubr.f32.gmra.mxu0 %v1615
        %v1779 = vpop.f32.mrf.mxu0
        %v1780 = vadd.f32 %v1706, %v1779
        %v1781 = vpop.f32.mrf.mxu0
        %1782 = vdwg.mxu0
        %v1783 = vmul.f32 %v1588, %v681
        %v1784 = vmul.f32 %v1589, %v684
        %v1785 = vadd.f32 %v1783, %v1784
        %v1786 = vmul.f32 %v1590, %v688
        %v1787 = vadd.f32 %v1785, %v1786
        %v1788 = vmul.f32 %v1591, %v692
        %v1789 = vadd.f32 %v1787, %v1788
        %v1790 = vmul.f32 %v1592, %v696
        %v1791 = vadd.f32 %v1789, %v1790
        %v1792 = vmul.f32 %v1593, %v700
        %v1793 = vadd.f32 %v1791, %v1792
        %v1794 = vmul.f32 %v1594, %v704
        %v1795 = vadd.f32 %v1793, %v1794
        %v1796 = vmul.f32 %v1595, %v708
        %v1797 = vadd.f32 %v1795, %v1796
        %v1798 = vmul.f32 %v1596, %v712
        %v1799 = vadd.f32 %v1797, %v1798
        %v1800 = vadd.f32 %v1799, %v716
        %v1801 = vmax.f32 %v1800, 0.0
        %v1803 = vcombine.high %v1801, %v1801
        %v1804 = vsel %vm518, %v1803, 0
        %1806 = vmatprep.subr.mxu0 0.0
        %1807 = vmatpush1.msra.mxu0 %v735
        %1808 = vmatprep.subr.mxu0 0.0
        %1809 = vmatpush1.msra.mxu0 %v734
        %1810 = vmatprep.subr.mxu0 0.0
        %1811 = vmatpush1.msra.mxu0 %v733
        %1812 = vmatprep.subr.mxu0 0.0
        %1813 = vmatpush1.msra.mxu0 %v732
        %1814 = vmatprep.subr.mxu0 0.0
        %1815 = vmatpush1.msra.mxu0 %v731
        %1816 = vmatprep.subr.mxu0 0.0
        %1817 = vmatpush1.msra.mxu0 %v730
        %1818 = vmatprep.subr.mxu0 0.0
        %1819 = vmatpush1.msra.mxu0 %v729
        %1820 = vmatprep.subr.mxu0 0.0
        %1821 = vmatpush1.msra.mxu0 %v728
        %1822 = vmatprep.subr.mxu0 0.0
        %1823 = vmatpush1.msra.mxu0 %v727
        %1824 = vmatprep.subr.mxu0 0.0
        %1825 = vmatpush1.msra.mxu0 %v726
        %1826 = vmatprep.subr.mxu0 0.0
        %1827 = vmatpush1.msra.mxu0 %v725
        %1828 = vmatprep.subr.mxu0 0.0
        %1829 = vmatpush1.msra.mxu0 %v724
        %1830 = vmatprep.subr.mxu0 0.0
        %1831 = vmatpush1.msra.mxu0 %v723
        %1832 = vmatprep.subr.mxu0 0.0
        %1833 = vmatpush1.msra.mxu0 %v722
        %1834 = vmatprep.subr.mxu0 0.0
        %1835 = vmatpush1.msra.mxu0 %v721
        %1836 = vmatprep.subr.mxu0 0.0
        %1837 = vmatpush1.msra.mxu0 %v720
        %1838 = vmatprep.subr.mxu0 0.0
        %1839 = vmatpush2.msra.mxu0 0.0
        %1840 = vmatprep.subr.mxu0 0.0
        %1841 = vmatpush2.msra.mxu0 0.0
        %1842 = vmatprep.subr.mxu0 0.0
        %1843 = vmatpush2.msra.mxu0 0.0
        %1844 = vmatprep.subr.mxu0 0.0
        %1845 = vmatpush2.msra.mxu0 0.0
        %1846 = vmatprep.subr.mxu0 0.0
        %1847 = vmatpush2.msra.mxu0 0.0
        %1848 = vmatprep.subr.mxu0 0.0
        %1849 = vmatpush2.msra.mxu0 0.0
        %1850 = vmatprep.subr.mxu0 0.0
        %1851 = vmatpush2.msra.mxu0 0.0
        %1852 = vmatprep.subr.mxu0 0.0
        %1853 = vmatpush2.msra.mxu0 %v758
        %1854 = vmatprep.subr.mxu0 0.0
        %1855 = vmatpush2.msra.mxu0 %v743
        %1856 = vmatprep.subr.mxu0 0.0
        %1857 = vmatpush2.msra.mxu0 %v742
        %1858 = vmatprep.subr.mxu0 0.0
        %1859 = vmatpush2.msra.mxu0 %v741
        %1860 = vmatprep.subr.mxu0 0.0
        %1861 = vmatpush2.msra.mxu0 %v740
        %1862 = vmatprep.subr.mxu0 0.0
        %1863 = vmatpush2.msra.mxu0 %v739
        %1864 = vmatprep.subr.mxu0 0.0
        %1865 = vmatpush2.msra.mxu0 %v738
        %1866 = vmatprep.subr.mxu0 0.0
        %1867 = vmatpush2.msra.mxu0 %v737
        %1868 = vmatprep.subr.mxu0 0.0
        %1869 = vmatpush2.msra.mxu0 %v736
        %1870 = vmatprep.mubr.f32.mxu0 %v1804
        %1871 = vmatmul.mubr.f32.gmra.mxu0 %v1801
        %v1872 = vpop.f32.mrf.mxu0
        %v1873 = vadd.f32 0.0, %v1872
        %v1874 = vpop.f32.mrf.mxu0
        %1875 = vdwg.mxu0
        %v1876 = vadd.f32 %v1780, %v1873
        %v1877 = vmul.f32 %v1588, %v832
        %v1878 = vmul.f32 %v1589, %v835
        %v1879 = vadd.f32 %v1877, %v1878
        %v1880 = vmul.f32 %v1590, %v839
        %v1881 = vadd.f32 %v1879, %v1880
        %v1882 = vmul.f32 %v1591, %v843
        %v1883 = vadd.f32 %v1881, %v1882
        %v1884 = vmul.f32 %v1592, %v847
        %v1885 = vadd.f32 %v1883, %v1884
        %v1886 = vmul.f32 %v1593, %v851
        %v1887 = vadd.f32 %v1885, %v1886
        %v1888 = vmul.f32 %v1594, %v855
        %v1889 = vadd.f32 %v1887, %v1888
        %v1890 = vmul.f32 %v1595, %v859
        %v1891 = vadd.f32 %v1889, %v1890
        %v1892 = vmul.f32 %v1596, %v863
        %v1893 = vadd.f32 %v1891, %v1892
        %v1894 = vadd.f32 %v1893, %v867
        %v1895 = vmax.f32 %v1894, 0.0
        %v1897 = vcombine.high %v1895, %v1895
        %v1898 = vsel %vm518, %v1897, 0
        %1900 = vmatprep.subr.mxu0 0.0
        %1901 = vmatpush1.msra.mxu0 %v886
        %1902 = vmatprep.subr.mxu0 0.0
        %1903 = vmatpush1.msra.mxu0 %v885
        %1904 = vmatprep.subr.mxu0 0.0
        %1905 = vmatpush1.msra.mxu0 %v884
        %1906 = vmatprep.subr.mxu0 0.0
        %1907 = vmatpush1.msra.mxu0 %v883
        %1908 = vmatprep.subr.mxu0 0.0
        %1909 = vmatpush1.msra.mxu0 %v882
        %1910 = vmatprep.subr.mxu0 0.0
        %1911 = vmatpush1.msra.mxu0 %v881
        %1912 = vmatprep.subr.mxu0 0.0
        %1913 = vmatpush1.msra.mxu0 %v880
        %1914 = vmatprep.subr.mxu0 0.0
        %1915 = vmatpush1.msra.mxu0 %v879
        %1916 = vmatprep.subr.mxu0 0.0
        %1917 = vmatpush1.msra.mxu0 %v878
        %1918 = vmatprep.subr.mxu0 0.0
        %1919 = vmatpush1.msra.mxu0 %v877
        %1920 = vmatprep.subr.mxu0 0.0
        %1921 = vmatpush1.msra.mxu0 %v876
        %1922 = vmatprep.subr.mxu0 0.0
        %1923 = vmatpush1.msra.mxu0 %v875
        %1924 = vmatprep.subr.mxu0 0.0
        %1925 = vmatpush1.msra.mxu0 %v874
        %1926 = vmatprep.subr.mxu0 0.0
        %1927 = vmatpush1.msra.mxu0 %v873
        %1928 = vmatprep.subr.mxu0 0.0
        %1929 = vmatpush1.msra.mxu0 %v872
        %1930 = vmatprep.subr.mxu0 0.0
        %1931 = vmatpush1.msra.mxu0 %v871
        %1932 = vmatprep.subr.mxu0 0.0
        %1933 = vmatpush2.msra.mxu0 0.0
        %1934 = vmatprep.subr.mxu0 0.0
        %1935 = vmatpush2.msra.mxu0 0.0
        %1936 = vmatprep.subr.mxu0 0.0
        %1937 = vmatpush2.msra.mxu0 0.0
        %1938 = vmatprep.subr.mxu0 0.0
        %1939 = vmatpush2.msra.mxu0 0.0
        %1940 = vmatprep.subr.mxu0 0.0
        %1941 = vmatpush2.msra.mxu0 0.0
        %1942 = vmatprep.subr.mxu0 0.0
        %1943 = vmatpush2.msra.mxu0 0.0
        %1944 = vmatprep.subr.mxu0 0.0
        %1945 = vmatpush2.msra.mxu0 0.0
        %1946 = vmatprep.subr.mxu0 0.0
        %1947 = vmatpush2.msra.mxu0 %v909
        %1948 = vmatprep.subr.mxu0 0.0
        %1949 = vmatpush2.msra.mxu0 %v894
        %1950 = vmatprep.subr.mxu0 0.0
        %1951 = vmatpush2.msra.mxu0 %v893
        %1952 = vmatprep.subr.mxu0 0.0
        %1953 = vmatpush2.msra.mxu0 %v892
        %1954 = vmatprep.subr.mxu0 0.0
        %1955 = vmatpush2.msra.mxu0 %v891
        %1956 = vmatprep.subr.mxu0 0.0
        %1957 = vmatpush2.msra.mxu0 %v890
        %1958 = vmatprep.subr.mxu0 0.0
        %1959 = vmatpush2.msra.mxu0 %v889
        %1960 = vmatprep.subr.mxu0 0.0
        %1961 = vmatpush2.msra.mxu0 %v888
        %1962 = vmatprep.subr.mxu0 0.0
        %1963 = vmatpush2.msra.mxu0 %v887
        %1964 = vmatprep.mubr.f32.mxu0 %v1898
        %1965 = vmatmul.mubr.f32.gmra.mxu0 %v1895
        %v1966 = vpop.f32.mrf.mxu0
        %v1967 = vadd.f32 0.0, %v1966
        %v1968 = vpop.f32.mrf.mxu0
        %1969 = vdwg.mxu0
        %v1970 = vadd.f32 %v1876, %v1967
        %v1971 = vmul.f32 %v1588, %v983
        %v1972 = vmul.f32 %v1589, %v986
        %v1973 = vadd.f32 %v1971, %v1972
        %v1974 = vmul.f32 %v1590, %v990
        %v1975 = vadd.f32 %v1973, %v1974
        %v1976 = vmul.f32 %v1591, %v994
        %v1977 = vadd.f32 %v1975, %v1976
        %v1978 = vmul.f32 %v1592, %v998
        %v1979 = vadd.f32 %v1977, %v1978
        %v1980 = vmul.f32 %v1593, %v1002
        %v1981 = vadd.f32 %v1979, %v1980
        %v1982 = vmul.f32 %v1594, %v1006
        %v1983 = vadd.f32 %v1981, %v1982
        %v1984 = vmul.f32 %v1595, %v1010
        %v1985 = vadd.f32 %v1983, %v1984
        %v1986 = vmul.f32 %v1596, %v1014
        %v1987 = vadd.f32 %v1985, %v1986
        %v1988 = vadd.f32 %v1987, %v1018
        %v1989 = vmax.f32 %v1988, 0.0
        %v1991 = vcombine.high %v1989, %v1989
        %v1992 = vsel %vm518, %v1991, 0
        %1994 = vmatprep.subr.mxu0 0.0
        %1995 = vmatpush1.msra.mxu0 %v1037
        %1996 = vmatprep.subr.mxu0 0.0
        %1997 = vmatpush1.msra.mxu0 %v1036
        %1998 = vmatprep.subr.mxu0 0.0
        %1999 = vmatpush1.msra.mxu0 %v1035
        %2000 = vmatprep.subr.mxu0 0.0
        %2001 = vmatpush1.msra.mxu0 %v1034
        %2002 = vmatprep.subr.mxu0 0.0
        %2003 = vmatpush1.msra.mxu0 %v1033
        %2004 = vmatprep.subr.mxu0 0.0
        %2005 = vmatpush1.msra.mxu0 %v1032
        %2006 = vmatprep.subr.mxu0 0.0
        %2007 = vmatpush1.msra.mxu0 %v1031
        %2008 = vmatprep.subr.mxu0 0.0
        %2009 = vmatpush1.msra.mxu0 %v1030
        %2010 = vmatprep.subr.mxu0 0.0
        %2011 = vmatpush1.msra.mxu0 %v1029
        %2012 = vmatprep.subr.mxu0 0.0
        %2013 = vmatpush1.msra.mxu0 %v1028
        %2014 = vmatprep.subr.mxu0 0.0
        %2015 = vmatpush1.msra.mxu0 %v1027
        %2016 = vmatprep.subr.mxu0 0.0
        %2017 = vmatpush1.msra.mxu0 %v1026
        %2018 = vmatprep.subr.mxu0 0.0
        %2019 = vmatpush1.msra.mxu0 %v1025
        %2020 = vmatprep.subr.mxu0 0.0
        %2021 = vmatpush1.msra.mxu0 %v1024
        %2022 = vmatprep.subr.mxu0 0.0
        %2023 = vmatpush1.msra.mxu0 %v1023
        %2024 = vmatprep.subr.mxu0 0.0
        %2025 = vmatpush1.msra.mxu0 %v1022
        %2026 = vmatprep.subr.mxu0 0.0
        %2027 = vmatpush2.msra.mxu0 0.0
        %2028 = vmatprep.subr.mxu0 0.0
        %2029 = vmatpush2.msra.mxu0 0.0
        %2030 = vmatprep.subr.mxu0 0.0
        %2031 = vmatpush2.msra.mxu0 0.0
        %2032 = vmatprep.subr.mxu0 0.0
        %2033 = vmatpush2.msra.mxu0 0.0
        %2034 = vmatprep.subr.mxu0 0.0
        %2035 = vmatpush2.msra.mxu0 0.0
        %2036 = vmatprep.subr.mxu0 0.0
        %2037 = vmatpush2.msra.mxu0 0.0
        %2038 = vmatprep.subr.mxu0 0.0
        %2039 = vmatpush2.msra.mxu0 0.0
        %2040 = vmatprep.subr.mxu0 0.0
        %2041 = vmatpush2.msra.mxu0 %v1060
        %2042 = vmatprep.subr.mxu0 0.0
        %2043 = vmatpush2.msra.mxu0 %v1045
        %2044 = vmatprep.subr.mxu0 0.0
        %2045 = vmatpush2.msra.mxu0 %v1044
        %2046 = vmatprep.subr.mxu0 0.0
        %2047 = vmatpush2.msra.mxu0 %v1043
        %2048 = vmatprep.subr.mxu0 0.0
        %2049 = vmatpush2.msra.mxu0 %v1042
        %2050 = vmatprep.subr.mxu0 0.0
        %2051 = vmatpush2.msra.mxu0 %v1041
        %2052 = vmatprep.subr.mxu0 0.0
        %2053 = vmatpush2.msra.mxu0 %v1040
        %2054 = vmatprep.subr.mxu0 0.0
        %2055 = vmatpush2.msra.mxu0 %v1039
        %2056 = vmatprep.subr.mxu0 0.0
        %2057 = vmatpush2.msra.mxu0 %v1038
        %2058 = vmatprep.mubr.f32.mxu0 %v1992
        %2059 = vmatmul.mubr.f32.gmra.mxu0 %v1989
        %v2060 = vpop.f32.mrf.mxu0
        %v2061 = vadd.f32 0.0, %v2060
        %v2062 = vpop.f32.mrf.mxu0
        %2063 = vdwg.mxu0
        %v2064 = vadd.f32 %v1970, %v2061
        %v2065 = vmul.f32 %v1588, %v1134
        %v2066 = vmul.f32 %v1589, %v1137
        %v2067 = vadd.f32 %v2065, %v2066
        %v2068 = vmul.f32 %v1590, %v1141
        %v2069 = vadd.f32 %v2067, %v2068
        %v2070 = vmul.f32 %v1591, %v1145
        %v2071 = vadd.f32 %v2069, %v2070
        %v2072 = vmul.f32 %v1592, %v1149
        %v2073 = vadd.f32 %v2071, %v2072
        %v2074 = vmul.f32 %v1593, %v1153
        %v2075 = vadd.f32 %v2073, %v2074
        %v2076 = vmul.f32 %v1594, %v1157
        %v2077 = vadd.f32 %v2075, %v2076
        %v2078 = vmul.f32 %v1595, %v1161
        %v2079 = vadd.f32 %v2077, %v2078
        %v2080 = vmul.f32 %v1596, %v1165
        %v2081 = vadd.f32 %v2079, %v2080
        %v2082 = vadd.f32 %v2081, %v1169
        %v2083 = vmax.f32 %v2082, 0.0
        %v2085 = vcombine.high %v2083, %v2083
        %v2086 = vsel %vm518, %v2085, 0
        %2088 = vmatprep.subr.mxu0 0.0
        %2089 = vmatpush1.msra.mxu0 %v1188
        %2090 = vmatprep.subr.mxu0 0.0
        %2091 = vmatpush1.msra.mxu0 %v1187
        %2092 = vmatprep.subr.mxu0 0.0
        %2093 = vmatpush1.msra.mxu0 %v1186
        %2094 = vmatprep.subr.mxu0 0.0
        %2095 = vmatpush1.msra.mxu0 %v1185
        %2096 = vmatprep.subr.mxu0 0.0
        %2097 = vmatpush1.msra.mxu0 %v1184
        %2098 = vmatprep.subr.mxu0 0.0
        %2099 = vmatpush1.msra.mxu0 %v1183
        %2100 = vmatprep.subr.mxu0 0.0
        %2101 = vmatpush1.msra.mxu0 %v1182
        %2102 = vmatprep.subr.mxu0 0.0
        %2103 = vmatpush1.msra.mxu0 %v1181
        %2104 = vmatprep.subr.mxu0 0.0
        %2105 = vmatpush1.msra.mxu0 %v1180
        %2106 = vmatprep.subr.mxu0 0.0
        %2107 = vmatpush1.msra.mxu0 %v1179
        %2108 = vmatprep.subr.mxu0 0.0
        %2109 = vmatpush1.msra.mxu0 %v1178
        %2110 = vmatprep.subr.mxu0 0.0
        %2111 = vmatpush1.msra.mxu0 %v1177
        %2112 = vmatprep.subr.mxu0 0.0
        %2113 = vmatpush1.msra.mxu0 %v1176
        %2114 = vmatprep.subr.mxu0 0.0
        %2115 = vmatpush1.msra.mxu0 %v1175
        %2116 = vmatprep.subr.mxu0 0.0
        %2117 = vmatpush1.msra.mxu0 %v1174
        %2118 = vmatprep.subr.mxu0 0.0
        %2119 = vmatpush1.msra.mxu0 %v1173
        %2120 = vmatprep.subr.mxu0 0.0
        %2121 = vmatpush2.msra.mxu0 0.0
        %2122 = vmatprep.subr.mxu0 0.0
        %2123 = vmatpush2.msra.mxu0 0.0
        %2124 = vmatprep.subr.mxu0 0.0
        %2125 = vmatpush2.msra.mxu0 0.0
        %2126 = vmatprep.subr.mxu0 0.0
        %2127 = vmatpush2.msra.mxu0 0.0
        %2128 = vmatprep.subr.mxu0 0.0
        %2129 = vmatpush2.msra.mxu0 0.0
        %2130 = vmatprep.subr.mxu0 0.0
        %2131 = vmatpush2.msra.mxu0 0.0
        %2132 = vmatprep.subr.mxu0 0.0
        %2133 = vmatpush2.msra.mxu0 0.0
        %2134 = vmatprep.subr.mxu0 0.0
        %2135 = vmatpush2.msra.mxu0 %v1211
        %2136 = vmatprep.subr.mxu0 0.0
        %2137 = vmatpush2.msra.mxu0 %v1196
        %2138 = vmatprep.subr.mxu0 0.0
        %2139 = vmatpush2.msra.mxu0 %v1195
        %2140 = vmatprep.subr.mxu0 0.0
        %2141 = vmatpush2.msra.mxu0 %v1194
        %2142 = vmatprep.subr.mxu0 0.0
        %2143 = vmatpush2.msra.mxu0 %v1193
        %2144 = vmatprep.subr.mxu0 0.0
        %2145 = vmatpush2.msra.mxu0 %v1192
        %2146 = vmatprep.subr.mxu0 0.0
        %2147 = vmatpush2.msra.mxu0 %v1191
        %2148 = vmatprep.subr.mxu0 0.0
        %2149 = vmatpush2.msra.mxu0 %v1190
        %2150 = vmatprep.subr.mxu0 0.0
        %2151 = vmatpush2.msra.mxu0 %v1189
        %2152 = vmatprep.mubr.f32.mxu0 %v2086
        %2153 = vmatmul.mubr.f32.gmra.mxu0 %v2083
        %v2154 = vpop.f32.mrf.mxu0
        %v2155 = vadd.f32 0.0, %v2154
        %v2156 = vpop.f32.mrf.mxu0
        %2157 = vdwg.mxu0
        %v2158 = vadd.f32 %v2064, %v2155
        %v2159 = vmul.f32 %v1588, %v1285
        %v2160 = vmul.f32 %v1589, %v1288
        %v2161 = vadd.f32 %v2159, %v2160
        %v2162 = vmul.f32 %v1590, %v1292
        %v2163 = vadd.f32 %v2161, %v2162
        %v2164 = vmul.f32 %v1591, %v1296
        %v2165 = vadd.f32 %v2163, %v2164
        %v2166 = vmul.f32 %v1592, %v1300
        %v2167 = vadd.f32 %v2165, %v2166
        %v2168 = vmul.f32 %v1593, %v1304
        %v2169 = vadd.f32 %v2167, %v2168
        %v2170 = vmul.f32 %v1594, %v1308
        %v2171 = vadd.f32 %v2169, %v2170
        %v2172 = vmul.f32 %v1595, %v1312
        %v2173 = vadd.f32 %v2171, %v2172
        %v2174 = vmul.f32 %v1596, %v1316
        %v2175 = vadd.f32 %v2173, %v2174
        %v2176 = vadd.f32 %v2175, %v1320
        %v2177 = vmax.f32 %v2176, 0.0
        %v2179 = vcombine.high %v2177, %v2177
        %v2180 = vsel %vm518, %v2179, 0
        %2182 = vmatprep.subr.mxu0 0.0
        %2183 = vmatpush1.msra.mxu0 %v1339
        %2184 = vmatprep.subr.mxu0 0.0
        %2185 = vmatpush1.msra.mxu0 %v1338
        %2186 = vmatprep.subr.mxu0 0.0
        %2187 = vmatpush1.msra.mxu0 %v1337
        %2188 = vmatprep.subr.mxu0 0.0
        %2189 = vmatpush1.msra.mxu0 %v1336
        %2190 = vmatprep.subr.mxu0 0.0
        %2191 = vmatpush1.msra.mxu0 %v1335
        %2192 = vmatprep.subr.mxu0 0.0
        %2193 = vmatpush1.msra.mxu0 %v1334
        %2194 = vmatprep.subr.mxu0 0.0
        %2195 = vmatpush1.msra.mxu0 %v1333
        %2196 = vmatprep.subr.mxu0 0.0
        %2197 = vmatpush1.msra.mxu0 %v1332
        %2198 = vmatprep.subr.mxu0 0.0
        %2199 = vmatpush1.msra.mxu0 %v1331
        %2200 = vmatprep.subr.mxu0 0.0
        %2201 = vmatpush1.msra.mxu0 %v1330
        %2202 = vmatprep.subr.mxu0 0.0
        %2203 = vmatpush1.msra.mxu0 %v1329
        %2204 = vmatprep.subr.mxu0 0.0
        %2205 = vmatpush1.msra.mxu0 %v1328
        %2206 = vmatprep.subr.mxu0 0.0
        %2207 = vmatpush1.msra.mxu0 %v1327
        %2208 = vmatprep.subr.mxu0 0.0
        %2209 = vmatpush1.msra.mxu0 %v1326
        %2210 = vmatprep.subr.mxu0 0.0
        %2211 = vmatpush1.msra.mxu0 %v1325
        %2212 = vmatprep.subr.mxu0 0.0
        %2213 = vmatpush1.msra.mxu0 %v1324
        %2214 = vmatprep.subr.mxu0 0.0
        %2215 = vmatpush2.msra.mxu0 0.0
        %2216 = vmatprep.subr.mxu0 0.0
        %2217 = vmatpush2.msra.mxu0 0.0
        %2218 = vmatprep.subr.mxu0 0.0
        %2219 = vmatpush2.msra.mxu0 0.0
        %2220 = vmatprep.subr.mxu0 0.0
        %2221 = vmatpush2.msra.mxu0 0.0
        %2222 = vmatprep.subr.mxu0 0.0
        %2223 = vmatpush2.msra.mxu0 0.0
        %2224 = vmatprep.subr.mxu0 0.0
        %2225 = vmatpush2.msra.mxu0 0.0
        %2226 = vmatprep.subr.mxu0 0.0
        %2227 = vmatpush2.msra.mxu0 0.0
        %2228 = vmatprep.subr.mxu0 0.0
        %2229 = vmatpush2.msra.mxu0 %v1362
        %2230 = vmatprep.subr.mxu0 0.0
        %2231 = vmatpush2.msra.mxu0 %v1347
        %2232 = vmatprep.subr.mxu0 0.0
        %2233 = vmatpush2.msra.mxu0 %v1346
        %2234 = vmatprep.subr.mxu0 0.0
        %2235 = vmatpush2.msra.mxu0 %v1345
        %2236 = vmatprep.subr.mxu0 0.0
        %2237 = vmatpush2.msra.mxu0 %v1344
        %2238 = vmatprep.subr.mxu0 0.0
        %2239 = vmatpush2.msra.mxu0 %v1343
        %2240 = vmatprep.subr.mxu0 0.0
        %2241 = vmatpush2.msra.mxu0 %v1342
        %2242 = vmatprep.subr.mxu0 0.0
        %2243 = vmatpush2.msra.mxu0 %v1341
        %2244 = vmatprep.subr.mxu0 0.0
        %2245 = vmatpush2.msra.mxu0 %v1340
        %2246 = vmatprep.mubr.f32.mxu0 %v2180
        %2247 = vmatmul.mubr.f32.gmra.mxu0 %v2177
        %v2248 = vpop.f32.mrf.mxu0
        %v2249 = vadd.f32 0.0, %v2248
        %v2250 = vpop.f32.mrf.mxu0
        %2251 = vdwg.mxu0
        %v2252 = vadd.f32 %v2158, %v2249
        %v2253 = vmul.f32 %v1588, %v1436
        %v2254 = vmul.f32 %v1589, %v1439
        %v2255 = vadd.f32 %v2253, %v2254
        %v2256 = vmul.f32 %v1590, %v1443
        %v2257 = vadd.f32 %v2255, %v2256
        %v2258 = vmul.f32 %v1591, %v1447
        %v2259 = vadd.f32 %v2257, %v2258
        %v2260 = vmul.f32 %v1592, %v1451
        %v2261 = vadd.f32 %v2259, %v2260
        %v2262 = vmul.f32 %v1593, %v1455
        %v2263 = vadd.f32 %v2261, %v2262
        %v2264 = vmul.f32 %v1594, %v1459
        %v2265 = vadd.f32 %v2263, %v2264
        %v2266 = vmul.f32 %v1595, %v1463
        %v2267 = vadd.f32 %v2265, %v2266
        %v2268 = vmul.f32 %v1596, %v1467
        %v2269 = vadd.f32 %v2267, %v2268
        %v2270 = vadd.f32 %v2269, %v1471
        %v2271 = vmax.f32 %v2270, 0.0
        %v2273 = vcombine.high %v2271, %v2271
        %v2274 = vsel %vm518, %v2273, 0
        %2276 = vmatprep.subr.mxu0 0.0
        %2277 = vmatpush1.msra.mxu0 %v1490
        %2278 = vmatprep.subr.mxu0 0.0
        %2279 = vmatpush1.msra.mxu0 %v1489
        %2280 = vmatprep.subr.mxu0 0.0
        %2281 = vmatpush1.msra.mxu0 %v1488
        %2282 = vmatprep.subr.mxu0 0.0
        %2283 = vmatpush1.msra.mxu0 %v1487
        %2284 = vmatprep.subr.mxu0 0.0
        %2285 = vmatpush1.msra.mxu0 %v1486
        %2286 = vmatprep.subr.mxu0 0.0
        %2287 = vmatpush1.msra.mxu0 %v1485
        %2288 = vmatprep.subr.mxu0 0.0
        %2289 = vmatpush1.msra.mxu0 %v1484
        %2290 = vmatprep.subr.mxu0 0.0
        %2291 = vmatpush1.msra.mxu0 %v1483
        %2292 = vmatprep.subr.mxu0 0.0
        %2293 = vmatpush1.msra.mxu0 %v1482
        %2294 = vmatprep.subr.mxu0 0.0
        %2295 = vmatpush1.msra.mxu0 %v1481
        %2296 = vmatprep.subr.mxu0 0.0
        %2297 = vmatpush1.msra.mxu0 %v1480
        %2298 = vmatprep.subr.mxu0 0.0
        %2299 = vmatpush1.msra.mxu0 %v1479
        %2300 = vmatprep.subr.mxu0 0.0
        %2301 = vmatpush1.msra.mxu0 %v1478
        %2302 = vmatprep.subr.mxu0 0.0
        %2303 = vmatpush1.msra.mxu0 %v1477
        %2304 = vmatprep.subr.mxu0 0.0
        %2305 = vmatpush1.msra.mxu0 %v1476
        %2306 = vmatprep.subr.mxu0 0.0
        %2307 = vmatpush1.msra.mxu0 %v1475
        %2308 = vmatprep.subr.mxu0 0.0
        %2309 = vmatpush2.msra.mxu0 0.0
        %2310 = vmatprep.subr.mxu0 0.0
        %2311 = vmatpush2.msra.mxu0 0.0
        %2312 = vmatprep.subr.mxu0 0.0
        %2313 = vmatpush2.msra.mxu0 0.0
        %2314 = vmatprep.subr.mxu0 0.0
        %2315 = vmatpush2.msra.mxu0 0.0
        %2316 = vmatprep.subr.mxu0 0.0
        %2317 = vmatpush2.msra.mxu0 0.0
        %2318 = vmatprep.subr.mxu0 0.0
        %2319 = vmatpush2.msra.mxu0 0.0
        %2320 = vmatprep.subr.mxu0 0.0
        %2321 = vmatpush2.msra.mxu0 0.0
        %2322 = vmatprep.subr.mxu0 0.0
        %2323 = vmatpush2.msra.mxu0 %v1513
        %2324 = vmatprep.subr.mxu0 0.0
        %2325 = vmatpush2.msra.mxu0 %v1498
        %2326 = vmatprep.subr.mxu0 0.0
        %2327 = vmatpush2.msra.mxu0 %v1497
        %2328 = vmatprep.subr.mxu0 0.0
        %2329 = vmatpush2.msra.mxu0 %v1496
        %2330 = vmatprep.subr.mxu0 0.0
        %2331 = vmatpush2.msra.mxu0 %v1495
        %2332 = vmatprep.subr.mxu0 0.0
        %2333 = vmatpush2.msra.mxu0 %v1494
        %2334 = vmatprep.subr.mxu0 0.0
        %2335 = vmatpush2.msra.mxu0 %v1493
        %2336 = vmatprep.subr.mxu0 0.0
        %2337 = vmatpush2.msra.mxu0 %v1492
        %2338 = vmatprep.subr.mxu0 0.0
        %2339 = vmatpush2.msra.mxu0 %v1491
        %2340 = vmatprep.mubr.f32.mxu0 %v2274
        %2341 = vmatmul.mubr.f32.gmra.mxu0 %v2271
        %v2342 = vpop.f32.mrf.mxu0
        %v2343 = vadd.f32 0.0, %v2342
        %v2344 = vpop.f32.mrf.mxu0
        %2345 = vdwg.mxu0
        %v2346 = vadd.f32 %v2252, %v2343
        %v2348 = vlaneseq
        %v2349 = vshrl.u32 %v2348, 7
        %v2350 = vsub.s32 0, %v2349
        %v2351 = vrot.slane %v1586, %v2350
        %v2353 = vadd.f32 %v2346, %v2351
        %vm2354 = vcmask 253952
        %2355 = vst.msk [vmem:[%s340] sm:$0x1] %vm2354, %v1587
        %vm2356 = vcmask 257024
        %2357 = vst.msk [vmem:[%s365] sm:$0xf] %vm2356, %v2353
        %v2358 = vlaneseq
        %v2359 = vshrl.u32 %v2358, 7
        %v2360 = vsub.s32 0, %v2359
        %v2361 = vrot.slane %v1587, %v2360
        %v2362 = vsub.f32 %v2361, %v2353
        %v2363 = vmul.f32 %v2362, %v2362
        %v2364 = vsel %vm2356, %v2363, 0.0
        %2365 = vadd.xlane.f32.xlu0 %v2364
        %v2366 = vpop.xlane.xlu0 %2365
        %vm2367 = vcmask 3072
        %2368 = vst.msk [vmem:[%s369] sm:$0xf] %vm2367, %v2366
        %s2369 = sand.u32 %s169, 1
        %s2370 = scalar_lea.sflag [#allocation3], %s2369
        %s2371 = sand.u32 %s169, 1
        %s2372 = scalar_lea.vmem [#allocation7], %s2371
        %p2373 = scmp.lt.s32.totalorder %s25, 1
        %s2374 = scalar_select %p2373, %s25, 1
        %s2375 = smul.addr %s2374, 4
        %s2376 = scalar_lea.vmem %s7, %s2375
        %p2377 = scmp.lt.s32.totalorder %s25, 1
        %s2378 = scalar_select %p2377, %s25, 1
        %s2379 = smul.addr %s2378, 4
        %s2380 = scalar_lea.vmem %s8, %s2379
        // Predicated region
        $region53: #{siamese_forward.1} parent=43 // pred_check
          %p2381 = pneg %p179
        $region54: #{siamese_forward.1} parent=43 // pred_check_branch
          %2383 = sbr.rel (%p2381) target = $region56
        $region55: #{siamese_forward.1} parent=43 // pred_region
          %s2385 = ssub.s32 16, 16
          %2386 = vsyncadd %s2370, %s2385
          %s2387 = smul.addr %s25, 16
          %s2388 = scalar_lea.hbm %s6, %s2387
          %s2390 = sshll.u32 %s2372, 4
          %s2391 = int_to_ptr.vmem [resolvable:$true] %s2390
          %2393 = dma.vmem_to_hbm [thread:$0]  %s2391, 16, %s2388, %s2370
        $region56: #{siamese_forward.1} parent=43 // pred_fallthru
          _
        // Predicated region
        $region57: #{siamese_forward.1} parent=43 // pred_check
          %p2394 = pneg %p205
        $region58: #{siamese_forward.1} parent=43 // pred_check_branch
          %2396 = sbr.rel (%p2394) target = $region60
        $region59: #{siamese_forward.1} parent=43 // pred_region
          _
        $region60: #{siamese_forward.1} parent=43 // pred_fallthru
          _
        // Predicated region
        $region61: #{siamese_forward.1} parent=43 // pred_check
          %p2397 = pneg %p231
        $region62: #{siamese_forward.1} parent=43 // pred_check_branch
          %2399 = sbr.rel (%p2397) target = $region64
        $region63: #{siamese_forward.1} parent=43 // pred_region
          _
        $region64: #{siamese_forward.1} parent=43 // pred_fallthru
          _
      $region44: #{siamese_forward.1} parent=5 // pred_fallthru
        _
      %p2400 = scmp.le.s32.totalorder 2, %s20
      // Predicated region
      $region65: #{siamese_forward.1} parent=5 // pred_check
        %p2401 = pneg %p2400
      $region66: #{siamese_forward.1} parent=5 // pred_check_branch
        %2403 = sbr.rel (%p2401) target = $region68
      $region67: #{siamese_forward.1} parent=5 // pred_region
        %s2404 = ssub.s32 %s20, 2
        // Predicated region
        $region69: #{siamese_forward.1} parent=67 // pred_check
          %p2405 = pneg %p185
        $region70: #{siamese_forward.1} parent=67 // pred_check_branch
          %2407 = sbr.rel (%p2405) target = $region72
        $region71: #{siamese_forward.1} parent=67 // pred_region
          %s2408 = sand.u32 %s170, 1
          %s2409 = scalar_lea.sflag [#allocation3], %s2408
          %s2410 = sand.u32 %s170, 1
          %s2411 = scalar_lea.vmem [#allocation7], %s2410
          %2412 = dma.done %s2409, 16
        $region72: #{siamese_forward.1} parent=67 // pred_fallthru
          _
        // Predicated region
        $region73: #{siamese_forward.1} parent=67 // pred_check
          %p2413 = pneg %p211
        $region74: #{siamese_forward.1} parent=67 // pred_check_branch
          %2415 = sbr.rel (%p2413) target = $region76
        $region75: #{siamese_forward.1} parent=67 // pred_region
          %p2416 = scmp.lt.s32.totalorder %s26, 1
          %s2417 = scalar_select %p2416, %s26, 1
          %s2418 = smul.addr %s2417, 4
          %s2419 = scalar_lea.vmem %s7, %s2418
        $region76: #{siamese_forward.1} parent=67 // pred_fallthru
          _
        // Predicated region
        $region77: #{siamese_forward.1} parent=67 // pred_check
          %p2420 = pneg %p237
        $region78: #{siamese_forward.1} parent=67 // pred_check_branch
          %2422 = sbr.rel (%p2420) target = $region80
        $region79: #{siamese_forward.1} parent=67 // pred_region
          %p2423 = scmp.lt.s32.totalorder %s26, 1
          %s2424 = scalar_select %p2423, %s26, 1
          %s2425 = smul.addr %s2424, 4
          %s2426 = scalar_lea.vmem %s8, %s2425
        $region80: #{siamese_forward.1} parent=67 // pred_fallthru
          _
      $region68: #{siamese_forward.1} parent=5 // pred_fallthru
        _
    $region6: #{siamese_forward.1} parent=1 // loop_footer
      %s24 = sadd.s32 1, %s20
    $region7: #{siamese_forward.1} parent=1 // loop_footer_branch
      %19 = sbr.rel target = $region3
    $region8: #{siamese_forward.1} parent=1 // loop_exit
      _
    %2427 = vsyncpa [#allocation3], 1
    %s2428 = scalar_lea.sflag [#allocation3], 1
    %2429 = vsyncpa %s2428, 1
    %2430 = vsyncpa [#allocation4], 1
    %s2431 = scalar_lea.sflag [#allocation4], 1
    %2432 = vsyncpa %s2431, 1
    %2433 = vsyncpa [#allocation6], 1

</llo_original>
